<compile_context>
chip_gen: v6e
topology: v6e:2x2x1
jax: 0.10.0
libtpu: 0.0.40
codegen_flags: <defaults>
</compile_context>

<pallas_src>
import jax
import jax.numpy as jnp
import numpy as np
from jax import lax
from jax.experimental import pallas as pl
from jax.experimental.pallas import tpu as pltpu


def _default_batch_tile(batch):
    """Lane tile: multiple of 128, <= 512, divides the padded batch, >= 2 tiles
    when possible (v7x megacore) and no mostly-padded last tile."""
    b128 = 128 * ((max(int(batch), 1) + 127) // 128)
    if b128 <= 128:
        return 128
    for tb in (512, 256, 128):
        if b128 % tb == 0 and b128 // tb >= 2:
            return tb
    return 128


def _make_cc_decoder_kernel(seq_len, dt, traj_control_mode, batch_tile, t_pad):
    """Build the Pallas kernel body for fixed seq_len / dt / mode / tiles."""
    T = int(seq_len)
    T_pad = int(t_pad)
    dt = float(dt)
    TB = int(batch_tile)
    f32 = jnp.float32

    def _tri(T_pad_):
        # Inclusive lower-triangular (row >= col) 0/1 matrix, built in-kernel.
        row = lax.broadcasted_iota(jnp.int32, (T_pad_, T_pad_), 0)
        col = lax.broadcasted_iota(jnp.int32, (T_pad_, T_pad_), 1)
        return (row >= col).astype(f32)

    def _cumsum(tri, inc):
        # Prefix sum along time via one small MXU matmul.  HIGHEST precision so
        # the f32 increments are not truncated to a single bf16 pass.
        return jnp.dot(tri, inc, preferred_element_type=f32,
                       precision=jax.lax.Precision.HIGHEST)

    if traj_control_mode == "jerk":

        def kernel(z_ref, s_ref, o_ref, v_scr, vprev_scr):
            c1 = z_ref[0:1, :]
            c2 = z_ref[1:2, :]
            x0 = s_ref[0:1, :]
            y0 = s_ref[1:2, :]
            psi0 = s_ref[2:3, :]
            v0 = s_ref[3:4, :]
            p0 = s_ref[4:5, :]
            st0 = s_ref[5:6, :]

            ti = lax.broadcasted_iota(jnp.int32, (T_pad, TB), 0)
            tt = ti.astype(f32)                      # time index on sublanes
            tri = _tri(T_pad)

            jerk = jnp.clip(c1 * 4.0, -4.0, 4.0)
            srate = jnp.clip(c2 * 0.5, -0.5, 0.5)
            jd = jerk * dt                           # constant per-step increments
            sd = srate * dt

            # Exact closed form of the iterated clip with a constant increment:
            # after the first clip the walk is monotone and stays in range, so
            # one final clip reproduces the sequence.
            p1 = jnp.clip(p0 + jd, -5.0, 5.0)
            s1 = jnp.clip(st0 + sd, -0.5, 0.5)
            pedal = jnp.clip(p1 + tt * jd, -5.0, 5.0)   # row t = pedal_{t+1}
            steer = jnp.clip(s1 + tt * sd, -0.5, 0.5)   # row t = steer_{t+1}
            tan_steer = jnp.tan(steer)                  # dense EUP, off the chain

            # Zero the staging buffers so the padded rows (>= T) stay finite;
            # NaN garbage there would poison the tri-matmul (0 * NaN = NaN).
            v_scr[...] = jnp.zeros((T_pad, TB), f32)
            vprev_scr[...] = jnp.zeros((T_pad, TB), f32)

            # Only true serial chain: v_{t+1} = clip(v_t + pedal_{t+1}*dt, 0, 10).
            # pedal comes from the closed form (off-chain); the two row stores
            # per step overlap the chain latency.
            v_prev = v0
            for t in range(T):
                ped_t = jnp.clip(p1 + float(t) * jd, -5.0, 5.0)
                vprev_scr[t:t + 1, :] = v_prev
                v_new = jnp.clip(v_prev + ped_t * dt, 0.0, 10.0)
                v_scr[t:t + 1, :] = v_new
                v_prev = v_new

            v_dense = v_scr[...]          # (T_pad, TB); row t = v_{t+1}, tail = 0
            v_prev_dense = vprev_scr[...]  # row t = v_t (prev v at step t+1)

            # psi off the serial chain.  Note the clamp bound is 3.14/2 (NOT
            # jnp.pi/2) to match the PyTorch reference bit-for-bit in intent.
            psi_inc = jnp.clip(v_prev_dense * tan_steer * (1.0 / 2.5),
                               -3.14 / 2, 3.14 / 2) * dt
            psi = psi0 + _cumsum(tri, psi_inc)        # row t = psi_{t+1}

            xd = v_dense * jnp.cos(psi) * dt
            yd = v_dense * jnp.sin(psi) * dt
            o_ref[0] = x0 + _cumsum(tri, xd)          # dense (T_pad, TB) stores
            o_ref[1] = y0 + _cumsum(tri, yd)
            o_ref[2] = psi
            o_ref[3] = v_dense
            o_ref[4] = pedal
            o_ref[5] = steer

        return kernel

    elif traj_control_mode == "acc":

        def kernel(z_ref, s_ref, o_ref):
            c1 = z_ref[0:1, :]
            c2 = z_ref[1:2, :]
            x0 = s_ref[0:1, :]
            y0 = s_ref[1:2, :]
            psi0 = s_ref[2:3, :]
            v0 = s_ref[3:4, :]

            ti = lax.broadcasted_iota(jnp.int32, (T_pad, TB), 0)
            tt = ti.astype(f32)
            tri = _tri(T_pad)

            pedal_c = jnp.clip(c1 * 5.0, -5.0, 5.0)   # constant over time
            steer_c = jnp.clip(c2 * 0.5, -0.5, 0.5)
            tan_c = jnp.tan(steer_c)                  # one tan per tile
            a = pedal_c * dt

            # Closed form of the clipped constant-increment v walk (exact) --
            # no serial loop at all in 'acc' mode.
            v1 = jnp.clip(v0 + a, 0.0, 10.0)
            v_dense = jnp.clip(v1 + tt * a, 0.0, 10.0)        # row t = v_{t+1}
            v_prev_dense = jnp.where(                          # row t = v_t
                ti == 0,
                jnp.broadcast_to(v0, (T_pad, TB)),
                jnp.clip(v1 + (tt - 1.0) * a, 0.0, 10.0))

            psi_inc = v_prev_dense * tan_c * (1.0 / 2.5) * dt  # no clamp in 'acc'
            psi = psi0 + _cumsum(tri, psi_inc)

            xd = v_dense * jnp.cos(psi) * dt
            yd = v_dense * jnp.sin(psi) * dt
            o_ref[0] = x0 + _cumsum(tri, xd)
            o_ref[1] = y0 + _cumsum(tri, yd)
            o_ref[2] = psi
            o_ref[3] = v_dense

        return kernel

    else:
        raise ValueError(f"unknown traj_control_mode: {traj_control_mode}")


def cc_decoder_forward(z, init_state, *, seq_len=30, dt=0.03,
                       traj_control_mode="jerk", batch_tile=None,
                       channel_major_output=False):
    """Pallas implementation of CCDecoder.forward.

    z:          (B, 2)
    init_state: (B, state_dim)  (6 for 'jerk', 4 for 'acc')
    returns:    (B, seq_len, state_dim) float32
                (or (state_dim, seq_len, B) if channel_major_output=True)
    """
    assert z.shape[1] == 2
    B = z.shape[0]
    state_dim = init_state.shape[1]
    if traj_control_mode == "jerk":
        assert state_dim == 6, state_dim
    elif traj_control_mode == "acc":
        assert state_dim == 4, state_dim
    else:
        raise ValueError(f"unknown traj_control_mode: {traj_control_mode}")

    T = int(seq_len)
    T_pad = ((T + 7) // 8) * 8          # sublane-aligned time dim (30 -> 32)

    # Force float32 (30-step clipped recurrence; no bf16 on the recurrence).
    z32 = z.astype(jnp.float32)
    s32 = init_state.astype(jnp.float32)

    TB = int(batch_tile) if batch_tile is not None else _default_batch_tile(B)
    assert TB % 128 == 0, TB
    B_pad = ((B + TB - 1) // TB) * TB

    # channel-major with batch on the lane axis, padded to full lane tiles
    z_t = jnp.transpose(z32)            # (2, B)
    s_t = jnp.transpose(s32)            # (state_dim, B)
    if B_pad != B:
        z_t = jnp.pad(z_t, ((0, 0), (0, B_pad - B)))
        s_t = jnp.pad(s_t, ((0, 0), (0, B_pad - B)))

    kernel = _make_cc_decoder_kernel(T, dt, traj_control_mode, TB, T_pad)

    scratch = []
    if traj_control_mode == "jerk":
        scratch = [pltpu.VMEM((T_pad, TB), jnp.float32),   # v_{t+1} staging
                   pltpu.VMEM((T_pad, TB), jnp.float32)]   # v_t (prev) staging

    out = pl.pallas_call(
        kernel,
        out_shape=jax.ShapeDtypeStruct((state_dim, T_pad, B_pad), jnp.float32),
        grid_spec=pltpu.PrefetchScalarGridSpec(
            num_scalar_prefetch=0,
            grid=(B_pad // TB,),                     # 1-D parallel grid over batch
            in_specs=[
                pl.BlockSpec((2, TB), lambda b: (0, b)),
                pl.BlockSpec((state_dim, TB), lambda b: (0, b)),
            ],
            out_specs=pl.BlockSpec((state_dim, T_pad, TB), lambda b: (0, 0, b)),
            scratch_shapes=scratch,
        ),
        compiler_params=pltpu.CompilerParams(
            dimension_semantics=("parallel",),
        ),
    )(z_t, s_t)

    if channel_major_output:
        # Skip the output transpose (full HBM round trip) if the consumer can
        # take channel-major (state_dim, seq_len, B).
        return out[:, :T, :B]
    # PyTorch convention (B, seq_len, state_dim).
    # TODO(synk): fold this transpose into the consumer's first op if possible.
    return jnp.transpose(out, (2, 1, 0))[:B, :T, :]


# ----------------------------- pure-JAX reference -----------------------------
def _reference_cc_decoder(z, init_state, seq_len, dt, mode):
    c1 = z[:, 0]
    c2 = z[:, 1]
    prev = init_state
    traj = []
    for _ in range(seq_len):
        if mode == "jerk":
            x, y, psi, v, pedal, steer = (prev[:, i] for i in range(6))
            jerk = jnp.clip(c1 * 4.0, -4.0, 4.0)
            srate = jnp.clip(c2 * 0.5, -0.5, 0.5)
            pedal = jnp.clip(pedal + jerk * dt, -5.0, 5.0)
            steer = jnp.clip(steer + srate * dt, -0.5, 0.5)
            v1 = jnp.clip(v + pedal * dt, 0.0, 10.0)
            psi_dot = jnp.clip(v * jnp.tan(steer) / 2.5, -3.14 / 2, 3.14 / 2)
            psi1 = psi_dot * dt + psi
            x1 = v1 * jnp.cos(psi1) * dt + x
            y1 = v1 * jnp.sin(psi1) * dt + y
            prev = jnp.stack([x1, y1, psi1, v1, pedal, steer], axis=1)
        else:
            x, y, psi, v = (prev[:, i] for i in range(4))
            pedal = jnp.clip(c1 * 5.0, -5.0, 5.0)
            steer = jnp.clip(c2 * 0.5, -0.5, 0.5)
            v1 = jnp.clip(v + pedal * dt, 0.0, 10.0)
            psi_dot = v * jnp.tan(steer) / 2.5
            psi1 = psi_dot * dt + psi
            x1 = v1 * jnp.cos(psi1) * dt + x
            y1 = v1 * jnp.sin(psi1) * dt + y
            prev = jnp.stack([x1, y1, psi1, v1], axis=1)
        traj.append(prev)
    return jnp.stack(traj, axis=1)


if __name__ == "__main__":
    key = jax.random.PRNGKey(0)
    k1, k2, k3 = jax.random.split(key, 3)

    B = 4
    SEQ_LEN = 30          # module default
    DT = 0.03

    z = jax.random.normal(k1, (B, 2), dtype=jnp.float32) * 0.5

    # 'jerk' mode (module default): state = (x, y, psi, v, pedal, steer)
    init_jerk = jax.random.normal(k2, (B, 6), dtype=jnp.float32) * 0.5
    init_jerk = init_jerk.at[:, 3].set(jnp.abs(init_jerk[:, 3]) + 1.0)

    traj = cc_decoder_forward(z, init_jerk, seq_len=SEQ_LEN, dt=DT,
                              traj_control_mode="jerk")
    traj = jax.block_until_ready(traj)
    ref = jax.block_until_ready(
        _reference_cc_decoder(z, init_jerk, SEQ_LEN, DT, "jerk"))
    assert traj.shape == (B, SEQ_LEN, 6), traj.shape
    np.testing.assert_allclose(np.asarray(traj), np.asarray(ref),
                               rtol=2e-5, atol=2e-5)

    # 'acc' mode: state = (x, y, psi, v)
    init_acc = jax.random.normal(k3, (B, 4), dtype=jnp.float32) * 0.5
    init_acc = init_acc.at[:, 3].set(jnp.abs(init_acc[:, 3]) + 1.0)
    traj_a = cc_decoder_forward(z, init_acc, seq_len=SEQ_LEN, dt=DT,
                                traj_control_mode="acc")
    traj_a = jax.block_until_ready(traj_a)
    ref_a = jax.block_until_ready(
        _reference_cc_decoder(z, init_acc, SEQ_LEN, DT, "acc"))
    assert traj_a.shape == (B, SEQ_LEN, 4), traj_a.shape
    np.testing.assert_allclose(np.asarray(traj_a), np.asarray(ref_a),
                               rtol=2e-5, atol=2e-5)

    print("KERNEL_OK")
</pallas_src>

<mosaic_0001>
module attributes {stable_mosaic.version = 11 : i64} {
  func.func @kernel(%arg0: i32, %arg1: memref<2x128xf32, #tpu.memory_space<vmem>>, %arg2: memref<6x128xf32, #tpu.memory_space<vmem>>, %arg3: memref<6x32x128xf32, #tpu.memory_space<vmem>>, %arg4: memref<32x128xf32, #tpu.memory_space<vmem>>, %arg5: memref<32x128xf32, #tpu.memory_space<vmem>>) attributes {dimension_semantics = [#tpu.dimension_semantics<parallel>], iteration_bounds = array<i64: 1>, scalar_prefetch = 0 : i64, scratch_operands = 2 : i64, tpu.core_type = #tpu.core_type<tc>, window_params = [{transform_indices = @transform_0, window_bounds = array<i64: 2, 128>}, {transform_indices = @transform_1, window_bounds = array<i64: 6, 128>}, {transform_indices = @transform_2, window_bounds = array<i64: 6, 32, 128>}]} {
    %c0 = arith.constant 0 : index
    %c0_0 = arith.constant 0 : index
    %0 = vector.load %arg1[%c0, %c0_0] : memref<2x128xf32, #tpu.memory_space<vmem>>, vector<1x128xf32>
    %c1 = arith.constant 1 : index
    %c0_1 = arith.constant 0 : index
    %1 = vector.load %arg1[%c1, %c0_1] : memref<2x128xf32, #tpu.memory_space<vmem>>, vector<1x128xf32>
    %c0_2 = arith.constant 0 : index
    %c0_3 = arith.constant 0 : index
    %2 = vector.load %arg2[%c0_2, %c0_3] : memref<6x128xf32, #tpu.memory_space<vmem>>, vector<1x128xf32>
    %c1_4 = arith.constant 1 : index
    %c0_5 = arith.constant 0 : index
    %3 = vector.load %arg2[%c1_4, %c0_5] : memref<6x128xf32, #tpu.memory_space<vmem>>, vector<1x128xf32>
    %c2 = arith.constant 2 : index
    %c0_6 = arith.constant 0 : index
    %4 = vector.load %arg2[%c2, %c0_6] : memref<6x128xf32, #tpu.memory_space<vmem>>, vector<1x128xf32>
    %c3 = arith.constant 3 : index
    %c0_7 = arith.constant 0 : index
    %5 = vector.load %arg2[%c3, %c0_7] : memref<6x128xf32, #tpu.memory_space<vmem>>, vector<1x128xf32>
    %c4 = arith.constant 4 : index
    %c0_8 = arith.constant 0 : index
    %6 = vector.load %arg2[%c4, %c0_8] : memref<6x128xf32, #tpu.memory_space<vmem>>, vector<1x128xf32>
    %c5 = arith.constant 5 : index
    %c0_9 = arith.constant 0 : index
    %7 = vector.load %arg2[%c5, %c0_9] : memref<6x128xf32, #tpu.memory_space<vmem>>, vector<1x128xf32>
    %8 = tpu.iota {dimensions = array<i32: 0>} : vector<32x128xi32>
    %9 = arith.sitofp %8 : vector<32x128xi32> to vector<32x128xf32>
    %10 = tpu.iota {dimensions = array<i32: 0>} : vector<32x32xi32>
    %11 = tpu.iota {dimensions = array<i32: 1>} : vector<32x32xi32>
    %12 = arith.cmpi sge, %10, %11 : vector<32x32xi32>
    %13 = arith.extui %12 : vector<32x32xi1> to vector<32x32xi32>
    %14 = arith.sitofp %13 : vector<32x32xi32> to vector<32x32xf32>
    %cst = arith.constant 4.000000e+00 : f32
    %15 = vector.broadcast %cst : f32 to vector<1x128xf32>
    %16 = arith.mulf %0, %15 : vector<1x128xf32>
    %cst_10 = arith.constant -4.000000e+00 : f32
    %cst_11 = arith.constant 4.000000e+00 : f32
    %17 = vector.broadcast %cst_10 : f32 to vector<1x128xf32>
    %18 = arith.maximumf %17, %16 : vector<1x128xf32>
    %19 = vector.broadcast %cst_11 : f32 to vector<1x128xf32>
    %20 = arith.minimumf %19, %18 : vector<1x128xf32>
    %cst_12 = arith.constant 5.000000e-01 : f32
    %21 = vector.broadcast %cst_12 : f32 to vector<1x128xf32>
    %22 = arith.mulf %1, %21 : vector<1x128xf32>
    %cst_13 = arith.constant -5.000000e-01 : f32
    %cst_14 = arith.constant 5.000000e-01 : f32
    %23 = vector.broadcast %cst_13 : f32 to vector<1x128xf32>
    %24 = arith.maximumf %23, %22 : vector<1x128xf32>
    %25 = vector.broadcast %cst_14 : f32 to vector<1x128xf32>
    %26 = arith.minimumf %25, %24 : vector<1x128xf32>
    %cst_15 = arith.constant 3.000000e-02 : f32
    %27 = vector.broadcast %cst_15 : f32 to vector<1x128xf32>
    %28 = arith.mulf %20, %27 : vector<1x128xf32>
    %cst_16 = arith.constant 3.000000e-02 : f32
    %29 = vector.broadcast %cst_16 : f32 to vector<1x128xf32>
    %30 = arith.mulf %26, %29 : vector<1x128xf32>
    %31 = arith.addf %6, %28 : vector<1x128xf32>
    %cst_17 = arith.constant -5.000000e+00 : f32
    %cst_18 = arith.constant 5.000000e+00 : f32
    %32 = vector.broadcast %cst_17 : f32 to vector<1x128xf32>
    %33 = arith.maximumf %32, %31 : vector<1x128xf32>
    %34 = vector.broadcast %cst_18 : f32 to vector<1x128xf32>
    %35 = arith.minimumf %34, %33 : vector<1x128xf32>
    %36 = arith.addf %7, %30 : vector<1x128xf32>
    %cst_19 = arith.constant -5.000000e-01 : f32
    %cst_20 = arith.constant 5.000000e-01 : f32
    %37 = vector.broadcast %cst_19 : f32 to vector<1x128xf32>
    %38 = arith.maximumf %37, %36 : vector<1x128xf32>
    %39 = vector.broadcast %cst_20 : f32 to vector<1x128xf32>
    %40 = arith.minimumf %39, %38 : vector<1x128xf32>
    %41 = vector.broadcast %28 : vector<1x128xf32> to vector<32x128xf32>
    %42 = arith.mulf %9, %41 : vector<32x128xf32>
    %43 = vector.broadcast %35 : vector<1x128xf32> to vector<32x128xf32>
    %44 = arith.addf %43, %42 : vector<32x128xf32>
    %cst_21 = arith.constant -5.000000e+00 : f32
    %cst_22 = arith.constant 5.000000e+00 : f32
    %45 = vector.broadcast %cst_21 : f32 to vector<32x128xf32>
    %46 = arith.maximumf %45, %44 : vector<32x128xf32>
    %47 = vector.broadcast %cst_22 : f32 to vector<32x128xf32>
    %48 = arith.minimumf %47, %46 : vector<32x128xf32>
    %49 = vector.broadcast %30 : vector<1x128xf32> to vector<32x128xf32>
    %50 = arith.mulf %9, %49 : vector<32x128xf32>
    %51 = vector.broadcast %40 : vector<1x128xf32> to vector<32x128xf32>
    %52 = arith.addf %51, %50 : vector<32x128xf32>
    %cst_23 = arith.constant -5.000000e-01 : f32
    %cst_24 = arith.constant 5.000000e-01 : f32
    %53 = vector.broadcast %cst_23 : f32 to vector<32x128xf32>
    %54 = arith.maximumf %53, %52 : vector<32x128xf32>
    %55 = vector.broadcast %cst_24 : f32 to vector<32x128xf32>
    %56 = arith.minimumf %55, %54 : vector<32x128xf32>
    %57 = math.tan %56 : vector<32x128xf32>
    %cst_25 = arith.constant 0.000000e+00 : f32
    %58 = vector.broadcast %cst_25 : f32 to vector<32x128xf32>
    %c0_26 = arith.constant 0 : index
    %c0_27 = arith.constant 0 : index
    %59 = vector.load %arg4[%c0_26, %c0_27] : memref<32x128xf32, #tpu.memory_space<vmem>>, vector<32x128xf32>
    tpu.vector_store %arg4[%c0_26, %c0_27], %58 {strides = array<i32>} : memref<32x128xf32, #tpu.memory_space<vmem>>, vector<32x128xf32>,
    %cst_28 = arith.constant 0.000000e+00 : f32
    %60 = vector.broadcast %cst_28 : f32 to vector<32x128xf32>
    %c0_29 = arith.constant 0 : index
    %c0_30 = arith.constant 0 : index
    %61 = vector.load %arg5[%c0_29, %c0_30] : memref<32x128xf32, #tpu.memory_space<vmem>>, vector<32x128xf32>
    tpu.vector_store %arg5[%c0_29, %c0_30], %60 {strides = array<i32>} : memref<32x128xf32, #tpu.memory_space<vmem>>, vector<32x128xf32>,
    %cst_31 = arith.constant 0.000000e+00 : f32
    %62 = vector.broadcast %cst_31 : f32 to vector<1x128xf32>
    %63 = arith.mulf %62, %28 : vector<1x128xf32>
    %64 = arith.addf %35, %63 : vector<1x128xf32>
    %cst_32 = arith.constant -5.000000e+00 : f32
    %cst_33 = arith.constant 5.000000e+00 : f32
    %65 = vector.broadcast %cst_32 : f32 to vector<1x128xf32>
    %66 = arith.maximumf %65, %64 : vector<1x128xf32>
    %67 = vector.broadcast %cst_33 : f32 to vector<1x128xf32>
    %68 = arith.minimumf %67, %66 : vector<1x128xf32>
    %c0_34 = arith.constant 0 : index
    %c0_35 = arith.constant 0 : index
    %69 = vector.load %arg5[%c0_34, %c0_35] : memref<32x128xf32, #tpu.memory_space<vmem>>, vector<1x128xf32>
    tpu.vector_store %arg5[%c0_34, %c0_35], %5 {strides = array<i32>} : memref<32x128xf32, #tpu.memory_space<vmem>>, vector<1x128xf32>,
    %cst_36 = arith.constant 3.000000e-02 : f32
    %70 = vector.broadcast %cst_36 : f32 to vector<1x128xf32>
    %71 = arith.mulf %68, %70 : vector<1x128xf32>
    %72 = arith.addf %5, %71 : vector<1x128xf32>
    %cst_37 = arith.constant 0.000000e+00 : f32
    %cst_38 = arith.constant 1.000000e+01 : f32
    %73 = vector.broadcast %cst_37 : f32 to vector<1x128xf32>
    %74 = arith.maximumf %73, %72 : vector<1x128xf32>
    %75 = vector.broadcast %cst_38 : f32 to vector<1x128xf32>
    %76 = arith.minimumf %75, %74 : vector<1x128xf32>
    %c0_39 = arith.constant 0 : index
    %c0_40 = arith.constant 0 : index
    %77 = vector.load %arg4[%c0_39, %c0_40] : memref<32x128xf32, #tpu.memory_space<vmem>>, vector<1x128xf32>
    tpu.vector_store %arg4[%c0_39, %c0_40], %76 {strides = array<i32>} : memref<32x128xf32, #tpu.memory_space<vmem>>, vector<1x128xf32>,
    %cst_41 = arith.constant 1.000000e+00 : f32
    %78 = vector.broadcast %cst_41 : f32 to vector<1x128xf32>
    %79 = arith.mulf %78, %28 : vector<1x128xf32>
    %80 = arith.addf %35, %79 : vector<1x128xf32>
    %cst_42 = arith.constant -5.000000e+00 : f32
    %cst_43 = arith.constant 5.000000e+00 : f32
    %81 = vector.broadcast %cst_42 : f32 to vector<1x128xf32>
    %82 = arith.maximumf %81, %80 : vector<1x128xf32>
    %83 = vector.broadcast %cst_43 : f32 to vector<1x128xf32>
    %84 = arith.minimumf %83, %82 : vector<1x128xf32>
    %c1_44 = arith.constant 1 : index
    %c0_45 = arith.constant 0 : index
    %85 = vector.load %arg5[%c1_44, %c0_45] : memref<32x128xf32, #tpu.memory_space<vmem>>, vector<1x128xf32>
    tpu.vector_store %arg5[%c1_44, %c0_45], %76 {strides = array<i32>} : memref<32x128xf32, #tpu.memory_space<vmem>>, vector<1x128xf32>,
    %cst_46 = arith.constant 3.000000e-02 : f32
    %86 = vector.broadcast %cst_46 : f32 to vector<1x128xf32>
    %87 = arith.mulf %84, %86 : vector<1x128xf32>
    %88 = arith.addf %76, %87 : vector<1x128xf32>
    %cst_47 = arith.constant 0.000000e+00 : f32
    %cst_48 = arith.constant 1.000000e+01 : f32
    %89 = vector.broadcast %cst_47 : f32 to vector<1x128xf32>
    %90 = arith.maximumf %89, %88 : vector<1x128xf32>
    %91 = vector.broadcast %cst_48 : f32 to vector<1x128xf32>
    %92 = arith.minimumf %91, %90 : vector<1x128xf32>
    %c1_49 = arith.constant 1 : index
    %c0_50 = arith.constant 0 : index
    %93 = vector.load %arg4[%c1_49, %c0_50] : memref<32x128xf32, #tpu.memory_space<vmem>>, vector<1x128xf32>
    tpu.vector_store %arg4[%c1_49, %c0_50], %92 {strides = array<i32>} : memref<32x128xf32, #tpu.memory_space<vmem>>, vector<1x128xf32>,
    %cst_51 = arith.constant 2.000000e+00 : f32
    %94 = vector.broadcast %cst_51 : f32 to vector<1x128xf32>
    %95 = arith.mulf %94, %28 : vector<1x128xf32>
    %96 = arith.addf %35, %95 : vector<1x128xf32>
    %cst_52 = arith.constant -5.000000e+00 : f32
    %cst_53 = arith.constant 5.000000e+00 : f32
    %97 = vector.broadcast %cst_52 : f32 to vector<1x128xf32>
    %98 = arith.maximumf %97, %96 : vector<1x128xf32>
    %99 = vector.broadcast %cst_53 : f32 to vector<1x128xf32>
    %100 = arith.minimumf %99, %98 : vector<1x128xf32>
    %c2_54 = arith.constant 2 : index
    %c0_55 = arith.constant 0 : index
    %101 = vector.load %arg5[%c2_54, %c0_55] : memref<32x128xf32, #tpu.memory_space<vmem>>, vector<1x128xf32>
    tpu.vector_store %arg5[%c2_54, %c0_55], %92 {strides = array<i32>} : memref<32x128xf32, #tpu.memory_space<vmem>>, vector<1x128xf32>,
    %cst_56 = arith.constant 3.000000e-02 : f32
    %102 = vector.broadcast %cst_56 : f32 to vector<1x128xf32>
    %103 = arith.mulf %100, %102 : vector<1x128xf32>
    %104 = arith.addf %92, %103 : vector<1x128xf32>
    %cst_57 = arith.constant 0.000000e+00 : f32
    %cst_58 = arith.constant 1.000000e+01 : f32
    %105 = vector.broadcast %cst_57 : f32 to vector<1x128xf32>
    %106 = arith.maximumf %105, %104 : vector<1x128xf32>
    %107 = vector.broadcast %cst_58 : f32 to vector<1x128xf32>
    %108 = arith.minimumf %107, %106 : vector<1x128xf32>
    %c2_59 = arith.constant 2 : index
    %c0_60 = arith.constant 0 : index
    %109 = vector.load %arg4[%c2_59, %c0_60] : memref<32x128xf32, #tpu.memory_space<vmem>>, vector<1x128xf32>
    tpu.vector_store %arg4[%c2_59, %c0_60], %108 {strides = array<i32>} : memref<32x128xf32, #tpu.memory_space<vmem>>, vector<1x128xf32>,
    %cst_61 = arith.constant 3.000000e+00 : f32
    %110 = vector.broadcast %cst_61 : f32 to vector<1x128xf32>
    %111 = arith.mulf %110, %28 : vector<1x128xf32>
    %112 = arith.addf %35, %111 : vector<1x128xf32>
    %cst_62 = arith.constant -5.000000e+00 : f32
    %cst_63 = arith.constant 5.000000e+00 : f32
    %113 = vector.broadcast %cst_62 : f32 to vector<1x128xf32>
    %114 = arith.maximumf %113, %112 : vector<1x128xf32>
    %115 = vector.broadcast %cst_63 : f32 to vector<1x128xf32>
    %116 = arith.minimumf %115, %114 : vector<1x128xf32>
    %c3_64 = arith.constant 3 : index
    %c0_65 = arith.constant 0 : index
    %117 = vector.load %arg5[%c3_64, %c0_65] : memref<32x128xf32, #tpu.memory_space<vmem>>, vector<1x128xf32>
    tpu.vector_store %arg5[%c3_64, %c0_65], %108 {strides = array<i32>} : memref<32x128xf32, #tpu.memory_space<vmem>>, vector<1x128xf32>,
    %cst_66 = arith.constant 3.000000e-02 : f32
    %118 = vector.broadcast %cst_66 : f32 to vector<1x128xf32>
    %119 = arith.mulf %116, %118 : vector<1x128xf32>
    %120 = arith.addf %108, %119 : vector<1x128xf32>
    %cst_67 = arith.constant 0.000000e+00 : f32
    %cst_68 = arith.constant 1.000000e+01 : f32
    %121 = vector.broadcast %cst_67 : f32 to vector<1x128xf32>
    %122 = arith.maximumf %121, %120 : vector<1x128xf32>
    %123 = vector.broadcast %cst_68 : f32 to vector<1x128xf32>
    %124 = arith.minimumf %123, %122 : vector<1x128xf32>
    %c3_69 = arith.constant 3 : index
    %c0_70 = arith.constant 0 : index
    %125 = vector.load %arg4[%c3_69, %c0_70] : memref<32x128xf32, #tpu.memory_space<vmem>>, vector<1x128xf32>
    tpu.vector_store %arg4[%c3_69, %c0_70], %124 {strides = array<i32>} : memref<32x128xf32, #tpu.memory_space<vmem>>, vector<1x128xf32>,
    %cst_71 = arith.constant 4.000000e+00 : f32
    %126 = vector.broadcast %cst_71 : f32 to vector<1x128xf32>
    %127 = arith.mulf %126, %28 : vector<1x128xf32>
    %128 = arith.addf %35, %127 : vector<1x128xf32>
    %cst_72 = arith.constant -5.000000e+00 : f32
    %cst_73 = arith.constant 5.000000e+00 : f32
    %129 = vector.broadcast %cst_72 : f32 to vector<1x128xf32>
    %130 = arith.maximumf %129, %128 : vector<1x128xf32>
    %131 = vector.broadcast %cst_73 : f32 to vector<1x128xf32>
    %132 = arith.minimumf %131, %130 : vector<1x128xf32>
    %c4_74 = arith.constant 4 : index
    %c0_75 = arith.constant 0 : index
    %133 = vector.load %arg5[%c4_74, %c0_75] : memref<32x128xf32, #tpu.memory_space<vmem>>, vector<1x128xf32>
    tpu.vector_store %arg5[%c4_74, %c0_75], %124 {strides = array<i32>} : memref<32x128xf32, #tpu.memory_space<vmem>>, vector<1x128xf32>,
    %cst_76 = arith.constant 3.000000e-02 : f32
    %134 = vector.broadcast %cst_76 : f32 to vector<1x128xf32>
    %135 = arith.mulf %132, %134 : vector<1x128xf32>
    %136 = arith.addf %124, %135 : vector<1x128xf32>
    %cst_77 = arith.constant 0.000000e+00 : f32
    %cst_78 = arith.constant 1.000000e+01 : f32
    %137 = vector.broadcast %cst_77 : f32 to vector<1x128xf32>
    %138 = arith.maximumf %137, %136 : vector<1x128xf32>
    %139 = vector.broadcast %cst_78 : f32 to vector<1x128xf32>
    %140 = arith.minimumf %139, %138 : vector<1x128xf32>
    %c4_79 = arith.constant 4 : index
    %c0_80 = arith.constant 0 : index
    %141 = vector.load %arg4[%c4_79, %c0_80] : memref<32x128xf32, #tpu.memory_space<vmem>>, vector<1x128xf32>
    tpu.vector_store %arg4[%c4_79, %c0_80], %140 {strides = array<i32>} : memref<32x128xf32, #tpu.memory_space<vmem>>, vector<1x128xf32>,
    %cst_81 = arith.constant 5.000000e+00 : f32
    %142 = vector.broadcast %cst_81 : f32 to vector<1x128xf32>
    %143 = arith.mulf %142, %28 : vector<1x128xf32>
    %144 = arith.addf %35, %143 : vector<1x128xf32>
    %cst_82 = arith.constant -5.000000e+00 : f32
    %cst_83 = arith.constant 5.000000e+00 : f32
    %145 = vector.broadcast %cst_82 : f32 to vector<1x128xf32>
    %146 = arith.maximumf %145, %144 : vector<1x128xf32>
    %147 = vector.broadcast %cst_83 : f32 to vector<1x128xf32>
    %148 = arith.minimumf %147, %146 : vector<1x128xf32>
    %c5_84 = arith.constant 5 : index
    %c0_85 = arith.constant 0 : index
    %149 = vector.load %arg5[%c5_84, %c0_85] : memref<32x128xf32, #tpu.memory_space<vmem>>, vector<1x128xf32>
    tpu.vector_store %arg5[%c5_84, %c0_85], %140 {strides = array<i32>} : memref<32x128xf32, #tpu.memory_space<vmem>>, vector<1x128xf32>,
    %cst_86 = arith.constant 3.000000e-02 : f32
    %150 = vector.broadcast %cst_86 : f32 to vector<1x128xf32>
    %151 = arith.mulf %148, %150 : vector<1x128xf32>
    %152 = arith.addf %140, %151 : vector<1x128xf32>
    %cst_87 = arith.constant 0.000000e+00 : f32
    %cst_88 = arith.constant 1.000000e+01 : f32
    %153 = vector.broadcast %cst_87 : f32 to vector<1x128xf32>
    %154 = arith.maximumf %153, %152 : vector<1x128xf32>
    %155 = vector.broadcast %cst_88 : f32 to vector<1x128xf32>
    %156 = arith.minimumf %155, %154 : vector<1x128xf32>
    %c5_89 = arith.constant 5 : index
    %c0_90 = arith.constant 0 : index
    %157 = vector.load %arg4[%c5_89, %c0_90] : memref<32x128xf32, #tpu.memory_space<vmem>>, vector<1x128xf32>
    tpu.vector_store %arg4[%c5_89, %c0_90], %156 {strides = array<i32>} : memref<32x128xf32, #tpu.memory_space<vmem>>, vector<1x128xf32>,
    %cst_91 = arith.constant 6.000000e+00 : f32
    %158 = vector.broadcast %cst_91 : f32 to vector<1x128xf32>
    %159 = arith.mulf %158, %28 : vector<1x128xf32>
    %160 = arith.addf %35, %159 : vector<1x128xf32>
    %cst_92 = arith.constant -5.000000e+00 : f32
    %cst_93 = arith.constant 5.000000e+00 : f32
    %161 = vector.broadcast %cst_92 : f32 to vector<1x128xf32>
    %162 = arith.maximumf %161, %160 : vector<1x128xf32>
    %163 = vector.broadcast %cst_93 : f32 to vector<1x128xf32>
    %164 = arith.minimumf %163, %162 : vector<1x128xf32>
    %c6 = arith.constant 6 : index
    %c0_94 = arith.constant 0 : index
    %165 = vector.load %arg5[%c6, %c0_94] : memref<32x128xf32, #tpu.memory_space<vmem>>, vector<1x128xf32>
    tpu.vector_store %arg5[%c6, %c0_94], %156 {strides = array<i32>} : memref<32x128xf32, #tpu.memory_space<vmem>>, vector<1x128xf32>,
    %cst_95 = arith.constant 3.000000e-02 : f32
    %166 = vector.broadcast %cst_95 : f32 to vector<1x128xf32>
    %167 = arith.mulf %164, %166 : vector<1x128xf32>
    %168 = arith.addf %156, %167 : vector<1x128xf32>
    %cst_96 = arith.constant 0.000000e+00 : f32
    %cst_97 = arith.constant 1.000000e+01 : f32
    %169 = vector.broadcast %cst_96 : f32 to vector<1x128xf32>
    %170 = arith.maximumf %169, %168 : vector<1x128xf32>
    %171 = vector.broadcast %cst_97 : f32 to vector<1x128xf32>
    %172 = arith.minimumf %171, %170 : vector<1x128xf32>
    %c6_98 = arith.constant 6 : index
    %c0_99 = arith.constant 0 : index
    %173 = vector.load %arg4[%c6_98, %c0_99] : memref<32x128xf32, #tpu.memory_space<vmem>>, vector<1x128xf32>
    tpu.vector_store %arg4[%c6_98, %c0_99], %172 {strides = array<i32>} : memref<32x128xf32, #tpu.memory_space<vmem>>, vector<1x128xf32>,
    %cst_100 = arith.constant 7.000000e+00 : f32
    %174 = vector.broadcast %cst_100 : f32 to vector<1x128xf32>
    %175 = arith.mulf %174, %28 : vector<1x128xf32>
    %176 = arith.addf %35, %175 : vector<1x128xf32>
    %cst_101 = arith.constant -5.000000e+00 : f32
    %cst_102 = arith.constant 5.000000e+00 : f32
    %177 = vector.broadcast %cst_101 : f32 to vector<1x128xf32>
    %178 = arith.maximumf %177, %176 : vector<1x128xf32>
    %179 = vector.broadcast %cst_102 : f32 to vector<1x128xf32>
    %180 = arith.minimumf %179, %178 : vector<1x128xf32>
    %c7 = arith.constant 7 : index
    %c0_103 = arith.constant 0 : index
    %181 = vector.load %arg5[%c7, %c0_103] : memref<32x128xf32, #tpu.memory_space<vmem>>, vector<1x128xf32>
    tpu.vector_store %arg5[%c7, %c0_103], %172 {strides = array<i32>} : memref<32x128xf32, #tpu.memory_space<vmem>>, vector<1x128xf32>,
    %cst_104 = arith.constant 3.000000e-02 : f32
    %182 = vector.broadcast %cst_104 : f32 to vector<1x128xf32>
    %183 = arith.mulf %180, %182 : vector<1x128xf32>
    %184 = arith.addf %172, %183 : vector<1x128xf32>
    %cst_105 = arith.constant 0.000000e+00 : f32
    %cst_106 = arith.constant 1.000000e+01 : f32
    %185 = vector.broadcast %cst_105 : f32 to vector<1x128xf32>
    %186 = arith.maximumf %185, %184 : vector<1x128xf32>
    %187 = vector.broadcast %cst_106 : f32 to vector<1x128xf32>
    %188 = arith.minimumf %187, %186 : vector<1x128xf32>
    %c7_107 = arith.constant 7 : index
    %c0_108 = arith.constant 0 : index
    %189 = vector.load %arg4[%c7_107, %c0_108] : memref<32x128xf32, #tpu.memory_space<vmem>>, vector<1x128xf32>
    tpu.vector_store %arg4[%c7_107, %c0_108], %188 {strides = array<i32>} : memref<32x128xf32, #tpu.memory_space<vmem>>, vector<1x128xf32>,
    %cst_109 = arith.constant 8.000000e+00 : f32
    %190 = vector.broadcast %cst_109 : f32 to vector<1x128xf32>
    %191 = arith.mulf %190, %28 : vector<1x128xf32>
    %192 = arith.addf %35, %191 : vector<1x128xf32>
    %cst_110 = arith.constant -5.000000e+00 : f32
    %cst_111 = arith.constant 5.000000e+00 : f32
    %193 = vector.broadcast %cst_110 : f32 to vector<1x128xf32>
    %194 = arith.maximumf %193, %192 : vector<1x128xf32>
    %195 = vector.broadcast %cst_111 : f32 to vector<1x128xf32>
    %196 = arith.minimumf %195, %194 : vector<1x128xf32>
    %c8 = arith.constant 8 : index
    %c0_112 = arith.constant 0 : index
    %197 = vector.load %arg5[%c8, %c0_112] : memref<32x128xf32, #tpu.memory_space<vmem>>, vector<1x128xf32>
    tpu.vector_store %arg5[%c8, %c0_112], %188 {strides = array<i32>} : memref<32x128xf32, #tpu.memory_space<vmem>>, vector<1x128xf32>,
    %cst_113 = arith.constant 3.000000e-02 : f32
    %198 = vector.broadcast %cst_113 : f32 to vector<1x128xf32>
    %199 = arith.mulf %196, %198 : vector<1x128xf32>
    %200 = arith.addf %188, %199 : vector<1x128xf32>
    %cst_114 = arith.constant 0.000000e+00 : f32
    %cst_115 = arith.constant 1.000000e+01 : f32
    %201 = vector.broadcast %cst_114 : f32 to vector<1x128xf32>
    %202 = arith.maximumf %201, %200 : vector<1x128xf32>
    %203 = vector.broadcast %cst_115 : f32 to vector<1x128xf32>
    %204 = arith.minimumf %203, %202 : vector<1x128xf32>
    %c8_116 = arith.constant 8 : index
    %c0_117 = arith.constant 0 : index
    %205 = vector.load %arg4[%c8_116, %c0_117] : memref<32x128xf32, #tpu.memory_space<vmem>>, vector<1x128xf32>
    tpu.vector_store %arg4[%c8_116, %c0_117], %204 {strides = array<i32>} : memref<32x128xf32, #tpu.memory_space<vmem>>, vector<1x128xf32>,
    %cst_118 = arith.constant 9.000000e+00 : f32
    %206 = vector.broadcast %cst_118 : f32 to vector<1x128xf32>
    %207 = arith.mulf %206, %28 : vector<1x128xf32>
    %208 = arith.addf %35, %207 : vector<1x128xf32>
    %cst_119 = arith.constant -5.000000e+00 : f32
    %cst_120 = arith.constant 5.000000e+00 : f32
    %209 = vector.broadcast %cst_119 : f32 to vector<1x128xf32>
    %210 = arith.maximumf %209, %208 : vector<1x128xf32>
    %211 = vector.broadcast %cst_120 : f32 to vector<1x128xf32>
    %212 = arith.minimumf %211, %210 : vector<1x128xf32>
    %c9 = arith.constant 9 : index
    %c0_121 = arith.constant 0 : index
    %213 = vector.load %arg5[%c9, %c0_121] : memref<32x128xf32, #tpu.memory_space<vmem>>, vector<1x128xf32>
    tpu.vector_store %arg5[%c9, %c0_121], %204 {strides = array<i32>} : memref<32x128xf32, #tpu.memory_space<vmem>>, vector<1x128xf32>,
    %cst_122 = arith.constant 3.000000e-02 : f32
    %214 = vector.broadcast %cst_122 : f32 to vector<1x128xf32>
    %215 = arith.mulf %212, %214 : vector<1x128xf32>
    %216 = arith.addf %204, %215 : vector<1x128xf32>
    %cst_123 = arith.constant 0.000000e+00 : f32
    %cst_124 = arith.constant 1.000000e+01 : f32
    %217 = vector.broadcast %cst_123 : f32 to vector<1x128xf32>
    %218 = arith.maximumf %217, %216 : vector<1x128xf32>
    %219 = vector.broadcast %cst_124 : f32 to vector<1x128xf32>
    %220 = arith.minimumf %219, %218 : vector<1x128xf32>
    %c9_125 = arith.constant 9 : index
    %c0_126 = arith.constant 0 : index
    %221 = vector.load %arg4[%c9_125, %c0_126] : memref<32x128xf32, #tpu.memory_space<vmem>>, vector<1x128xf32>
    tpu.vector_store %arg4[%c9_125, %c0_126], %220 {strides = array<i32>} : memref<32x128xf32, #tpu.memory_space<vmem>>, vector<1x128xf32>,
    %cst_127 = arith.constant 1.000000e+01 : f32
    %222 = vector.broadcast %cst_127 : f32 to vector<1x128xf32>
    %223 = arith.mulf %222, %28 : vector<1x128xf32>
    %224 = arith.addf %35, %223 : vector<1x128xf32>
    %cst_128 = arith.constant -5.000000e+00 : f32
    %cst_129 = arith.constant 5.000000e+00 : f32
    %225 = vector.broadcast %cst_128 : f32 to vector<1x128xf32>
    %226 = arith.maximumf %225, %224 : vector<1x128xf32>
    %227 = vector.broadcast %cst_129 : f32 to vector<1x128xf32>
    %228 = arith.minimumf %227, %226 : vector<1x128xf32>
    %c10 = arith.constant 10 : index
    %c0_130 = arith.constant 0 : index
    %229 = vector.load %arg5[%c10, %c0_130] : memref<32x128xf32, #tpu.memory_space<vmem>>, vector<1x128xf32>
    tpu.vector_store %arg5[%c10, %c0_130], %220 {strides = array<i32>} : memref<32x128xf32, #tpu.memory_space<vmem>>, vector<1x128xf32>,
    %cst_131 = arith.constant 3.000000e-02 : f32
    %230 = vector.broadcast %cst_131 : f32 to vector<1x128xf32>
    %231 = arith.mulf %228, %230 : vector<1x128xf32>
    %232 = arith.addf %220, %231 : vector<1x128xf32>
    %cst_132 = arith.constant 0.000000e+00 : f32
    %cst_133 = arith.constant 1.000000e+01 : f32
    %233 = vector.broadcast %cst_132 : f32 to vector<1x128xf32>
    %234 = arith.maximumf %233, %232 : vector<1x128xf32>
    %235 = vector.broadcast %cst_133 : f32 to vector<1x128xf32>
    %236 = arith.minimumf %235, %234 : vector<1x128xf32>
    %c10_134 = arith.constant 10 : index
    %c0_135 = arith.constant 0 : index
    %237 = vector.load %arg4[%c10_134, %c0_135] : memref<32x128xf32, #tpu.memory_space<vmem>>, vector<1x128xf32>
    tpu.vector_store %arg4[%c10_134, %c0_135], %236 {strides = array<i32>} : memref<32x128xf32, #tpu.memory_space<vmem>>, vector<1x128xf32>,
    %cst_136 = arith.constant 1.100000e+01 : f32
    %238 = vector.broadcast %cst_136 : f32 to vector<1x128xf32>
    %239 = arith.mulf %238, %28 : vector<1x128xf32>
    %240 = arith.addf %35, %239 : vector<1x128xf32>
    %cst_137 = arith.constant -5.000000e+00 : f32
    %cst_138 = arith.constant 5.000000e+00 : f32
    %241 = vector.broadcast %cst_137 : f32 to vector<1x128xf32>
    %242 = arith.maximumf %241, %240 : vector<1x128xf32>
    %243 = vector.broadcast %cst_138 : f32 to vector<1x128xf32>
    %244 = arith.minimumf %243, %242 : vector<1x128xf32>
    %c11 = arith.constant 11 : index
    %c0_139 = arith.constant 0 : index
    %245 = vector.load %arg5[%c11, %c0_139] : memref<32x128xf32, #tpu.memory_space<vmem>>, vector<1x128xf32>
    tpu.vector_store %arg5[%c11, %c0_139], %236 {strides = array<i32>} : memref<32x128xf32, #tpu.memory_space<vmem>>, vector<1x128xf32>,
    %cst_140 = arith.constant 3.000000e-02 : f32
    %246 = vector.broadcast %cst_140 : f32 to vector<1x128xf32>
    %247 = arith.mulf %244, %246 : vector<1x128xf32>
    %248 = arith.addf %236, %247 : vector<1x128xf32>
    %cst_141 = arith.constant 0.000000e+00 : f32
    %cst_142 = arith.constant 1.000000e+01 : f32
    %249 = vector.broadcast %cst_141 : f32 to vector<1x128xf32>
    %250 = arith.maximumf %249, %248 : vector<1x128xf32>
    %251 = vector.broadcast %cst_142 : f32 to vector<1x128xf32>
    %252 = arith.minimumf %251, %250 : vector<1x128xf32>
    %c11_143 = arith.constant 11 : index
    %c0_144 = arith.constant 0 : index
    %253 = vector.load %arg4[%c11_143, %c0_144] : memref<32x128xf32, #tpu.memory_space<vmem>>, vector<1x128xf32>
    tpu.vector_store %arg4[%c11_143, %c0_144], %252 {strides = array<i32>} : memref<32x128xf32, #tpu.memory_space<vmem>>, vector<1x128xf32>,
    %cst_145 = arith.constant 1.200000e+01 : f32
    %254 = vector.broadcast %cst_145 : f32 to vector<1x128xf32>
    %255 = arith.mulf %254, %28 : vector<1x128xf32>
    %256 = arith.addf %35, %255 : vector<1x128xf32>
    %cst_146 = arith.constant -5.000000e+00 : f32
    %cst_147 = arith.constant 5.000000e+00 : f32
    %257 = vector.broadcast %cst_146 : f32 to vector<1x128xf32>
    %258 = arith.maximumf %257, %256 : vector<1x128xf32>
    %259 = vector.broadcast %cst_147 : f32 to vector<1x128xf32>
    %260 = arith.minimumf %259, %258 : vector<1x128xf32>
    %c12 = arith.constant 12 : index
    %c0_148 = arith.constant 0 : index
    %261 = vector.load %arg5[%c12, %c0_148] : memref<32x128xf32, #tpu.memory_space<vmem>>, vector<1x128xf32>
    tpu.vector_store %arg5[%c12, %c0_148], %252 {strides = array<i32>} : memref<32x128xf32, #tpu.memory_space<vmem>>, vector<1x128xf32>,
    %cst_149 = arith.constant 3.000000e-02 : f32
    %262 = vector.broadcast %cst_149 : f32 to vector<1x128xf32>
    %263 = arith.mulf %260, %262 : vector<1x128xf32>
    %264 = arith.addf %252, %263 : vector<1x128xf32>
    %cst_150 = arith.constant 0.000000e+00 : f32
    %cst_151 = arith.constant 1.000000e+01 : f32
    %265 = vector.broadcast %cst_150 : f32 to vector<1x128xf32>
    %266 = arith.maximumf %265, %264 : vector<1x128xf32>
    %267 = vector.broadcast %cst_151 : f32 to vector<1x128xf32>
    %268 = arith.minimumf %267, %266 : vector<1x128xf32>
    %c12_152 = arith.constant 12 : index
    %c0_153 = arith.constant 0 : index
    %269 = vector.load %arg4[%c12_152, %c0_153] : memref<32x128xf32, #tpu.memory_space<vmem>>, vector<1x128xf32>
    tpu.vector_store %arg4[%c12_152, %c0_153], %268 {strides = array<i32>} : memref<32x128xf32, #tpu.memory_space<vmem>>, vector<1x128xf32>,
    %cst_154 = arith.constant 1.300000e+01 : f32
    %270 = vector.broadcast %cst_154 : f32 to vector<1x128xf32>
    %271 = arith.mulf %270, %28 : vector<1x128xf32>
    %272 = arith.addf %35, %271 : vector<1x128xf32>
    %cst_155 = arith.constant -5.000000e+00 : f32
    %cst_156 = arith.constant 5.000000e+00 : f32
    %273 = vector.broadcast %cst_155 : f32 to vector<1x128xf32>
    %274 = arith.maximumf %273, %272 : vector<1x128xf32>
    %275 = vector.broadcast %cst_156 : f32 to vector<1x128xf32>
    %276 = arith.minimumf %275, %274 : vector<1x128xf32>
    %c13 = arith.constant 13 : index
    %c0_157 = arith.constant 0 : index
    %277 = vector.load %arg5[%c13, %c0_157] : memref<32x128xf32, #tpu.memory_space<vmem>>, vector<1x128xf32>
    tpu.vector_store %arg5[%c13, %c0_157], %268 {strides = array<i32>} : memref<32x128xf32, #tpu.memory_space<vmem>>, vector<1x128xf32>,
    %cst_158 = arith.constant 3.000000e-02 : f32
    %278 = vector.broadcast %cst_158 : f32 to vector<1x128xf32>
    %279 = arith.mulf %276, %278 : vector<1x128xf32>
    %280 = arith.addf %268, %279 : vector<1x128xf32>
    %cst_159 = arith.constant 0.000000e+00 : f32
    %cst_160 = arith.constant 1.000000e+01 : f32
    %281 = vector.broadcast %cst_159 : f32 to vector<1x128xf32>
    %282 = arith.maximumf %281, %280 : vector<1x128xf32>
    %283 = vector.broadcast %cst_160 : f32 to vector<1x128xf32>
    %284 = arith.minimumf %283, %282 : vector<1x128xf32>
    %c13_161 = arith.constant 13 : index
    %c0_162 = arith.constant 0 : index
    %285 = vector.load %arg4[%c13_161, %c0_162] : memref<32x128xf32, #tpu.memory_space<vmem>>, vector<1x128xf32>
    tpu.vector_store %arg4[%c13_161, %c0_162], %284 {strides = array<i32>} : memref<32x128xf32, #tpu.memory_space<vmem>>, vector<1x128xf32>,
    %cst_163 = arith.constant 1.400000e+01 : f32
    %286 = vector.broadcast %cst_163 : f32 to vector<1x128xf32>
    %287 = arith.mulf %286, %28 : vector<1x128xf32>
    %288 = arith.addf %35, %287 : vector<1x128xf32>
    %cst_164 = arith.constant -5.000000e+00 : f32
    %cst_165 = arith.constant 5.000000e+00 : f32
    %289 = vector.broadcast %cst_164 : f32 to vector<1x128xf32>
    %290 = arith.maximumf %289, %288 : vector<1x128xf32>
    %291 = vector.broadcast %cst_165 : f32 to vector<1x128xf32>
    %292 = arith.minimumf %291, %290 : vector<1x128xf32>
    %c14 = arith.constant 14 : index
    %c0_166 = arith.constant 0 : index
    %293 = vector.load %arg5[%c14, %c0_166] : memref<32x128xf32, #tpu.memory_space<vmem>>, vector<1x128xf32>
    tpu.vector_store %arg5[%c14, %c0_166], %284 {strides = array<i32>} : memref<32x128xf32, #tpu.memory_space<vmem>>, vector<1x128xf32>,
    %cst_167 = arith.constant 3.000000e-02 : f32
    %294 = vector.broadcast %cst_167 : f32 to vector<1x128xf32>
    %295 = arith.mulf %292, %294 : vector<1x128xf32>
    %296 = arith.addf %284, %295 : vector<1x128xf32>
    %cst_168 = arith.constant 0.000000e+00 : f32
    %cst_169 = arith.constant 1.000000e+01 : f32
    %297 = vector.broadcast %cst_168 : f32 to vector<1x128xf32>
    %298 = arith.maximumf %297, %296 : vector<1x128xf32>
    %299 = vector.broadcast %cst_169 : f32 to vector<1x128xf32>
    %300 = arith.minimumf %299, %298 : vector<1x128xf32>
    %c14_170 = arith.constant 14 : index
    %c0_171 = arith.constant 0 : index
    %301 = vector.load %arg4[%c14_170, %c0_171] : memref<32x128xf32, #tpu.memory_space<vmem>>, vector<1x128xf32>
    tpu.vector_store %arg4[%c14_170, %c0_171], %300 {strides = array<i32>} : memref<32x128xf32, #tpu.memory_space<vmem>>, vector<1x128xf32>,
    %cst_172 = arith.constant 1.500000e+01 : f32
    %302 = vector.broadcast %cst_172 : f32 to vector<1x128xf32>
    %303 = arith.mulf %302, %28 : vector<1x128xf32>
    %304 = arith.addf %35, %303 : vector<1x128xf32>
    %cst_173 = arith.constant -5.000000e+00 : f32
    %cst_174 = arith.constant 5.000000e+00 : f32
    %305 = vector.broadcast %cst_173 : f32 to vector<1x128xf32>
    %306 = arith.maximumf %305, %304 : vector<1x128xf32>
    %307 = vector.broadcast %cst_174 : f32 to vector<1x128xf32>
    %308 = arith.minimumf %307, %306 : vector<1x128xf32>
    %c15 = arith.constant 15 : index
    %c0_175 = arith.constant 0 : index
    %309 = vector.load %arg5[%c15, %c0_175] : memref<32x128xf32, #tpu.memory_space<vmem>>, vector<1x128xf32>
    tpu.vector_store %arg5[%c15, %c0_175], %300 {strides = array<i32>} : memref<32x128xf32, #tpu.memory_space<vmem>>, vector<1x128xf32>,
    %cst_176 = arith.constant 3.000000e-02 : f32
    %310 = vector.broadcast %cst_176 : f32 to vector<1x128xf32>
    %311 = arith.mulf %308, %310 : vector<1x128xf32>
    %312 = arith.addf %300, %311 : vector<1x128xf32>
    %cst_177 = arith.constant 0.000000e+00 : f32
    %cst_178 = arith.constant 1.000000e+01 : f32
    %313 = vector.broadcast %cst_177 : f32 to vector<1x128xf32>
    %314 = arith.maximumf %313, %312 : vector<1x128xf32>
    %315 = vector.broadcast %cst_178 : f32 to vector<1x128xf32>
    %316 = arith.minimumf %315, %314 : vector<1x128xf32>
    %c15_179 = arith.constant 15 : index
    %c0_180 = arith.constant 0 : index
    %317 = vector.load %arg4[%c15_179, %c0_180] : memref<32x128xf32, #tpu.memory_space<vmem>>, vector<1x128xf32>
    tpu.vector_store %arg4[%c15_179, %c0_180], %316 {strides = array<i32>} : memref<32x128xf32, #tpu.memory_space<vmem>>, vector<1x128xf32>,
    %cst_181 = arith.constant 1.600000e+01 : f32
    %318 = vector.broadcast %cst_181 : f32 to vector<1x128xf32>
    %319 = arith.mulf %318, %28 : vector<1x128xf32>
    %320 = arith.addf %35, %319 : vector<1x128xf32>
    %cst_182 = arith.constant -5.000000e+00 : f32
    %cst_183 = arith.constant 5.000000e+00 : f32
    %321 = vector.broadcast %cst_182 : f32 to vector<1x128xf32>
    %322 = arith.maximumf %321, %320 : vector<1x128xf32>
    %323 = vector.broadcast %cst_183 : f32 to vector<1x128xf32>
    %324 = arith.minimumf %323, %322 : vector<1x128xf32>
    %c16 = arith.constant 16 : index
    %c0_184 = arith.constant 0 : index
    %325 = vector.load %arg5[%c16, %c0_184] : memref<32x128xf32, #tpu.memory_space<vmem>>, vector<1x128xf32>
    tpu.vector_store %arg5[%c16, %c0_184], %316 {strides = array<i32>} : memref<32x128xf32, #tpu.memory_space<vmem>>, vector<1x128xf32>,
    %cst_185 = arith.constant 3.000000e-02 : f32
    %326 = vector.broadcast %cst_185 : f32 to vector<1x128xf32>
    %327 = arith.mulf %324, %326 : vector<1x128xf32>
    %328 = arith.addf %316, %327 : vector<1x128xf32>
    %cst_186 = arith.constant 0.000000e+00 : f32
    %cst_187 = arith.constant 1.000000e+01 : f32
    %329 = vector.broadcast %cst_186 : f32 to vector<1x128xf32>
    %330 = arith.maximumf %329, %328 : vector<1x128xf32>
    %331 = vector.broadcast %cst_187 : f32 to vector<1x128xf32>
    %332 = arith.minimumf %331, %330 : vector<1x128xf32>
    %c16_188 = arith.constant 16 : index
    %c0_189 = arith.constant 0 : index
    %333 = vector.load %arg4[%c16_188, %c0_189] : memref<32x128xf32, #tpu.memory_space<vmem>>, vector<1x128xf32>
    tpu.vector_store %arg4[%c16_188, %c0_189], %332 {strides = array<i32>} : memref<32x128xf32, #tpu.memory_space<vmem>>, vector<1x128xf32>,
    %cst_190 = arith.constant 1.700000e+01 : f32
    %334 = vector.broadcast %cst_190 : f32 to vector<1x128xf32>
    %335 = arith.mulf %334, %28 : vector<1x128xf32>
    %336 = arith.addf %35, %335 : vector<1x128xf32>
    %cst_191 = arith.constant -5.000000e+00 : f32
    %cst_192 = arith.constant 5.000000e+00 : f32
    %337 = vector.broadcast %cst_191 : f32 to vector<1x128xf32>
    %338 = arith.maximumf %337, %336 : vector<1x128xf32>
    %339 = vector.broadcast %cst_192 : f32 to vector<1x128xf32>
    %340 = arith.minimumf %339, %338 : vector<1x128xf32>
    %c17 = arith.constant 17 : index
    %c0_193 = arith.constant 0 : index
    %341 = vector.load %arg5[%c17, %c0_193] : memref<32x128xf32, #tpu.memory_space<vmem>>, vector<1x128xf32>
    tpu.vector_store %arg5[%c17, %c0_193], %332 {strides = array<i32>} : memref<32x128xf32, #tpu.memory_space<vmem>>, vector<1x128xf32>,
    %cst_194 = arith.constant 3.000000e-02 : f32
    %342 = vector.broadcast %cst_194 : f32 to vector<1x128xf32>
    %343 = arith.mulf %340, %342 : vector<1x128xf32>
    %344 = arith.addf %332, %343 : vector<1x128xf32>
    %cst_195 = arith.constant 0.000000e+00 : f32
    %cst_196 = arith.constant 1.000000e+01 : f32
    %345 = vector.broadcast %cst_195 : f32 to vector<1x128xf32>
    %346 = arith.maximumf %345, %344 : vector<1x128xf32>
    %347 = vector.broadcast %cst_196 : f32 to vector<1x128xf32>
    %348 = arith.minimumf %347, %346 : vector<1x128xf32>
    %c17_197 = arith.constant 17 : index
    %c0_198 = arith.constant 0 : index
    %349 = vector.load %arg4[%c17_197, %c0_198] : memref<32x128xf32, #tpu.memory_space<vmem>>, vector<1x128xf32>
    tpu.vector_store %arg4[%c17_197, %c0_198], %348 {strides = array<i32>} : memref<32x128xf32, #tpu.memory_space<vmem>>, vector<1x128xf32>,
    %cst_199 = arith.constant 1.800000e+01 : f32
    %350 = vector.broadcast %cst_199 : f32 to vector<1x128xf32>
    %351 = arith.mulf %350, %28 : vector<1x128xf32>
    %352 = arith.addf %35, %351 : vector<1x128xf32>
    %cst_200 = arith.constant -5.000000e+00 : f32
    %cst_201 = arith.constant 5.000000e+00 : f32
    %353 = vector.broadcast %cst_200 : f32 to vector<1x128xf32>
    %354 = arith.maximumf %353, %352 : vector<1x128xf32>
    %355 = vector.broadcast %cst_201 : f32 to vector<1x128xf32>
    %356 = arith.minimumf %355, %354 : vector<1x128xf32>
    %c18 = arith.constant 18 : index
    %c0_202 = arith.constant 0 : index
    %357 = vector.load %arg5[%c18, %c0_202] : memref<32x128xf32, #tpu.memory_space<vmem>>, vector<1x128xf32>
    tpu.vector_store %arg5[%c18, %c0_202], %348 {strides = array<i32>} : memref<32x128xf32, #tpu.memory_space<vmem>>, vector<1x128xf32>,
    %cst_203 = arith.constant 3.000000e-02 : f32
    %358 = vector.broadcast %cst_203 : f32 to vector<1x128xf32>
    %359 = arith.mulf %356, %358 : vector<1x128xf32>
    %360 = arith.addf %348, %359 : vector<1x128xf32>
    %cst_204 = arith.constant 0.000000e+00 : f32
    %cst_205 = arith.constant 1.000000e+01 : f32
    %361 = vector.broadcast %cst_204 : f32 to vector<1x128xf32>
    %362 = arith.maximumf %361, %360 : vector<1x128xf32>
    %363 = vector.broadcast %cst_205 : f32 to vector<1x128xf32>
    %364 = arith.minimumf %363, %362 : vector<1x128xf32>
    %c18_206 = arith.constant 18 : index
    %c0_207 = arith.constant 0 : index
    %365 = vector.load %arg4[%c18_206, %c0_207] : memref<32x128xf32, #tpu.memory_space<vmem>>, vector<1x128xf32>
    tpu.vector_store %arg4[%c18_206, %c0_207], %364 {strides = array<i32>} : memref<32x128xf32, #tpu.memory_space<vmem>>, vector<1x128xf32>,
    %cst_208 = arith.constant 1.900000e+01 : f32
    %366 = vector.broadcast %cst_208 : f32 to vector<1x128xf32>
    %367 = arith.mulf %366, %28 : vector<1x128xf32>
    %368 = arith.addf %35, %367 : vector<1x128xf32>
    %cst_209 = arith.constant -5.000000e+00 : f32
    %cst_210 = arith.constant 5.000000e+00 : f32
    %369 = vector.broadcast %cst_209 : f32 to vector<1x128xf32>
    %370 = arith.maximumf %369, %368 : vector<1x128xf32>
    %371 = vector.broadcast %cst_210 : f32 to vector<1x128xf32>
    %372 = arith.minimumf %371, %370 : vector<1x128xf32>
    %c19 = arith.constant 19 : index
    %c0_211 = arith.constant 0 : index
    %373 = vector.load %arg5[%c19, %c0_211] : memref<32x128xf32, #tpu.memory_space<vmem>>, vector<1x128xf32>
    tpu.vector_store %arg5[%c19, %c0_211], %364 {strides = array<i32>} : memref<32x128xf32, #tpu.memory_space<vmem>>, vector<1x128xf32>,
    %cst_212 = arith.constant 3.000000e-02 : f32
    %374 = vector.broadcast %cst_212 : f32 to vector<1x128xf32>
    %375 = arith.mulf %372, %374 : vector<1x128xf32>
    %376 = arith.addf %364, %375 : vector<1x128xf32>
    %cst_213 = arith.constant 0.000000e+00 : f32
    %cst_214 = arith.constant 1.000000e+01 : f32
    %377 = vector.broadcast %cst_213 : f32 to vector<1x128xf32>
    %378 = arith.maximumf %377, %376 : vector<1x128xf32>
    %379 = vector.broadcast %cst_214 : f32 to vector<1x128xf32>
    %380 = arith.minimumf %379, %378 : vector<1x128xf32>
    %c19_215 = arith.constant 19 : index
    %c0_216 = arith.constant 0 : index
    %381 = vector.load %arg4[%c19_215, %c0_216] : memref<32x128xf32, #tpu.memory_space<vmem>>, vector<1x128xf32>
    tpu.vector_store %arg4[%c19_215, %c0_216], %380 {strides = array<i32>} : memref<32x128xf32, #tpu.memory_space<vmem>>, vector<1x128xf32>,
    %cst_217 = arith.constant 2.000000e+01 : f32
    %382 = vector.broadcast %cst_217 : f32 to vector<1x128xf32>
    %383 = arith.mulf %382, %28 : vector<1x128xf32>
    %384 = arith.addf %35, %383 : vector<1x128xf32>
    %cst_218 = arith.constant -5.000000e+00 : f32
    %cst_219 = arith.constant 5.000000e+00 : f32
    %385 = vector.broadcast %cst_218 : f32 to vector<1x128xf32>
    %386 = arith.maximumf %385, %384 : vector<1x128xf32>
    %387 = vector.broadcast %cst_219 : f32 to vector<1x128xf32>
    %388 = arith.minimumf %387, %386 : vector<1x128xf32>
    %c20 = arith.constant 20 : index
    %c0_220 = arith.constant 0 : index
    %389 = vector.load %arg5[%c20, %c0_220] : memref<32x128xf32, #tpu.memory_space<vmem>>, vector<1x128xf32>
    tpu.vector_store %arg5[%c20, %c0_220], %380 {strides = array<i32>} : memref<32x128xf32, #tpu.memory_space<vmem>>, vector<1x128xf32>,
    %cst_221 = arith.constant 3.000000e-02 : f32
    %390 = vector.broadcast %cst_221 : f32 to vector<1x128xf32>
    %391 = arith.mulf %388, %390 : vector<1x128xf32>
    %392 = arith.addf %380, %391 : vector<1x128xf32>
    %cst_222 = arith.constant 0.000000e+00 : f32
    %cst_223 = arith.constant 1.000000e+01 : f32
    %393 = vector.broadcast %cst_222 : f32 to vector<1x128xf32>
    %394 = arith.maximumf %393, %392 : vector<1x128xf32>
    %395 = vector.broadcast %cst_223 : f32 to vector<1x128xf32>
    %396 = arith.minimumf %395, %394 : vector<1x128xf32>
    %c20_224 = arith.constant 20 : index
    %c0_225 = arith.constant 0 : index
    %397 = vector.load %arg4[%c20_224, %c0_225] : memref<32x128xf32, #tpu.memory_space<vmem>>, vector<1x128xf32>
    tpu.vector_store %arg4[%c20_224, %c0_225], %396 {strides = array<i32>} : memref<32x128xf32, #tpu.memory_space<vmem>>, vector<1x128xf32>,
    %cst_226 = arith.constant 2.100000e+01 : f32
    %398 = vector.broadcast %cst_226 : f32 to vector<1x128xf32>
    %399 = arith.mulf %398, %28 : vector<1x128xf32>
    %400 = arith.addf %35, %399 : vector<1x128xf32>
    %cst_227 = arith.constant -5.000000e+00 : f32
    %cst_228 = arith.constant 5.000000e+00 : f32
    %401 = vector.broadcast %cst_227 : f32 to vector<1x128xf32>
    %402 = arith.maximumf %401, %400 : vector<1x128xf32>
    %403 = vector.broadcast %cst_228 : f32 to vector<1x128xf32>
    %404 = arith.minimumf %403, %402 : vector<1x128xf32>
    %c21 = arith.constant 21 : index
    %c0_229 = arith.constant 0 : index
    %405 = vector.load %arg5[%c21, %c0_229] : memref<32x128xf32, #tpu.memory_space<vmem>>, vector<1x128xf32>
    tpu.vector_store %arg5[%c21, %c0_229], %396 {strides = array<i32>} : memref<32x128xf32, #tpu.memory_space<vmem>>, vector<1x128xf32>,
    %cst_230 = arith.constant 3.000000e-02 : f32
    %406 = vector.broadcast %cst_230 : f32 to vector<1x128xf32>
    %407 = arith.mulf %404, %406 : vector<1x128xf32>
    %408 = arith.addf %396, %407 : vector<1x128xf32>
    %cst_231 = arith.constant 0.000000e+00 : f32
    %cst_232 = arith.constant 1.000000e+01 : f32
    %409 = vector.broadcast %cst_231 : f32 to vector<1x128xf32>
    %410 = arith.maximumf %409, %408 : vector<1x128xf32>
    %411 = vector.broadcast %cst_232 : f32 to vector<1x128xf32>
    %412 = arith.minimumf %411, %410 : vector<1x128xf32>
    %c21_233 = arith.constant 21 : index
    %c0_234 = arith.constant 0 : index
    %413 = vector.load %arg4[%c21_233, %c0_234] : memref<32x128xf32, #tpu.memory_space<vmem>>, vector<1x128xf32>
    tpu.vector_store %arg4[%c21_233, %c0_234], %412 {strides = array<i32>} : memref<32x128xf32, #tpu.memory_space<vmem>>, vector<1x128xf32>,
    %cst_235 = arith.constant 2.200000e+01 : f32
    %414 = vector.broadcast %cst_235 : f32 to vector<1x128xf32>
    %415 = arith.mulf %414, %28 : vector<1x128xf32>
    %416 = arith.addf %35, %415 : vector<1x128xf32>
    %cst_236 = arith.constant -5.000000e+00 : f32
    %cst_237 = arith.constant 5.000000e+00 : f32
    %417 = vector.broadcast %cst_236 : f32 to vector<1x128xf32>
    %418 = arith.maximumf %417, %416 : vector<1x128xf32>
    %419 = vector.broadcast %cst_237 : f32 to vector<1x128xf32>
    %420 = arith.minimumf %419, %418 : vector<1x128xf32>
    %c22 = arith.constant 22 : index
    %c0_238 = arith.constant 0 : index
    %421 = vector.load %arg5[%c22, %c0_238] : memref<32x128xf32, #tpu.memory_space<vmem>>, vector<1x128xf32>
    tpu.vector_store %arg5[%c22, %c0_238], %412 {strides = array<i32>} : memref<32x128xf32, #tpu.memory_space<vmem>>, vector<1x128xf32>,
    %cst_239 = arith.constant 3.000000e-02 : f32
    %422 = vector.broadcast %cst_239 : f32 to vector<1x128xf32>
    %423 = arith.mulf %420, %422 : vector<1x128xf32>
    %424 = arith.addf %412, %423 : vector<1x128xf32>
    %cst_240 = arith.constant 0.000000e+00 : f32
    %cst_241 = arith.constant 1.000000e+01 : f32
    %425 = vector.broadcast %cst_240 : f32 to vector<1x128xf32>
    %426 = arith.maximumf %425, %424 : vector<1x128xf32>
    %427 = vector.broadcast %cst_241 : f32 to vector<1x128xf32>
    %428 = arith.minimumf %427, %426 : vector<1x128xf32>
    %c22_242 = arith.constant 22 : index
    %c0_243 = arith.constant 0 : index
    %429 = vector.load %arg4[%c22_242, %c0_243] : memref<32x128xf32, #tpu.memory_space<vmem>>, vector<1x128xf32>
    tpu.vector_store %arg4[%c22_242, %c0_243], %428 {strides = array<i32>} : memref<32x128xf32, #tpu.memory_space<vmem>>, vector<1x128xf32>,
    %cst_244 = arith.constant 2.300000e+01 : f32
    %430 = vector.broadcast %cst_244 : f32 to vector<1x128xf32>
    %431 = arith.mulf %430, %28 : vector<1x128xf32>
    %432 = arith.addf %35, %431 : vector<1x128xf32>
    %cst_245 = arith.constant -5.000000e+00 : f32
    %cst_246 = arith.constant 5.000000e+00 : f32
    %433 = vector.broadcast %cst_245 : f32 to vector<1x128xf32>
    %434 = arith.maximumf %433, %432 : vector<1x128xf32>
    %435 = vector.broadcast %cst_246 : f32 to vector<1x128xf32>
    %436 = arith.minimumf %435, %434 : vector<1x128xf32>
    %c23 = arith.constant 23 : index
    %c0_247 = arith.constant 0 : index
    %437 = vector.load %arg5[%c23, %c0_247] : memref<32x128xf32, #tpu.memory_space<vmem>>, vector<1x128xf32>
    tpu.vector_store %arg5[%c23, %c0_247], %428 {strides = array<i32>} : memref<32x128xf32, #tpu.memory_space<vmem>>, vector<1x128xf32>,
    %cst_248 = arith.constant 3.000000e-02 : f32
    %438 = vector.broadcast %cst_248 : f32 to vector<1x128xf32>
    %439 = arith.mulf %436, %438 : vector<1x128xf32>
    %440 = arith.addf %428, %439 : vector<1x128xf32>
    %cst_249 = arith.constant 0.000000e+00 : f32
    %cst_250 = arith.constant 1.000000e+01 : f32
    %441 = vector.broadcast %cst_249 : f32 to vector<1x128xf32>
    %442 = arith.maximumf %441, %440 : vector<1x128xf32>
    %443 = vector.broadcast %cst_250 : f32 to vector<1x128xf32>
    %444 = arith.minimumf %443, %442 : vector<1x128xf32>
    %c23_251 = arith.constant 23 : index
    %c0_252 = arith.constant 0 : index
    %445 = vector.load %arg4[%c23_251, %c0_252] : memref<32x128xf32, #tpu.memory_space<vmem>>, vector<1x128xf32>
    tpu.vector_store %arg4[%c23_251, %c0_252], %444 {strides = array<i32>} : memref<32x128xf32, #tpu.memory_space<vmem>>, vector<1x128xf32>,
    %cst_253 = arith.constant 2.400000e+01 : f32
    %446 = vector.broadcast %cst_253 : f32 to vector<1x128xf32>
    %447 = arith.mulf %446, %28 : vector<1x128xf32>
    %448 = arith.addf %35, %447 : vector<1x128xf32>
    %cst_254 = arith.constant -5.000000e+00 : f32
    %cst_255 = arith.constant 5.000000e+00 : f32
    %449 = vector.broadcast %cst_254 : f32 to vector<1x128xf32>
    %450 = arith.maximumf %449, %448 : vector<1x128xf32>
    %451 = vector.broadcast %cst_255 : f32 to vector<1x128xf32>
    %452 = arith.minimumf %451, %450 : vector<1x128xf32>
    %c24 = arith.constant 24 : index
    %c0_256 = arith.constant 0 : index
    %453 = vector.load %arg5[%c24, %c0_256] : memref<32x128xf32, #tpu.memory_space<vmem>>, vector<1x128xf32>
    tpu.vector_store %arg5[%c24, %c0_256], %444 {strides = array<i32>} : memref<32x128xf32, #tpu.memory_space<vmem>>, vector<1x128xf32>,
    %cst_257 = arith.constant 3.000000e-02 : f32
    %454 = vector.broadcast %cst_257 : f32 to vector<1x128xf32>
    %455 = arith.mulf %452, %454 : vector<1x128xf32>
    %456 = arith.addf %444, %455 : vector<1x128xf32>
    %cst_258 = arith.constant 0.000000e+00 : f32
    %cst_259 = arith.constant 1.000000e+01 : f32
    %457 = vector.broadcast %cst_258 : f32 to vector<1x128xf32>
    %458 = arith.maximumf %457, %456 : vector<1x128xf32>
    %459 = vector.broadcast %cst_259 : f32 to vector<1x128xf32>
    %460 = arith.minimumf %459, %458 : vector<1x128xf32>
    %c24_260 = arith.constant 24 : index
    %c0_261 = arith.constant 0 : index
    %461 = vector.load %arg4[%c24_260, %c0_261] : memref<32x128xf32, #tpu.memory_space<vmem>>, vector<1x128xf32>
    tpu.vector_store %arg4[%c24_260, %c0_261], %460 {strides = array<i32>} : memref<32x128xf32, #tpu.memory_space<vmem>>, vector<1x128xf32>,
    %cst_262 = arith.constant 2.500000e+01 : f32
    %462 = vector.broadcast %cst_262 : f32 to vector<1x128xf32>
    %463 = arith.mulf %462, %28 : vector<1x128xf32>
    %464 = arith.addf %35, %463 : vector<1x128xf32>
    %cst_263 = arith.constant -5.000000e+00 : f32
    %cst_264 = arith.constant 5.000000e+00 : f32
    %465 = vector.broadcast %cst_263 : f32 to vector<1x128xf32>
    %466 = arith.maximumf %465, %464 : vector<1x128xf32>
    %467 = vector.broadcast %cst_264 : f32 to vector<1x128xf32>
    %468 = arith.minimumf %467, %466 : vector<1x128xf32>
    %c25 = arith.constant 25 : index
    %c0_265 = arith.constant 0 : index
    %469 = vector.load %arg5[%c25, %c0_265] : memref<32x128xf32, #tpu.memory_space<vmem>>, vector<1x128xf32>
    tpu.vector_store %arg5[%c25, %c0_265], %460 {strides = array<i32>} : memref<32x128xf32, #tpu.memory_space<vmem>>, vector<1x128xf32>,
    %cst_266 = arith.constant 3.000000e-02 : f32
    %470 = vector.broadcast %cst_266 : f32 to vector<1x128xf32>
    %471 = arith.mulf %468, %470 : vector<1x128xf32>
    %472 = arith.addf %460, %471 : vector<1x128xf32>
    %cst_267 = arith.constant 0.000000e+00 : f32
    %cst_268 = arith.constant 1.000000e+01 : f32
    %473 = vector.broadcast %cst_267 : f32 to vector<1x128xf32>
    %474 = arith.maximumf %473, %472 : vector<1x128xf32>
    %475 = vector.broadcast %cst_268 : f32 to vector<1x128xf32>
    %476 = arith.minimumf %475, %474 : vector<1x128xf32>
    %c25_269 = arith.constant 25 : index
    %c0_270 = arith.constant 0 : index
    %477 = vector.load %arg4[%c25_269, %c0_270] : memref<32x128xf32, #tpu.memory_space<vmem>>, vector<1x128xf32>
    tpu.vector_store %arg4[%c25_269, %c0_270], %476 {strides = array<i32>} : memref<32x128xf32, #tpu.memory_space<vmem>>, vector<1x128xf32>,
    %cst_271 = arith.constant 2.600000e+01 : f32
    %478 = vector.broadcast %cst_271 : f32 to vector<1x128xf32>
    %479 = arith.mulf %478, %28 : vector<1x128xf32>
    %480 = arith.addf %35, %479 : vector<1x128xf32>
    %cst_272 = arith.constant -5.000000e+00 : f32
    %cst_273 = arith.constant 5.000000e+00 : f32
    %481 = vector.broadcast %cst_272 : f32 to vector<1x128xf32>
    %482 = arith.maximumf %481, %480 : vector<1x128xf32>
    %483 = vector.broadcast %cst_273 : f32 to vector<1x128xf32>
    %484 = arith.minimumf %483, %482 : vector<1x128xf32>
    %c26 = arith.constant 26 : index
    %c0_274 = arith.constant 0 : index
    %485 = vector.load %arg5[%c26, %c0_274] : memref<32x128xf32, #tpu.memory_space<vmem>>, vector<1x128xf32>
    tpu.vector_store %arg5[%c26, %c0_274], %476 {strides = array<i32>} : memref<32x128xf32, #tpu.memory_space<vmem>>, vector<1x128xf32>,
    %cst_275 = arith.constant 3.000000e-02 : f32
    %486 = vector.broadcast %cst_275 : f32 to vector<1x128xf32>
    %487 = arith.mulf %484, %486 : vector<1x128xf32>
    %488 = arith.addf %476, %487 : vector<1x128xf32>
    %cst_276 = arith.constant 0.000000e+00 : f32
    %cst_277 = arith.constant 1.000000e+01 : f32
    %489 = vector.broadcast %cst_276 : f32 to vector<1x128xf32>
    %490 = arith.maximumf %489, %488 : vector<1x128xf32>
    %491 = vector.broadcast %cst_277 : f32 to vector<1x128xf32>
    %492 = arith.minimumf %491, %490 : vector<1x128xf32>
    %c26_278 = arith.constant 26 : index
    %c0_279 = arith.constant 0 : index
    %493 = vector.load %arg4[%c26_278, %c0_279] : memref<32x128xf32, #tpu.memory_space<vmem>>, vector<1x128xf32>
    tpu.vector_store %arg4[%c26_278, %c0_279], %492 {strides = array<i32>} : memref<32x128xf32, #tpu.memory_space<vmem>>, vector<1x128xf32>,
    %cst_280 = arith.constant 2.700000e+01 : f32
    %494 = vector.broadcast %cst_280 : f32 to vector<1x128xf32>
    %495 = arith.mulf %494, %28 : vector<1x128xf32>
    %496 = arith.addf %35, %495 : vector<1x128xf32>
    %cst_281 = arith.constant -5.000000e+00 : f32
    %cst_282 = arith.constant 5.000000e+00 : f32
    %497 = vector.broadcast %cst_281 : f32 to vector<1x128xf32>
    %498 = arith.maximumf %497, %496 : vector<1x128xf32>
    %499 = vector.broadcast %cst_282 : f32 to vector<1x128xf32>
    %500 = arith.minimumf %499, %498 : vector<1x128xf32>
    %c27 = arith.constant 27 : index
    %c0_283 = arith.constant 0 : index
    %501 = vector.load %arg5[%c27, %c0_283] : memref<32x128xf32, #tpu.memory_space<vmem>>, vector<1x128xf32>
    tpu.vector_store %arg5[%c27, %c0_283], %492 {strides = array<i32>} : memref<32x128xf32, #tpu.memory_space<vmem>>, vector<1x128xf32>,
    %cst_284 = arith.constant 3.000000e-02 : f32
    %502 = vector.broadcast %cst_284 : f32 to vector<1x128xf32>
    %503 = arith.mulf %500, %502 : vector<1x128xf32>
    %504 = arith.addf %492, %503 : vector<1x128xf32>
    %cst_285 = arith.constant 0.000000e+00 : f32
    %cst_286 = arith.constant 1.000000e+01 : f32
    %505 = vector.broadcast %cst_285 : f32 to vector<1x128xf32>
    %506 = arith.maximumf %505, %504 : vector<1x128xf32>
    %507 = vector.broadcast %cst_286 : f32 to vector<1x128xf32>
    %508 = arith.minimumf %507, %506 : vector<1x128xf32>
    %c27_287 = arith.constant 27 : index
    %c0_288 = arith.constant 0 : index
    %509 = vector.load %arg4[%c27_287, %c0_288] : memref<32x128xf32, #tpu.memory_space<vmem>>, vector<1x128xf32>
    tpu.vector_store %arg4[%c27_287, %c0_288], %508 {strides = array<i32>} : memref<32x128xf32, #tpu.memory_space<vmem>>, vector<1x128xf32>,
    %cst_289 = arith.constant 2.800000e+01 : f32
    %510 = vector.broadcast %cst_289 : f32 to vector<1x128xf32>
    %511 = arith.mulf %510, %28 : vector<1x128xf32>
    %512 = arith.addf %35, %511 : vector<1x128xf32>
    %cst_290 = arith.constant -5.000000e+00 : f32
    %cst_291 = arith.constant 5.000000e+00 : f32
    %513 = vector.broadcast %cst_290 : f32 to vector<1x128xf32>
    %514 = arith.maximumf %513, %512 : vector<1x128xf32>
    %515 = vector.broadcast %cst_291 : f32 to vector<1x128xf32>
    %516 = arith.minimumf %515, %514 : vector<1x128xf32>
    %c28 = arith.constant 28 : index
    %c0_292 = arith.constant 0 : index
    %517 = vector.load %arg5[%c28, %c0_292] : memref<32x128xf32, #tpu.memory_space<vmem>>, vector<1x128xf32>
    tpu.vector_store %arg5[%c28, %c0_292], %508 {strides = array<i32>} : memref<32x128xf32, #tpu.memory_space<vmem>>, vector<1x128xf32>,
    %cst_293 = arith.constant 3.000000e-02 : f32
    %518 = vector.broadcast %cst_293 : f32 to vector<1x128xf32>
    %519 = arith.mulf %516, %518 : vector<1x128xf32>
    %520 = arith.addf %508, %519 : vector<1x128xf32>
    %cst_294 = arith.constant 0.000000e+00 : f32
    %cst_295 = arith.constant 1.000000e+01 : f32
    %521 = vector.broadcast %cst_294 : f32 to vector<1x128xf32>
    %522 = arith.maximumf %521, %520 : vector<1x128xf32>
    %523 = vector.broadcast %cst_295 : f32 to vector<1x128xf32>
    %524 = arith.minimumf %523, %522 : vector<1x128xf32>
    %c28_296 = arith.constant 28 : index
    %c0_297 = arith.constant 0 : index
    %525 = vector.load %arg4[%c28_296, %c0_297] : memref<32x128xf32, #tpu.memory_space<vmem>>, vector<1x128xf32>
    tpu.vector_store %arg4[%c28_296, %c0_297], %524 {strides = array<i32>} : memref<32x128xf32, #tpu.memory_space<vmem>>, vector<1x128xf32>,
    %cst_298 = arith.constant 2.900000e+01 : f32
    %526 = vector.broadcast %cst_298 : f32 to vector<1x128xf32>
    %527 = arith.mulf %526, %28 : vector<1x128xf32>
    %528 = arith.addf %35, %527 : vector<1x128xf32>
    %cst_299 = arith.constant -5.000000e+00 : f32
    %cst_300 = arith.constant 5.000000e+00 : f32
    %529 = vector.broadcast %cst_299 : f32 to vector<1x128xf32>
    %530 = arith.maximumf %529, %528 : vector<1x128xf32>
    %531 = vector.broadcast %cst_300 : f32 to vector<1x128xf32>
    %532 = arith.minimumf %531, %530 : vector<1x128xf32>
    %c29 = arith.constant 29 : index
    %c0_301 = arith.constant 0 : index
    %533 = vector.load %arg5[%c29, %c0_301] : memref<32x128xf32, #tpu.memory_space<vmem>>, vector<1x128xf32>
    tpu.vector_store %arg5[%c29, %c0_301], %524 {strides = array<i32>} : memref<32x128xf32, #tpu.memory_space<vmem>>, vector<1x128xf32>,
    %cst_302 = arith.constant 3.000000e-02 : f32
    %534 = vector.broadcast %cst_302 : f32 to vector<1x128xf32>
    %535 = arith.mulf %532, %534 : vector<1x128xf32>
    %536 = arith.addf %524, %535 : vector<1x128xf32>
    %cst_303 = arith.constant 0.000000e+00 : f32
    %cst_304 = arith.constant 1.000000e+01 : f32
    %537 = vector.broadcast %cst_303 : f32 to vector<1x128xf32>
    %538 = arith.maximumf %537, %536 : vector<1x128xf32>
    %539 = vector.broadcast %cst_304 : f32 to vector<1x128xf32>
    %540 = arith.minimumf %539, %538 : vector<1x128xf32>
    %c29_305 = arith.constant 29 : index
    %c0_306 = arith.constant 0 : index
    %541 = vector.load %arg4[%c29_305, %c0_306] : memref<32x128xf32, #tpu.memory_space<vmem>>, vector<1x128xf32>
    tpu.vector_store %arg4[%c29_305, %c0_306], %540 {strides = array<i32>} : memref<32x128xf32, #tpu.memory_space<vmem>>, vector<1x128xf32>,
    %c0_307 = arith.constant 0 : index
    %c0_308 = arith.constant 0 : index
    %542 = vector.load %arg4[%c0_307, %c0_308] : memref<32x128xf32, #tpu.memory_space<vmem>>, vector<32x128xf32>
    %c0_309 = arith.constant 0 : index
    %c0_310 = arith.constant 0 : index
    %543 = vector.load %arg5[%c0_309, %c0_310] : memref<32x128xf32, #tpu.memory_space<vmem>>, vector<32x128xf32>
    %544 = arith.mulf %543, %57 : vector<32x128xf32>
    %cst_311 = arith.constant 4.000000e-01 : f32
    %545 = vector.broadcast %cst_311 : f32 to vector<32x128xf32>
    %546 = arith.mulf %544, %545 : vector<32x128xf32>
    %cst_312 = arith.constant -1.570000e+00 : f32
    %cst_313 = arith.constant 1.570000e+00 : f32
    %547 = vector.broadcast %cst_312 : f32 to vector<32x128xf32>
    %548 = arith.maximumf %547, %546 : vector<32x128xf32>
    %549 = vector.broadcast %cst_313 : f32 to vector<32x128xf32>
    %550 = arith.minimumf %549, %548 : vector<32x128xf32>
    %cst_314 = arith.constant 3.000000e-02 : f32
    %551 = vector.broadcast %cst_314 : f32 to vector<32x128xf32>
    %552 = arith.mulf %550, %551 : vector<32x128xf32>
    %cst_315 = arith.constant dense<0.000000e+00> : vector<32x128xf32>
    %553 = tpu.matmul %14, %552, %cst_315 {dimension_numbers = #tpu.dot_dimension_numbers<[1], [0], [0], [1], [0, 0, 1, 1], [], []>, precision = #tpu.contract_precision<fp32>} : vector<32x32xf32>, vector<32x128xf32>, vector<32x128xf32> -> vector<32x128xf32>
    %554 = vector.broadcast %4 : vector<1x128xf32> to vector<32x128xf32>
    %555 = arith.addf %554, %553 : vector<32x128xf32>
    %556 = math.cos %555 : vector<32x128xf32>
    %557 = arith.mulf %542, %556 : vector<32x128xf32>
    %cst_316 = arith.constant 3.000000e-02 : f32
    %558 = vector.broadcast %cst_316 : f32 to vector<32x128xf32>
    %559 = arith.mulf %557, %558 : vector<32x128xf32>
    %560 = math.sin %555 : vector<32x128xf32>
    %561 = arith.mulf %542, %560 : vector<32x128xf32>
    %cst_317 = arith.constant 3.000000e-02 : f32
    %562 = vector.broadcast %cst_317 : f32 to vector<32x128xf32>
    %563 = arith.mulf %561, %562 : vector<32x128xf32>
    %cst_318 = arith.constant dense<0.000000e+00> : vector<32x128xf32>
    %564 = tpu.matmul %14, %559, %cst_318 {dimension_numbers = #tpu.dot_dimension_numbers<[1], [0], [0], [1], [0, 0, 1, 1], [], []>, precision = #tpu.contract_precision<fp32>} : vector<32x32xf32>, vector<32x128xf32>, vector<32x128xf32> -> vector<32x128xf32>
    %565 = vector.broadcast %2 : vector<1x128xf32> to vector<32x128xf32>
    %566 = arith.addf %565, %564 : vector<32x128xf32>
    %c0_319 = arith.constant 0 : index
    %c0_320 = arith.constant 0 : index
    %c0_321 = arith.constant 0 : index
    %567 = vector.load %arg3[%c0_319, %c0_320, %c0_321] : memref<6x32x128xf32, #tpu.memory_space<vmem>>, vector<1x32x128xf32>
    %568 = vector.shape_cast %567 : vector<1x32x128xf32> to vector<32x128xf32>
    %569 = vector.shape_cast %566 : vector<32x128xf32> to vector<1x32x128xf32>
    tpu.vector_store %arg3[%c0_319, %c0_320, %c0_321], %569 {strides = array<i32>} : memref<6x32x128xf32, #tpu.memory_space<vmem>>, vector<1x32x128xf32>,
    %cst_322 = arith.constant dense<0.000000e+00> : vector<32x128xf32>
    %570 = tpu.matmul %14, %563, %cst_322 {dimension_numbers = #tpu.dot_dimension_numbers<[1], [0], [0], [1], [0, 0, 1, 1], [], []>, precision = #tpu.contract_precision<fp32>} : vector<32x32xf32>, vector<32x128xf32>, vector<32x128xf32> -> vector<32x128xf32>
    %571 = vector.broadcast %3 : vector<1x128xf32> to vector<32x128xf32>
    %572 = arith.addf %571, %570 : vector<32x128xf32>
    %c1_323 = arith.constant 1 : index
    %c0_324 = arith.constant 0 : index
    %c0_325 = arith.constant 0 : index
    %573 = vector.load %arg3[%c1_323, %c0_324, %c0_325] : memref<6x32x128xf32, #tpu.memory_space<vmem>>, vector<1x32x128xf32>
    %574 = vector.shape_cast %573 : vector<1x32x128xf32> to vector<32x128xf32>
    %575 = vector.shape_cast %572 : vector<32x128xf32> to vector<1x32x128xf32>
    tpu.vector_store %arg3[%c1_323, %c0_324, %c0_325], %575 {strides = array<i32>} : memref<6x32x128xf32, #tpu.memory_space<vmem>>, vector<1x32x128xf32>,
    %c2_326 = arith.constant 2 : index
    %c0_327 = arith.constant 0 : index
    %c0_328 = arith.constant 0 : index
    %576 = vector.load %arg3[%c2_326, %c0_327, %c0_328] : memref<6x32x128xf32, #tpu.memory_space<vmem>>, vector<1x32x128xf32>
    %577 = vector.shape_cast %576 : vector<1x32x128xf32> to vector<32x128xf32>
    %578 = vector.shape_cast %555 : vector<32x128xf32> to vector<1x32x128xf32>
    tpu.vector_store %arg3[%c2_326, %c0_327, %c0_328], %578 {strides = array<i32>} : memref<6x32x128xf32, #tpu.memory_space<vmem>>, vector<1x32x128xf32>,
    %c3_329 = arith.constant 3 : index
    %c0_330 = arith.constant 0 : index
    %c0_331 = arith.constant 0 : index
    %579 = vector.load %arg3[%c3_329, %c0_330, %c0_331] : memref<6x32x128xf32, #tpu.memory_space<vmem>>, vector<1x32x128xf32>
    %580 = vector.shape_cast %579 : vector<1x32x128xf32> to vector<32x128xf32>
    %581 = vector.shape_cast %542 : vector<32x128xf32> to vector<1x32x128xf32>
    tpu.vector_store %arg3[%c3_329, %c0_330, %c0_331], %581 {strides = array<i32>} : memref<6x32x128xf32, #tpu.memory_space<vmem>>, vector<1x32x128xf32>,
    %c4_332 = arith.constant 4 : index
    %c0_333 = arith.constant 0 : index
    %c0_334 = arith.constant 0 : index
    %582 = vector.load %arg3[%c4_332, %c0_333, %c0_334] : memref<6x32x128xf32, #tpu.memory_space<vmem>>, vector<1x32x128xf32>
    %583 = vector.shape_cast %582 : vector<1x32x128xf32> to vector<32x128xf32>
    %584 = vector.shape_cast %48 : vector<32x128xf32> to vector<1x32x128xf32>
    tpu.vector_store %arg3[%c4_332, %c0_333, %c0_334], %584 {strides = array<i32>} : memref<6x32x128xf32, #tpu.memory_space<vmem>>, vector<1x32x128xf32>,
    %c5_335 = arith.constant 5 : index
    %c0_336 = arith.constant 0 : index
    %c0_337 = arith.constant 0 : index
    %585 = vector.load %arg3[%c5_335, %c0_336, %c0_337] : memref<6x32x128xf32, #tpu.memory_space<vmem>>, vector<1x32x128xf32>
    %586 = vector.shape_cast %585 : vector<1x32x128xf32> to vector<32x128xf32>
    %587 = vector.shape_cast %56 : vector<32x128xf32> to vector<1x32x128xf32>
    tpu.vector_store %arg3[%c5_335, %c0_336, %c0_337], %587 {strides = array<i32>} : memref<6x32x128xf32, #tpu.memory_space<vmem>>, vector<1x32x128xf32>,
    return
  }
  func.func @transform_0(%arg0: i32) -> (i32, i32) {
    %c0_i32 = arith.constant 0 : i32
    %c0_i32_0 = arith.constant 0 : i32
    return %c0_i32, %arg0 : i32, i32
  }
  func.func @transform_1(%arg0: i32) -> (i32, i32) {
    %c0_i32 = arith.constant 0 : i32
    %c0_i32_0 = arith.constant 0 : i32
    return %c0_i32, %arg0 : i32, i32
  }
  func.func @transform_2(%arg0: i32) -> (i32, i32, i32) {
    %c0_i32 = arith.constant 0 : i32
    %c0_i32_0 = arith.constant 0 : i32
    %c0_i32_1 = arith.constant 0 : i32
    return %c0_i32, %c0_i32_0, %arg0 : i32, i32, i32
  }
}

</mosaic_0001>

<llo_original>
// kernel: tpu_custom_call.1
$region0: #{tpu_custom_call.1}
  #allocation0 [shape = 'u32[]', space=smem, size = 0x4, offset = 0x4, fixed_abs, tag = 'smem constant byte address 0x4 - core index']
  #allocation1 [shape = 'u32[144,128]{1,0:T(1,128)}', space=vmem, size = 0x12000, scoped, tag = 'internal scratch']
  #allocation2 [shape = 'f32[32,128]{1,0:T(8,128)}', space=vmem, size = 0x4000, scoped, tag = 'scratch operand']
  #allocation3 [shape = 'f32[32,128]{1,0:T(8,128)}', space=vmem, size = 0x4000, scoped, tag = 'scratch operand']
  %s0 = inlined_call_operand.hbm [shape: f32[2,128], index: 0, kind: input, shape index: {}]
  %s1 = inlined_call_operand.hbm [shape: f32[6,128], index: 1, kind: input, shape index: {}]
  %s2 = inlined_call_operand.hbm [shape: f32[6,32,128], index: 2, kind: output, shape index: {}]
  %s3 = sld [smem:[#allocation0]]
  $region26: #{tpu_custom_call.1} parent=0
    _
  %s5 = ssub.s32 1, %s3
  %s6 = scalar_select 0, %s5, %s3
  $region1: #{tpu_custom_call.1} parent=0
    #allocation4 [shape = 'u8[1024]{0}', space=vmem, size = 0x400, scoped, tag = 'input window, operand 0, single buffered']
    #allocation5 [shape = 's32[1]{0}', space=sflag, size = 0x4, scoped, tag = 'scoped memory for tpu_custom_call.1']
    #allocation6 [shape = 's32[1]{0}', space=sflag, size = 0x4, scoped, tag = 'scoped memory for tpu_custom_call.1']
    #allocation7 [shape = 'u8[4096]{0}', space=vmem, size = 0x1000, scoped, tag = 'input window, operand 1, single buffered']
    #allocation8 [shape = 's32[1]{0}', space=sflag, size = 0x4, scoped, tag = 'scoped memory for tpu_custom_call.1']
    #allocation9 [shape = 'u8[98304]{0}', space=vmem, size = 0x18000, scoped, tag = 'output window, operand 0, single buffered']
    %7 = vsyncpa [#allocation5], 0
    %8 = vsyncpa [#allocation8], 0
    %9 = vsyncpa [#allocation6], 0
    // Predicated region
    $region2: #{tpu_custom_call.1} parent=1 // pred_check
      _
    $region3: #{tpu_custom_call.1} parent=1 // pred_check_branch
      %11 = sbr.rel (0) target = $region5
    $region4: #{tpu_custom_call.1} parent=1 // pred_region
      %s13 = ssub.s32 32, 32
      %14 = vsyncadd [#allocation5], %s13
      %s16 = sshll.u32 [#allocation4], 4
      %s17 = int_to_ptr.vmem [resolvable:$true] %s16
      %19 = dma.hbm_to_vmem [thread:$0]  %s0, 32, %s17, [#allocation5]
    $region5: #{tpu_custom_call.1} parent=1 // pred_fallthru
      _
    // Predicated region
    $region6: #{tpu_custom_call.1} parent=1 // pred_check
      _
    $region7: #{tpu_custom_call.1} parent=1 // pred_check_branch
      %21 = sbr.rel (0) target = $region9
    $region8: #{tpu_custom_call.1} parent=1 // pred_region
      %s23 = ssub.s32 128, 128
      %24 = vsyncadd [#allocation8], %s23
      %s26 = sshll.u32 [#allocation7], 4
      %s27 = int_to_ptr.vmem [resolvable:$true] %s26
      %29 = dma.hbm_to_vmem [thread:$0]  %s1, 128, %s27, [#allocation8]
    $region9: #{tpu_custom_call.1} parent=1 // pred_fallthru
      _
    // Predicated region
    $region10: #{tpu_custom_call.1} parent=1 // pred_check
      _
    $region11: #{tpu_custom_call.1} parent=1 // pred_check_branch
      %31 = sbr.rel (0) target = $region13
    $region12: #{tpu_custom_call.1} parent=1 // pred_region
      %32 = dma.done [#allocation5], 32
    $region13: #{tpu_custom_call.1} parent=1 // pred_fallthru
      _
    // Predicated region
    $region14: #{tpu_custom_call.1} parent=1 // pred_check
      _
    $region15: #{tpu_custom_call.1} parent=1 // pred_check_branch
      %34 = sbr.rel (0) target = $region17
    $region16: #{tpu_custom_call.1} parent=1 // pred_region
      %35 = dma.done [#allocation8], 128
    $region17: #{tpu_custom_call.1} parent=1 // pred_fallthru
      _
    %v36 = vld [vmem:[#allocation4] sm:$0x1]
    %v37 = vld [vmem:[#allocation4 + $0x1] sm:$0x1]
    %v38 = vld [vmem:[#allocation7] sm:$0x1]
    %v39 = vld [vmem:[#allocation7 + $0x1] sm:$0x1]
    %v40 = vld [vmem:[#allocation7 + $0x2] sm:$0x1]
    %v41 = vld [vmem:[#allocation7 + $0x3] sm:$0x1]
    %v42 = vld [vmem:[#allocation7 + $0x4] sm:$0x1]
    %v43 = vld [vmem:[#allocation7 + $0x5] sm:$0x1]
    %v44 = vlaneseq
    %v45 = vshrl.u32 %v44, 7
    %v46 = vadd.s32 %v45, 8
    %v47 = vadd.s32 %v45, 16
    %v48 = vadd.s32 %v45, 24
    %v49 = vcvt.s32.f32 %v45
    %v50 = vcvt.s32.f32 %v46
    %v51 = vcvt.s32.f32 %v47
    %v52 = vcvt.s32.f32 %v48
    %v53 = vlaneseq
    %v54 = vand.u32 %v53, 127
    %vm55 = vcmp.ge.s32.totalorder %v45, %v54
    %vm56 = vcmp.ge.s32.totalorder %v46, %v54
    %vm57 = vcmp.ge.s32.totalorder %v47, %v54
    %vm58 = vcmp.ge.s32.totalorder %v48, %v54
    %v59 = vsel %vm55, 1, 0
    %v60 = vsel %vm56, 1, 0
    %v61 = vsel %vm57, 1, 0
    %v62 = vsel %vm58, 1, 0
    %v63 = vcvt.s32.f32 %v59
    %v64 = vcvt.s32.f32 %v60
    %v65 = vcvt.s32.f32 %v61
    %v66 = vcvt.s32.f32 %v62
    %v67 = vmul.f32 %v36, 4.0
    %v68 = vmax.f32 %v67, -4.0
    %v69 = vmin.f32 %v68, 4.0
    %v70 = vmul.f32 %v37, 0.5
    %v71 = vmax.f32 %v70, -0.5
    %v72 = vmin.f32 %v71, 0.5
    %v73 = vmul.f32 %v69, 0.03
    %v74 = vmul.f32 %v72, 0.03
    %v75 = vadd.f32 %v42, %v73
    %v76 = vmax.f32 %v75, -5.0
    %v77 = vmin.f32 %v76, 5.0
    %v78 = vadd.f32 %v43, %v74
    %v79 = vmax.f32 %v78, -0.5
    %v80 = vmin.f32 %v79, 0.5
    %v81 = vlaneseq
    %v82 = vshrl.u32 %v81, 7
    %v83 = vsub.s32 0, %v82
    %v84 = vrot.slane %v73, %v83
    %v85 = vmul.f32 %v49, %v84
    %v86 = vmul.f32 %v50, %v84
    %v87 = vmul.f32 %v51, %v84
    %v88 = vmul.f32 %v52, %v84
    %v89 = vlaneseq
    %v90 = vshrl.u32 %v89, 7
    %v91 = vsub.s32 0, %v90
    %v92 = vrot.slane %v77, %v91
    %v93 = vadd.f32 %v92, %v85
    %v94 = vadd.f32 %v92, %v86
    %v95 = vadd.f32 %v92, %v87
    %v96 = vadd.f32 %v92, %v88
    %v97 = vmax.f32 %v93, -5.0
    %v98 = vmax.f32 %v94, -5.0
    %v99 = vmax.f32 %v95, -5.0
    %v100 = vmax.f32 %v96, -5.0
    %v101 = vmin.f32 %v97, 5.0
    %v102 = vmin.f32 %v98, 5.0
    %v103 = vmin.f32 %v99, 5.0
    %v104 = vmin.f32 %v100, 5.0
    %v105 = vlaneseq
    %v106 = vshrl.u32 %v105, 7
    %v107 = vsub.s32 0, %v106
    %v108 = vrot.slane %v74, %v107
    %v109 = vmul.f32 %v49, %v108
    %v110 = vmul.f32 %v50, %v108
    %v111 = vmul.f32 %v51, %v108
    %v112 = vmul.f32 %v52, %v108
    %v113 = vlaneseq
    %v114 = vshrl.u32 %v113, 7
    %v115 = vsub.s32 0, %v114
    %v116 = vrot.slane %v80, %v115
    %v117 = vadd.f32 %v116, %v109
    %v118 = vadd.f32 %v116, %v110
    %v119 = vadd.f32 %v116, %v111
    %v120 = vadd.f32 %v116, %v112
    %v121 = vmax.f32 %v117, -0.5
    %v122 = vmax.f32 %v118, -0.5
    %v123 = vmax.f32 %v119, -0.5
    %v124 = vmax.f32 %v120, -0.5
    %v125 = vmin.f32 %v121, 0.5
    %v126 = vmin.f32 %v122, 0.5
    %v127 = vmin.f32 %v123, 0.5
    %v128 = vmin.f32 %v124, 0.5
    %v129 = vand.u32 2147483647, %v125
    %vm130 = vcmp.le.f32.partialorder %v129, 0.7853982
    %vm131 = vcmp.lt.s32.totalorder %v125, 0
    %v132 = vand.u32 %v125, 2139095040
    %v133 = vshrl.u32 %v132, 23
    %v134 = vsub.s32 %v133, 127
    %v135 = vand.u32 2147483647, %v125
    %v136 = vand.u32 %v135, 8388607
    %v137 = vor.u32 %v136, 8388608
    %v138 = vsub.s32 0, %v137
    %v139 = vadd.s32 %v134, 1
    %vm140 = vcmp.gt.s32.totalorder %v139, 0
    %v141 = vsel %vm140, %v139, 0
    %v142 = vshrl.u32 %v141, 5
    %v143 = vand.u32 %v141, 31
    %v144 = vsub.s32 32, %v143
    %v145 = vshrl.u32 683565275, %v144
    %v146 = vshll.u32 683565275, %v143
    %v147 = vshrl.u32 2475754826, %v144
    %v148 = vor.u32 %v146, %v147
    %v149 = vshll.u32 2475754826, %v143
    %v150 = vshrl.u32 2131351028, %v144
    %v151 = vor.u32 %v149, %v150
    %v152 = vshll.u32 2131351028, %v143
    %v153 = vshrl.u32 2102212464, %v144
    %v154 = vor.u32 %v152, %v153
    %v155 = vshll.u32 2102212464, %v143
    %v156 = vshrl.u32 920167782, %v144
    %v157 = vor.u32 %v155, %v156
    %v158 = vshll.u32 920167782, %v143
    %v159 = vshrl.u32 1326507024, %v144
    %v160 = vor.u32 %v158, %v159
    %vm161 = vcmp.lt.s32.totalorder %v142, 1
    %vm162 = vcmp.lt.s32.totalorder %v142, 2
    %vm163 = vcmp.lt.s32.totalorder %v142, 3
    %vm164 = vcmp.lt.s32.totalorder %v142, 4
    %v165 = vsel %vm161, %v145, %v148
    %v166 = vsel %vm164, %v154, 2102212464
    %v167 = vsel %vm163, %v151, %v166
    %v168 = vsel %vm162, %v165, %v167
    %v169 = vsel %vm161, %v148, %v151
    %v170 = vsel %vm164, %v157, 920167782
    %v171 = vsel %vm163, %v154, %v170
    %v172 = vsel %vm162, %v169, %v171
    %v173 = vsel %vm161, %v151, %v154
    %v174 = vsel %vm164, %v160, 1326507024
    %v175 = vsel %vm163, %v157, %v174
    %v176 = vsel %vm162, %v173, %v175
    %v177 = vshll.u32 %v137, 8
    %v178 = vmul.u32.u64.compose %v177, %v176
    %v179 = vextract.low.u32 %v178
    %v180 = vextract.high.u32 %v178
    %v181 = vmul.u32.u64.compose %v177, %v172
    %v182 = vextract.low.u32 %v181
    %v183 = vextract.high.u32 %v181
    %v184 = vmul.u32 %v177, %v168
    %v185 = vadd.s32 %v180, %v182
    %vm186 = vc.u32 %v180, %v182
    %v187 = vadd.s32 %v183, 1
    %v188 = vsel %vm186, %v187, %v183
    %v189 = vadd.s32 %v184, %v188
    %v190 = vadd.s32 %v189, 536870912
    %v191 = vshrl.u32 %v190, 30
    %v192 = vshll.u32 %v191, 30
    %v193 = vsub.s32 %v189, %v192
    %vm194 = vcmp.lt.s32.totalorder %v193, 0
    %v195 = vsub.s32 0, %v193
    %v196 = vsel %vm194, %v195, %v193
    %v197 = vclz %v196
    %v198 = vsub.s32 %v197, 2
    %vm199 = vcmp.gt.s32.totalorder 0, %v198
    %v200 = vsel %vm199, 0, %v198
    %v201 = vsub.s32 32, %v200
    %v202 = vshll.u32 %v193, %v200
    %v203 = vshrl.u32 %v185, %v201
    %v204 = vor.u32 %v202, %v203
    %v205 = vsub.s32 4294967266, %v200
    %v206 = vadd.s32 %v205, 127
    %v207 = vshll.u32 %v206, 23
    %v208 = vor.u32 4788187, %v207
    %v209 = vand.u32 2147483647, %v208
    %v211 = vcvt.s32.f32 %v204
    %v212 = vmul.f32 %v211, %v209
    %v213 = vxor.u32 %v212, 2147483648
    %v214 = vsel %vm131, %v213, %v212
    %v215 = vsub.s32 4, %v191
    %v216 = vsel %vm131, %v215, %v191
    %v217 = vsel %vm130, %v125, %v214
    %v218 = vsel %vm130, 0, %v216
    %v219 = vcosq.f32.pop %v217
    %v220 = vsinq.f32.pop %v217
    %vm221 = vweird.f32 %v125
    %v222 = vand.u32 %v218, 3
    %v223 = vadd.s32 %v218, 3
    %v224 = vand.u32 %v223, 3
    %vm225 = vcmp.lt.s32.totalorder %v222, 2
    %vm226 = vcmp.eq.s32.totalorder %v222, 0
    %v227 = vxor.u32 %v220, 2147483648
    %v228 = vsel %vm226, %v219, %v227
    %vm229 = vcmp.eq.s32.totalorder %v222, 2
    %v230 = vxor.u32 %v219, 2147483648
    %v231 = vsel %vm229, %v230, %v220
    %v232 = vsel %vm225, %v228, %v231
    %vm233 = vcmp.lt.s32.totalorder %v224, 2
    %vm234 = vcmp.eq.s32.totalorder %v224, 0
    %v235 = vxor.u32 %v220, 2147483648
    %v236 = vsel %vm234, %v219, %v235
    %vm237 = vcmp.eq.s32.totalorder %v224, 2
    %v238 = vxor.u32 %v219, 2147483648
    %v239 = vsel %vm237, %v238, %v220
    %v240 = vsel %vm233, %v236, %v239
    %v241 = vrcp.pop %v232
    %v242 = vmul.f32 %v240, %v241
    %v243 = vsel %vm221, nan, %v242
    %v244 = vand.u32 2147483647, %v126
    %vm245 = vcmp.le.f32.partialorder %v244, 0.7853982
    %vm246 = vcmp.lt.s32.totalorder %v126, 0
    %v247 = vand.u32 %v126, 2139095040
    %v248 = vshrl.u32 %v247, 23
    %v249 = vsub.s32 %v248, 127
    %v250 = vand.u32 2147483647, %v126
    %v251 = vand.u32 %v250, 8388607
    %v252 = vor.u32 %v251, 8388608
    %v253 = vsub.s32 0, %v252
    %v254 = vadd.s32 %v249, 1
    %vm255 = vcmp.gt.s32.totalorder %v254, 0
    %v256 = vsel %vm255, %v254, 0
    %v257 = vshrl.u32 %v256, 5
    %v258 = vand.u32 %v256, 31
    %v259 = vsub.s32 32, %v258
    %v260 = vshrl.u32 683565275, %v259
    %v261 = vshll.u32 683565275, %v258
    %v262 = vshrl.u32 2475754826, %v259
    %v263 = vor.u32 %v261, %v262
    %v264 = vshll.u32 2475754826, %v258
    %v265 = vshrl.u32 2131351028, %v259
    %v266 = vor.u32 %v264, %v265
    %v267 = vshll.u32 2131351028, %v258
    %v268 = vshrl.u32 2102212464, %v259
    %v269 = vor.u32 %v267, %v268
    %v270 = vshll.u32 2102212464, %v258
    %v271 = vshrl.u32 920167782, %v259
    %v272 = vor.u32 %v270, %v271
    %v273 = vshll.u32 920167782, %v258
    %v274 = vshrl.u32 1326507024, %v259
    %v275 = vor.u32 %v273, %v274
    %vm276 = vcmp.lt.s32.totalorder %v257, 1
    %vm277 = vcmp.lt.s32.totalorder %v257, 2
    %vm278 = vcmp.lt.s32.totalorder %v257, 3
    %vm279 = vcmp.lt.s32.totalorder %v257, 4
    %v280 = vsel %vm276, %v260, %v263
    %v281 = vsel %vm279, %v269, 2102212464
    %v282 = vsel %vm278, %v266, %v281
    %v283 = vsel %vm277, %v280, %v282
    %v284 = vsel %vm276, %v263, %v266
    %v285 = vsel %vm279, %v272, 920167782
    %v286 = vsel %vm278, %v269, %v285
    %v287 = vsel %vm277, %v284, %v286
    %v288 = vsel %vm276, %v266, %v269
    %v289 = vsel %vm279, %v275, 1326507024
    %v290 = vsel %vm278, %v272, %v289
    %v291 = vsel %vm277, %v288, %v290
    %v292 = vshll.u32 %v252, 8
    %v293 = vmul.u32.u64.compose %v292, %v291
    %v294 = vextract.low.u32 %v293
    %v295 = vextract.high.u32 %v293
    %v296 = vmul.u32.u64.compose %v292, %v287
    %v297 = vextract.low.u32 %v296
    %v298 = vextract.high.u32 %v296
    %v299 = vmul.u32 %v292, %v283
    %v300 = vadd.s32 %v295, %v297
    %vm301 = vc.u32 %v295, %v297
    %v302 = vadd.s32 %v298, 1
    %v303 = vsel %vm301, %v302, %v298
    %v304 = vadd.s32 %v299, %v303
    %v305 = vadd.s32 %v304, 536870912
    %v306 = vshrl.u32 %v305, 30
    %v307 = vshll.u32 %v306, 30
    %v308 = vsub.s32 %v304, %v307
    %vm309 = vcmp.lt.s32.totalorder %v308, 0
    %v310 = vsub.s32 0, %v308
    %v311 = vsel %vm309, %v310, %v308
    %v312 = vclz %v311
    %v313 = vsub.s32 %v312, 2
    %vm314 = vcmp.gt.s32.totalorder 0, %v313
    %v315 = vsel %vm314, 0, %v313
    %v316 = vsub.s32 32, %v315
    %v317 = vshll.u32 %v308, %v315
    %v318 = vshrl.u32 %v300, %v316
    %v319 = vor.u32 %v317, %v318
    %v320 = vsub.s32 4294967266, %v315
    %v321 = vadd.s32 %v320, 127
    %v322 = vshll.u32 %v321, 23
    %v323 = vor.u32 4788187, %v322
    %v324 = vand.u32 2147483647, %v323
    %v326 = vcvt.s32.f32 %v319
    %v327 = vmul.f32 %v326, %v324
    %v328 = vxor.u32 %v327, 2147483648
    %v329 = vsel %vm246, %v328, %v327
    %v330 = vsub.s32 4, %v306
    %v331 = vsel %vm246, %v330, %v306
    %v332 = vsel %vm245, %v126, %v329
    %v333 = vsel %vm245, 0, %v331
    %v334 = vcosq.f32.pop %v332
    %v335 = vsinq.f32.pop %v332
    %vm336 = vweird.f32 %v126
    %v337 = vand.u32 %v333, 3
    %v338 = vadd.s32 %v333, 3
    %v339 = vand.u32 %v338, 3
    %vm340 = vcmp.lt.s32.totalorder %v337, 2
    %vm341 = vcmp.eq.s32.totalorder %v337, 0
    %v342 = vxor.u32 %v335, 2147483648
    %v343 = vsel %vm341, %v334, %v342
    %vm344 = vcmp.eq.s32.totalorder %v337, 2
    %v345 = vxor.u32 %v334, 2147483648
    %v346 = vsel %vm344, %v345, %v335
    %v347 = vsel %vm340, %v343, %v346
    %vm348 = vcmp.lt.s32.totalorder %v339, 2
    %vm349 = vcmp.eq.s32.totalorder %v339, 0
    %v350 = vxor.u32 %v335, 2147483648
    %v351 = vsel %vm349, %v334, %v350
    %vm352 = vcmp.eq.s32.totalorder %v339, 2
    %v353 = vxor.u32 %v334, 2147483648
    %v354 = vsel %vm352, %v353, %v335
    %v355 = vsel %vm348, %v351, %v354
    %v356 = vrcp.pop %v347
    %v357 = vmul.f32 %v355, %v356
    %v358 = vsel %vm336, nan, %v357
    %v359 = vand.u32 2147483647, %v127
    %vm360 = vcmp.le.f32.partialorder %v359, 0.7853982
    %vm361 = vcmp.lt.s32.totalorder %v127, 0
    %v362 = vand.u32 %v127, 2139095040
    %v363 = vshrl.u32 %v362, 23
    %v364 = vsub.s32 %v363, 127
    %v365 = vand.u32 2147483647, %v127
    %v366 = vand.u32 %v365, 8388607
    %v367 = vor.u32 %v366, 8388608
    %v368 = vsub.s32 0, %v367
    %v369 = vadd.s32 %v364, 1
    %vm370 = vcmp.gt.s32.totalorder %v369, 0
    %v371 = vsel %vm370, %v369, 0
    %v372 = vshrl.u32 %v371, 5
    %v373 = vand.u32 %v371, 31
    %v374 = vsub.s32 32, %v373
    %v375 = vshrl.u32 683565275, %v374
    %v376 = vshll.u32 683565275, %v373
    %v377 = vshrl.u32 2475754826, %v374
    %v378 = vor.u32 %v376, %v377
    %v379 = vshll.u32 2475754826, %v373
    %v380 = vshrl.u32 2131351028, %v374
    %v381 = vor.u32 %v379, %v380
    %v382 = vshll.u32 2131351028, %v373
    %v383 = vshrl.u32 2102212464, %v374
    %v384 = vor.u32 %v382, %v383
    %v385 = vshll.u32 2102212464, %v373
    %v386 = vshrl.u32 920167782, %v374
    %v387 = vor.u32 %v385, %v386
    %v388 = vshll.u32 920167782, %v373
    %v389 = vshrl.u32 1326507024, %v374
    %v390 = vor.u32 %v388, %v389
    %vm391 = vcmp.lt.s32.totalorder %v372, 1
    %vm392 = vcmp.lt.s32.totalorder %v372, 2
    %vm393 = vcmp.lt.s32.totalorder %v372, 3
    %vm394 = vcmp.lt.s32.totalorder %v372, 4
    %v395 = vsel %vm391, %v375, %v378
    %v396 = vsel %vm394, %v384, 2102212464
    %v397 = vsel %vm393, %v381, %v396
    %v398 = vsel %vm392, %v395, %v397
    %v399 = vsel %vm391, %v378, %v381
    %v400 = vsel %vm394, %v387, 920167782
    %v401 = vsel %vm393, %v384, %v400
    %v402 = vsel %vm392, %v399, %v401
    %v403 = vsel %vm391, %v381, %v384
    %v404 = vsel %vm394, %v390, 1326507024
    %v405 = vsel %vm393, %v387, %v404
    %v406 = vsel %vm392, %v403, %v405
    %v407 = vshll.u32 %v367, 8
    %v408 = vmul.u32.u64.compose %v407, %v406
    %v409 = vextract.low.u32 %v408
    %v410 = vextract.high.u32 %v408
    %v411 = vmul.u32.u64.compose %v407, %v402
    %v412 = vextract.low.u32 %v411
    %v413 = vextract.high.u32 %v411
    %v414 = vmul.u32 %v407, %v398
    %v415 = vadd.s32 %v410, %v412
    %vm416 = vc.u32 %v410, %v412
    %v417 = vadd.s32 %v413, 1
    %v418 = vsel %vm416, %v417, %v413
    %v419 = vadd.s32 %v414, %v418
    %v420 = vadd.s32 %v419, 536870912
    %v421 = vshrl.u32 %v420, 30
    %v422 = vshll.u32 %v421, 30
    %v423 = vsub.s32 %v419, %v422
    %vm424 = vcmp.lt.s32.totalorder %v423, 0
    %v425 = vsub.s32 0, %v423
    %v426 = vsel %vm424, %v425, %v423
    %v427 = vclz %v426
    %v428 = vsub.s32 %v427, 2
    %vm429 = vcmp.gt.s32.totalorder 0, %v428
    %v430 = vsel %vm429, 0, %v428
    %v431 = vsub.s32 32, %v430
    %v432 = vshll.u32 %v423, %v430
    %v433 = vshrl.u32 %v415, %v431
    %v434 = vor.u32 %v432, %v433
    %v435 = vsub.s32 4294967266, %v430
    %v436 = vadd.s32 %v435, 127
    %v437 = vshll.u32 %v436, 23
    %v438 = vor.u32 4788187, %v437
    %v439 = vand.u32 2147483647, %v438
    %v441 = vcvt.s32.f32 %v434
    %v442 = vmul.f32 %v441, %v439
    %v443 = vxor.u32 %v442, 2147483648
    %v444 = vsel %vm361, %v443, %v442
    %v445 = vsub.s32 4, %v421
    %v446 = vsel %vm361, %v445, %v421
    %v447 = vsel %vm360, %v127, %v444
    %v448 = vsel %vm360, 0, %v446
    %v449 = vcosq.f32.pop %v447
    %v450 = vsinq.f32.pop %v447
    %vm451 = vweird.f32 %v127
    %v452 = vand.u32 %v448, 3
    %v453 = vadd.s32 %v448, 3
    %v454 = vand.u32 %v453, 3
    %vm455 = vcmp.lt.s32.totalorder %v452, 2
    %vm456 = vcmp.eq.s32.totalorder %v452, 0
    %v457 = vxor.u32 %v450, 2147483648
    %v458 = vsel %vm456, %v449, %v457
    %vm459 = vcmp.eq.s32.totalorder %v452, 2
    %v460 = vxor.u32 %v449, 2147483648
    %v461 = vsel %vm459, %v460, %v450
    %v462 = vsel %vm455, %v458, %v461
    %vm463 = vcmp.lt.s32.totalorder %v454, 2
    %vm464 = vcmp.eq.s32.totalorder %v454, 0
    %v465 = vxor.u32 %v450, 2147483648
    %v466 = vsel %vm464, %v449, %v465
    %vm467 = vcmp.eq.s32.totalorder %v454, 2
    %v468 = vxor.u32 %v449, 2147483648
    %v469 = vsel %vm467, %v468, %v450
    %v470 = vsel %vm463, %v466, %v469
    %v471 = vrcp.pop %v462
    %v472 = vmul.f32 %v470, %v471
    %v473 = vsel %vm451, nan, %v472
    %v474 = vand.u32 2147483647, %v128
    %vm475 = vcmp.le.f32.partialorder %v474, 0.7853982
    %vm476 = vcmp.lt.s32.totalorder %v128, 0
    %v477 = vand.u32 %v128, 2139095040
    %v478 = vshrl.u32 %v477, 23
    %v479 = vsub.s32 %v478, 127
    %v480 = vand.u32 2147483647, %v128
    %v481 = vand.u32 %v480, 8388607
    %v482 = vor.u32 %v481, 8388608
    %v483 = vsub.s32 0, %v482
    %v484 = vadd.s32 %v479, 1
    %vm485 = vcmp.gt.s32.totalorder %v484, 0
    %v486 = vsel %vm485, %v484, 0
    %v487 = vshrl.u32 %v486, 5
    %v488 = vand.u32 %v486, 31
    %v489 = vsub.s32 32, %v488
    %v490 = vshrl.u32 683565275, %v489
    %v491 = vshll.u32 683565275, %v488
    %v492 = vshrl.u32 2475754826, %v489
    %v493 = vor.u32 %v491, %v492
    %v494 = vshll.u32 2475754826, %v488
    %v495 = vshrl.u32 2131351028, %v489
    %v496 = vor.u32 %v494, %v495
    %v497 = vshll.u32 2131351028, %v488
    %v498 = vshrl.u32 2102212464, %v489
    %v499 = vor.u32 %v497, %v498
    %v500 = vshll.u32 2102212464, %v488
    %v501 = vshrl.u32 920167782, %v489
    %v502 = vor.u32 %v500, %v501
    %v503 = vshll.u32 920167782, %v488
    %v504 = vshrl.u32 1326507024, %v489
    %v505 = vor.u32 %v503, %v504
    %vm506 = vcmp.lt.s32.totalorder %v487, 1
    %vm507 = vcmp.lt.s32.totalorder %v487, 2
    %vm508 = vcmp.lt.s32.totalorder %v487, 3
    %vm509 = vcmp.lt.s32.totalorder %v487, 4
    %v510 = vsel %vm506, %v490, %v493
    %v511 = vsel %vm509, %v499, 2102212464
    %v512 = vsel %vm508, %v496, %v511
    %v513 = vsel %vm507, %v510, %v512
    %v514 = vsel %vm506, %v493, %v496
    %v515 = vsel %vm509, %v502, 920167782
    %v516 = vsel %vm508, %v499, %v515
    %v517 = vsel %vm507, %v514, %v516
    %v518 = vsel %vm506, %v496, %v499
    %v519 = vsel %vm509, %v505, 1326507024
    %v520 = vsel %vm508, %v502, %v519
    %v521 = vsel %vm507, %v518, %v520
    %v522 = vshll.u32 %v482, 8
    %v523 = vmul.u32.u64.compose %v522, %v521
    %v524 = vextract.low.u32 %v523
    %v525 = vextract.high.u32 %v523
    %v526 = vmul.u32.u64.compose %v522, %v517
    %v527 = vextract.low.u32 %v526
    %v528 = vextract.high.u32 %v526
    %v529 = vmul.u32 %v522, %v513
    %v530 = vadd.s32 %v525, %v527
    %vm531 = vc.u32 %v525, %v527
    %v532 = vadd.s32 %v528, 1
    %v533 = vsel %vm531, %v532, %v528
    %v534 = vadd.s32 %v529, %v533
    %v535 = vadd.s32 %v534, 536870912
    %v536 = vshrl.u32 %v535, 30
    %v537 = vshll.u32 %v536, 30
    %v538 = vsub.s32 %v534, %v537
    %vm539 = vcmp.lt.s32.totalorder %v538, 0
    %v540 = vsub.s32 0, %v538
    %v541 = vsel %vm539, %v540, %v538
    %v542 = vclz %v541
    %v543 = vsub.s32 %v542, 2
    %vm544 = vcmp.gt.s32.totalorder 0, %v543
    %v545 = vsel %vm544, 0, %v543
    %v546 = vsub.s32 32, %v545
    %v547 = vshll.u32 %v538, %v545
    %v548 = vshrl.u32 %v530, %v546
    %v549 = vor.u32 %v547, %v548
    %v550 = vsub.s32 4294967266, %v545
    %v551 = vadd.s32 %v550, 127
    %v552 = vshll.u32 %v551, 23
    %v553 = vor.u32 4788187, %v552
    %v554 = vand.u32 2147483647, %v553
    %v556 = vcvt.s32.f32 %v549
    %v557 = vmul.f32 %v556, %v554
    %v558 = vxor.u32 %v557, 2147483648
    %v559 = vsel %vm476, %v558, %v557
    %v560 = vsub.s32 4, %v536
    %v561 = vsel %vm476, %v560, %v536
    %v562 = vsel %vm475, %v128, %v559
    %v563 = vsel %vm475, 0, %v561
    %v564 = vcosq.f32.pop %v562
    %v565 = vsinq.f32.pop %v562
    %vm566 = vweird.f32 %v128
    %v567 = vand.u32 %v563, 3
    %v568 = vadd.s32 %v563, 3
    %v569 = vand.u32 %v568, 3
    %vm570 = vcmp.lt.s32.totalorder %v567, 2
    %vm571 = vcmp.eq.s32.totalorder %v567, 0
    %v572 = vxor.u32 %v565, 2147483648
    %v573 = vsel %vm571, %v564, %v572
    %vm574 = vcmp.eq.s32.totalorder %v567, 2
    %v575 = vxor.u32 %v564, 2147483648
    %v576 = vsel %vm574, %v575, %v565
    %v577 = vsel %vm570, %v573, %v576
    %vm578 = vcmp.lt.s32.totalorder %v569, 2
    %vm579 = vcmp.eq.s32.totalorder %v569, 0
    %v580 = vxor.u32 %v565, 2147483648
    %v581 = vsel %vm579, %v564, %v580
    %vm582 = vcmp.eq.s32.totalorder %v569, 2
    %v583 = vxor.u32 %v564, 2147483648
    %v584 = vsel %vm582, %v583, %v565
    %v585 = vsel %vm578, %v581, %v584
    %v586 = vrcp.pop %v577
    %v587 = vmul.f32 %v585, %v586
    %v588 = vsel %vm566, nan, %v587
    %589 = vst [vmem:[#allocation2] sm:$0xff] 0.0
    %590 = vst [vmem:[#allocation2 + $0x8] sm:$0xff] 0.0
    %591 = vst [vmem:[#allocation2 + $0x10] sm:$0xff] 0.0
    %592 = vst [vmem:[#allocation2 + $0x18] sm:$0xff] 0.0
    %593 = vst [vmem:[#allocation3] sm:$0xff] 0.0
    %594 = vst [vmem:[#allocation3 + $0x8] sm:$0xff] 0.0
    %595 = vst [vmem:[#allocation3 + $0x10] sm:$0xff] 0.0
    %596 = vst [vmem:[#allocation3 + $0x18] sm:$0xff] 0.0
    %v597 = vmul.f32 %v73, 0.0
    %v598 = vadd.f32 %v77, %v597
    %v599 = vmax.f32 %v598, -5.0
    %v600 = vmin.f32 %v599, 5.0
    %601 = vst [vmem:[#allocation3] sm:$0x1] %v41
    %v602 = vmul.f32 %v600, 0.03
    %v603 = vadd.f32 %v41, %v602
    %v604 = vmax.f32 %v603, 0.0
    %v605 = vmin.f32 %v604, 10.0
    %606 = vst [vmem:[#allocation2] sm:$0x1] %v605
    %v607 = vadd.f32 %v77, %v73
    %v608 = vmax.f32 %v607, -5.0
    %v609 = vmin.f32 %v608, 5.0
    %610 = vst [vmem:[#allocation3 + $0x1] sm:$0x1] %v605
    %v611 = vmul.f32 %v609, 0.03
    %v612 = vadd.f32 %v605, %v611
    %v613 = vmax.f32 %v612, 0.0
    %v614 = vmin.f32 %v613, 10.0
    %615 = vst [vmem:[#allocation2 + $0x1] sm:$0x1] %v614
    %v616 = vmul.f32 %v73, 2.0
    %v617 = vadd.f32 %v77, %v616
    %v618 = vmax.f32 %v617, -5.0
    %v619 = vmin.f32 %v618, 5.0
    %620 = vst [vmem:[#allocation3 + $0x2] sm:$0x1] %v614
    %v621 = vmul.f32 %v619, 0.03
    %v622 = vadd.f32 %v614, %v621
    %v623 = vmax.f32 %v622, 0.0
    %v624 = vmin.f32 %v623, 10.0
    %625 = vst [vmem:[#allocation2 + $0x2] sm:$0x1] %v624
    %v626 = vmul.f32 %v73, 3.0
    %v627 = vadd.f32 %v77, %v626
    %v628 = vmax.f32 %v627, -5.0
    %v629 = vmin.f32 %v628, 5.0
    %630 = vst [vmem:[#allocation3 + $0x3] sm:$0x1] %v624
    %v631 = vmul.f32 %v629, 0.03
    %v632 = vadd.f32 %v624, %v631
    %v633 = vmax.f32 %v632, 0.0
    %v634 = vmin.f32 %v633, 10.0
    %635 = vst [vmem:[#allocation2 + $0x3] sm:$0x1] %v634
    %v636 = vmul.f32 %v73, 4.0
    %v637 = vadd.f32 %v77, %v636
    %v638 = vmax.f32 %v637, -5.0
    %v639 = vmin.f32 %v638, 5.0
    %640 = vst [vmem:[#allocation3 + $0x4] sm:$0x1] %v634
    %v641 = vmul.f32 %v639, 0.03
    %v642 = vadd.f32 %v634, %v641
    %v643 = vmax.f32 %v642, 0.0
    %v644 = vmin.f32 %v643, 10.0
    %645 = vst [vmem:[#allocation2 + $0x4] sm:$0x1] %v644
    %v646 = vmul.f32 %v73, 5.0
    %v647 = vadd.f32 %v77, %v646
    %v648 = vmax.f32 %v647, -5.0
    %v649 = vmin.f32 %v648, 5.0
    %650 = vst [vmem:[#allocation3 + $0x5] sm:$0x1] %v644
    %v651 = vmul.f32 %v649, 0.03
    %v652 = vadd.f32 %v644, %v651
    %v653 = vmax.f32 %v652, 0.0
    %v654 = vmin.f32 %v653, 10.0
    %655 = vst [vmem:[#allocation2 + $0x5] sm:$0x1] %v654
    %v656 = vmul.f32 %v73, 6.0
    %v657 = vadd.f32 %v77, %v656
    %v658 = vmax.f32 %v657, -5.0
    %v659 = vmin.f32 %v658, 5.0
    %660 = vst [vmem:[#allocation3 + $0x6] sm:$0x1] %v654
    %v661 = vmul.f32 %v659, 0.03
    %v662 = vadd.f32 %v654, %v661
    %v663 = vmax.f32 %v662, 0.0
    %v664 = vmin.f32 %v663, 10.0
    %665 = vst [vmem:[#allocation2 + $0x6] sm:$0x1] %v664
    %v666 = vmul.f32 %v73, 7.0
    %v667 = vadd.f32 %v77, %v666
    %v668 = vmax.f32 %v667, -5.0
    %v669 = vmin.f32 %v668, 5.0
    %670 = vst [vmem:[#allocation3 + $0x7] sm:$0x1] %v664
    %v671 = vmul.f32 %v669, 0.03
    %v672 = vadd.f32 %v664, %v671
    %v673 = vmax.f32 %v672, 0.0
    %v674 = vmin.f32 %v673, 10.0
    %675 = vst [vmem:[#allocation2 + $0x7] sm:$0x1] %v674
    %v676 = vmul.f32 %v73, 8.0
    %v677 = vadd.f32 %v77, %v676
    %v678 = vmax.f32 %v677, -5.0
    %v679 = vmin.f32 %v678, 5.0
    %680 = vst [vmem:[#allocation3 + $0x8] sm:$0x1] %v674
    %v681 = vmul.f32 %v679, 0.03
    %v682 = vadd.f32 %v674, %v681
    %v683 = vmax.f32 %v682, 0.0
    %v684 = vmin.f32 %v683, 10.0
    %685 = vst [vmem:[#allocation2 + $0x8] sm:$0x1] %v684
    %v686 = vmul.f32 %v73, 9.0
    %v687 = vadd.f32 %v77, %v686
    %v688 = vmax.f32 %v687, -5.0
    %v689 = vmin.f32 %v688, 5.0
    %690 = vst [vmem:[#allocation3 + $0x9] sm:$0x1] %v684
    %v691 = vmul.f32 %v689, 0.03
    %v692 = vadd.f32 %v684, %v691
    %v693 = vmax.f32 %v692, 0.0
    %v694 = vmin.f32 %v693, 10.0
    %695 = vst [vmem:[#allocation2 + $0x9] sm:$0x1] %v694
    %v696 = vmul.f32 %v73, 10.0
    %v697 = vadd.f32 %v77, %v696
    %v698 = vmax.f32 %v697, -5.0
    %v699 = vmin.f32 %v698, 5.0
    %700 = vst [vmem:[#allocation3 + $0xa] sm:$0x1] %v694
    %v701 = vmul.f32 %v699, 0.03
    %v702 = vadd.f32 %v694, %v701
    %v703 = vmax.f32 %v702, 0.0
    %v704 = vmin.f32 %v703, 10.0
    %705 = vst [vmem:[#allocation2 + $0xa] sm:$0x1] %v704
    %v706 = vmul.f32 %v73, 11.0
    %v707 = vadd.f32 %v77, %v706
    %v708 = vmax.f32 %v707, -5.0
    %v709 = vmin.f32 %v708, 5.0
    %710 = vst [vmem:[#allocation3 + $0xb] sm:$0x1] %v704
    %v711 = vmul.f32 %v709, 0.03
    %v712 = vadd.f32 %v704, %v711
    %v713 = vmax.f32 %v712, 0.0
    %v714 = vmin.f32 %v713, 10.0
    %715 = vst [vmem:[#allocation2 + $0xb] sm:$0x1] %v714
    %v716 = vmul.f32 %v73, 12.0
    %v717 = vadd.f32 %v77, %v716
    %v718 = vmax.f32 %v717, -5.0
    %v719 = vmin.f32 %v718, 5.0
    %720 = vst [vmem:[#allocation3 + $0xc] sm:$0x1] %v714
    %v721 = vmul.f32 %v719, 0.03
    %v722 = vadd.f32 %v714, %v721
    %v723 = vmax.f32 %v722, 0.0
    %v724 = vmin.f32 %v723, 10.0
    %725 = vst [vmem:[#allocation2 + $0xc] sm:$0x1] %v724
    %v726 = vmul.f32 %v73, 13.0
    %v727 = vadd.f32 %v77, %v726
    %v728 = vmax.f32 %v727, -5.0
    %v729 = vmin.f32 %v728, 5.0
    %730 = vst [vmem:[#allocation3 + $0xd] sm:$0x1] %v724
    %v731 = vmul.f32 %v729, 0.03
    %v732 = vadd.f32 %v724, %v731
    %v733 = vmax.f32 %v732, 0.0
    %v734 = vmin.f32 %v733, 10.0
    %735 = vst [vmem:[#allocation2 + $0xd] sm:$0x1] %v734
    %v736 = vmul.f32 %v73, 14.0
    %v737 = vadd.f32 %v77, %v736
    %v738 = vmax.f32 %v737, -5.0
    %v739 = vmin.f32 %v738, 5.0
    %740 = vst [vmem:[#allocation3 + $0xe] sm:$0x1] %v734
    %v741 = vmul.f32 %v739, 0.03
    %v742 = vadd.f32 %v734, %v741
    %v743 = vmax.f32 %v742, 0.0
    %v744 = vmin.f32 %v743, 10.0
    %745 = vst [vmem:[#allocation2 + $0xe] sm:$0x1] %v744
    %v746 = vmul.f32 %v73, 15.0
    %v747 = vadd.f32 %v77, %v746
    %v748 = vmax.f32 %v747, -5.0
    %v749 = vmin.f32 %v748, 5.0
    %750 = vst [vmem:[#allocation3 + $0xf] sm:$0x1] %v744
    %v751 = vmul.f32 %v749, 0.03
    %v752 = vadd.f32 %v744, %v751
    %v753 = vmax.f32 %v752, 0.0
    %v754 = vmin.f32 %v753, 10.0
    %755 = vst [vmem:[#allocation2 + $0xf] sm:$0x1] %v754
    %v756 = vmul.f32 %v73, 16.0
    %v757 = vadd.f32 %v77, %v756
    %v758 = vmax.f32 %v757, -5.0
    %v759 = vmin.f32 %v758, 5.0
    %760 = vst [vmem:[#allocation3 + $0x10] sm:$0x1] %v754
    %v761 = vmul.f32 %v759, 0.03
    %v762 = vadd.f32 %v754, %v761
    %v763 = vmax.f32 %v762, 0.0
    %v764 = vmin.f32 %v763, 10.0
    %765 = vst [vmem:[#allocation2 + $0x10] sm:$0x1] %v764
    %v766 = vmul.f32 %v73, 17.0
    %v767 = vadd.f32 %v77, %v766
    %v768 = vmax.f32 %v767, -5.0
    %v769 = vmin.f32 %v768, 5.0
    %770 = vst [vmem:[#allocation3 + $0x11] sm:$0x1] %v764
    %v771 = vmul.f32 %v769, 0.03
    %v772 = vadd.f32 %v764, %v771
    %v773 = vmax.f32 %v772, 0.0
    %v774 = vmin.f32 %v773, 10.0
    %775 = vst [vmem:[#allocation2 + $0x11] sm:$0x1] %v774
    %v776 = vmul.f32 %v73, 18.0
    %v777 = vadd.f32 %v77, %v776
    %v778 = vmax.f32 %v777, -5.0
    %v779 = vmin.f32 %v778, 5.0
    %780 = vst [vmem:[#allocation3 + $0x12] sm:$0x1] %v774
    %v781 = vmul.f32 %v779, 0.03
    %v782 = vadd.f32 %v774, %v781
    %v783 = vmax.f32 %v782, 0.0
    %v784 = vmin.f32 %v783, 10.0
    %785 = vst [vmem:[#allocation2 + $0x12] sm:$0x1] %v784
    %v786 = vmul.f32 %v73, 19.0
    %v787 = vadd.f32 %v77, %v786
    %v788 = vmax.f32 %v787, -5.0
    %v789 = vmin.f32 %v788, 5.0
    %790 = vst [vmem:[#allocation3 + $0x13] sm:$0x1] %v784
    %v791 = vmul.f32 %v789, 0.03
    %v792 = vadd.f32 %v784, %v791
    %v793 = vmax.f32 %v792, 0.0
    %v794 = vmin.f32 %v793, 10.0
    %795 = vst [vmem:[#allocation2 + $0x13] sm:$0x1] %v794
    %v796 = vmul.f32 %v73, 20.0
    %v797 = vadd.f32 %v77, %v796
    %v798 = vmax.f32 %v797, -5.0
    %v799 = vmin.f32 %v798, 5.0
    %800 = vst [vmem:[#allocation3 + $0x14] sm:$0x1] %v794
    %v801 = vmul.f32 %v799, 0.03
    %v802 = vadd.f32 %v794, %v801
    %v803 = vmax.f32 %v802, 0.0
    %v804 = vmin.f32 %v803, 10.0
    %805 = vst [vmem:[#allocation2 + $0x14] sm:$0x1] %v804
    %v806 = vmul.f32 %v73, 21.0
    %v807 = vadd.f32 %v77, %v806
    %v808 = vmax.f32 %v807, -5.0
    %v809 = vmin.f32 %v808, 5.0
    %810 = vst [vmem:[#allocation3 + $0x15] sm:$0x1] %v804
    %v811 = vmul.f32 %v809, 0.03
    %v812 = vadd.f32 %v804, %v811
    %v813 = vmax.f32 %v812, 0.0
    %v814 = vmin.f32 %v813, 10.0
    %815 = vst [vmem:[#allocation2 + $0x15] sm:$0x1] %v814
    %v816 = vmul.f32 %v73, 22.0
    %v817 = vadd.f32 %v77, %v816
    %v818 = vmax.f32 %v817, -5.0
    %v819 = vmin.f32 %v818, 5.0
    %820 = vst [vmem:[#allocation3 + $0x16] sm:$0x1] %v814
    %v821 = vmul.f32 %v819, 0.03
    %v822 = vadd.f32 %v814, %v821
    %v823 = vmax.f32 %v822, 0.0
    %v824 = vmin.f32 %v823, 10.0
    %825 = vst [vmem:[#allocation2 + $0x16] sm:$0x1] %v824
    %v826 = vmul.f32 %v73, 23.0
    %v827 = vadd.f32 %v77, %v826
    %v828 = vmax.f32 %v827, -5.0
    %v829 = vmin.f32 %v828, 5.0
    %830 = vst [vmem:[#allocation3 + $0x17] sm:$0x1] %v824
    %v831 = vmul.f32 %v829, 0.03
    %v832 = vadd.f32 %v824, %v831
    %v833 = vmax.f32 %v832, 0.0
    %v834 = vmin.f32 %v833, 10.0
    %835 = vst [vmem:[#allocation2 + $0x17] sm:$0x1] %v834
    %v836 = vmul.f32 %v73, 24.0
    %v837 = vadd.f32 %v77, %v836
    %v838 = vmax.f32 %v837, -5.0
    %v839 = vmin.f32 %v838, 5.0
    %840 = vst [vmem:[#allocation3 + $0x18] sm:$0x1] %v834
    %v841 = vmul.f32 %v839, 0.03
    %v842 = vadd.f32 %v834, %v841
    %v843 = vmax.f32 %v842, 0.0
    %v844 = vmin.f32 %v843, 10.0
    %845 = vst [vmem:[#allocation2 + $0x18] sm:$0x1] %v844
    %v846 = vmul.f32 %v73, 25.0
    %v847 = vadd.f32 %v77, %v846
    %v848 = vmax.f32 %v847, -5.0
    %v849 = vmin.f32 %v848, 5.0
    %850 = vst [vmem:[#allocation3 + $0x19] sm:$0x1] %v844
    %v851 = vmul.f32 %v849, 0.03
    %v852 = vadd.f32 %v844, %v851
    %v853 = vmax.f32 %v852, 0.0
    %v854 = vmin.f32 %v853, 10.0
    %855 = vst [vmem:[#allocation2 + $0x19] sm:$0x1] %v854
    %v856 = vmul.f32 %v73, 26.0
    %v857 = vadd.f32 %v77, %v856
    %v858 = vmax.f32 %v857, -5.0
    %v859 = vmin.f32 %v858, 5.0
    %860 = vst [vmem:[#allocation3 + $0x1a] sm:$0x1] %v854
    %v861 = vmul.f32 %v859, 0.03
    %v862 = vadd.f32 %v854, %v861
    %v863 = vmax.f32 %v862, 0.0
    %v864 = vmin.f32 %v863, 10.0
    %865 = vst [vmem:[#allocation2 + $0x1a] sm:$0x1] %v864
    %v866 = vmul.f32 %v73, 27.0
    %v867 = vadd.f32 %v77, %v866
    %v868 = vmax.f32 %v867, -5.0
    %v869 = vmin.f32 %v868, 5.0
    %870 = vst [vmem:[#allocation3 + $0x1b] sm:$0x1] %v864
    %v871 = vmul.f32 %v869, 0.03
    %v872 = vadd.f32 %v864, %v871
    %v873 = vmax.f32 %v872, 0.0
    %v874 = vmin.f32 %v873, 10.0
    %875 = vst [vmem:[#allocation2 + $0x1b] sm:$0x1] %v874
    %v876 = vmul.f32 %v73, 28.0
    %v877 = vadd.f32 %v77, %v876
    %v878 = vmax.f32 %v877, -5.0
    %v879 = vmin.f32 %v878, 5.0
    %880 = vst [vmem:[#allocation3 + $0x1c] sm:$0x1] %v874
    %v881 = vmul.f32 %v879, 0.03
    %v882 = vadd.f32 %v874, %v881
    %v883 = vmax.f32 %v882, 0.0
    %v884 = vmin.f32 %v883, 10.0
    %885 = vst [vmem:[#allocation2 + $0x1c] sm:$0x1] %v884
    %v886 = vmul.f32 %v73, 29.0
    %v887 = vadd.f32 %v77, %v886
    %v888 = vmax.f32 %v887, -5.0
    %v889 = vmin.f32 %v888, 5.0
    %890 = vst [vmem:[#allocation3 + $0x1d] sm:$0x1] %v884
    %v891 = vmul.f32 %v889, 0.03
    %v892 = vadd.f32 %v884, %v891
    %v893 = vmax.f32 %v892, 0.0
    %v894 = vmin.f32 %v893, 10.0
    %895 = vst [vmem:[#allocation2 + $0x1d] sm:$0x1] %v894
    %v896 = vld [vmem:[#allocation2] sm:$0xff]
    %v897 = vld [vmem:[#allocation2 + $0x8] sm:$0xff]
    %v898 = vld [vmem:[#allocation2 + $0x10] sm:$0xff]
    %v899 = vld [vmem:[#allocation2 + $0x18] sm:$0xff]
    %v900 = vld [vmem:[#allocation3] sm:$0xff]
    %v901 = vld [vmem:[#allocation3 + $0x8] sm:$0xff]
    %v902 = vld [vmem:[#allocation3 + $0x10] sm:$0xff]
    %v903 = vld [vmem:[#allocation3 + $0x18] sm:$0xff]
    %v904 = vmul.f32 %v900, %v243
    %v905 = vmul.f32 %v901, %v358
    %v906 = vmul.f32 %v902, %v473
    %v907 = vmul.f32 %v903, %v588
    %v908 = vmul.f32 %v904, 0.4
    %v909 = vmul.f32 %v905, 0.4
    %v910 = vmul.f32 %v906, 0.4
    %v911 = vmul.f32 %v907, 0.4
    %v912 = vmax.f32 %v908, -1.57
    %v913 = vmax.f32 %v909, -1.57
    %v914 = vmax.f32 %v910, -1.57
    %v915 = vmax.f32 %v911, -1.57
    %v916 = vmin.f32 %v912, 1.57
    %v917 = vmin.f32 %v913, 1.57
    %v918 = vmin.f32 %v914, 1.57
    %v919 = vmin.f32 %v915, 1.57
    %v920 = vmul.f32 %v916, 0.03
    %v921 = vmul.f32 %v917, 0.03
    %v922 = vmul.f32 %v918, 0.03
    %v923 = vmul.f32 %v919, 0.03
    %vm924 = vcmask 261120
    %v926 = vsel %vm924, %v63, 0
    %v929 = vsel %vm924, %v64, 0
    %v932 = vsel %vm924, %v65, 0
    %v935 = vsel %vm924, %v66, 0
    %937 = vmatprep.subr.mxu0 0.0
    %938 = vmatpush1.msra.mxu0 0.0
    %939 = vmatprep.subr.mxu0 0.0
    %940 = vmatpush1.msra.mxu0 0.0
    %941 = vmatprep.subr.mxu0 0.0
    %942 = vmatpush1.msra.mxu0 0.0
    %943 = vmatprep.subr.mxu0 0.0
    %944 = vmatpush1.msra.mxu0 0.0
    %945 = vmatprep.subr.mxu0 0.0
    %946 = vmatpush1.msra.mxu0 0.0
    %947 = vmatprep.subr.mxu0 0.0
    %948 = vmatpush1.msra.mxu0 0.0
    %949 = vmatprep.subr.mxu0 0.0
    %950 = vmatpush1.msra.mxu0 0.0
    %951 = vmatprep.subr.mxu0 0.0
    %952 = vmatpush1.msra.mxu0 0.0
    %953 = vmatprep.subr.mxu0 0.0
    %954 = vmatpush1.msra.mxu0 0.0
    %955 = vmatprep.subr.mxu0 0.0
    %956 = vmatpush1.msra.mxu0 0.0
    %957 = vmatprep.subr.mxu0 0.0
    %958 = vmatpush1.msra.mxu0 0.0
    %959 = vmatprep.subr.mxu0 0.0
    %960 = vmatpush1.msra.mxu0 0.0
    %961 = vmatprep.subr.mxu0 0.0
    %v962 = vand.u32 %v923, 4294901760
    %963 = vmatpush1.msra.mxu0 %v962
    %964 = vmatprep.subr.mxu0 0.0
    %v965 = vand.u32 %v922, 4294901760
    %966 = vmatpush1.msra.mxu0 %v965
    %967 = vmatprep.subr.mxu0 0.0
    %v968 = vand.u32 %v921, 4294901760
    %969 = vmatpush1.msra.mxu0 %v968
    %970 = vmatprep.subr.mxu0 0.0
    %v971 = vand.u32 %v920, 4294901760
    %972 = vmatpush1.msra.mxu0 %v971
    %973 = vmatprep.subr.mxu0 0.0
    %974 = vmatpush2.msra.mxu0 0.0
    %975 = vmatprep.subr.mxu0 0.0
    %976 = vmatpush2.msra.mxu0 0.0
    %977 = vmatprep.subr.mxu0 0.0
    %978 = vmatpush2.msra.mxu0 0.0
    %979 = vmatprep.subr.mxu0 0.0
    %980 = vmatpush2.msra.mxu0 0.0
    %981 = vmatprep.subr.mxu0 0.0
    %982 = vmatpush2.msra.mxu0 0.0
    %983 = vmatprep.subr.mxu0 0.0
    %984 = vmatpush2.msra.mxu0 0.0
    %985 = vmatprep.subr.mxu0 0.0
    %986 = vmatpush2.msra.mxu0 0.0
    %987 = vmatprep.subr.mxu0 0.0
    %988 = vmatpush2.msra.mxu0 0.0
    %989 = vmatprep.subr.mxu0 0.0
    %990 = vmatpush2.msra.mxu0 0.0
    %991 = vmatprep.subr.mxu0 0.0
    %992 = vmatpush2.msra.mxu0 0.0
    %993 = vmatprep.subr.mxu0 0.0
    %994 = vmatpush2.msra.mxu0 0.0
    %995 = vmatprep.subr.mxu0 0.0
    %996 = vmatpush2.msra.mxu0 0.0
    %997 = vmatprep.subr.mxu0 0.0
    %998 = vmatpush2.msra.mxu0 0.0
    %999 = vmatprep.subr.mxu0 0.0
    %1000 = vmatpush2.msra.mxu0 0.0
    %1001 = vmatprep.subr.mxu0 0.0
    %1002 = vmatpush2.msra.mxu0 0.0
    %1003 = vmatprep.subr.mxu0 0.0
    %1004 = vmatpush2.msra.mxu0 0.0
    %1005 = vmatprep.mubr.f32.mxu0 0.0
    %v1006 = vand.u32 %v926, 4294901760
    %v1007 = vsub.f32 %v926, %v1006
    %v1008 = vand.u32 %v1007, 4294901760
    %v1009 = vsub.f32 %v1007, %v1008
    %v1010 = vand.u32 %v1009, 4294901760
    %1011 = vmatmul.mubr.f32.gmra.mxu0 %v1010
    %v1012 = vpop.f32.mrf.mxu0
    %v1013 = vadd.f32 0.0, %v1012
    %v1014 = vpop.f32.mrf.mxu0
    %1015 = vmatprep.mubr.f32.mxu0 0.0
    %v1016 = vand.u32 %v929, 4294901760
    %v1017 = vsub.f32 %v929, %v1016
    %v1018 = vand.u32 %v1017, 4294901760
    %v1019 = vsub.f32 %v1017, %v1018
    %v1020 = vand.u32 %v1019, 4294901760
    %1021 = vmatmul.mubr.f32.gmra.mxu0 %v1020
    %v1022 = vpop.f32.mrf.mxu0
    %v1023 = vadd.f32 0.0, %v1022
    %v1024 = vpop.f32.mrf.mxu0
    %1025 = vmatprep.mubr.f32.mxu0 0.0
    %v1026 = vand.u32 %v932, 4294901760
    %v1027 = vsub.f32 %v932, %v1026
    %v1028 = vand.u32 %v1027, 4294901760
    %v1029 = vsub.f32 %v1027, %v1028
    %v1030 = vand.u32 %v1029, 4294901760
    %1031 = vmatmul.mubr.f32.gmra.mxu0 %v1030
    %v1032 = vpop.f32.mrf.mxu0
    %v1033 = vadd.f32 0.0, %v1032
    %v1034 = vpop.f32.mrf.mxu0
    %1035 = vmatprep.mubr.f32.mxu0 0.0
    %v1036 = vand.u32 %v935, 4294901760
    %v1037 = vsub.f32 %v935, %v1036
    %v1038 = vand.u32 %v1037, 4294901760
    %v1039 = vsub.f32 %v1037, %v1038
    %v1040 = vand.u32 %v1039, 4294901760
    %1041 = vmatmul.mubr.f32.gmra.mxu0 %v1040
    %v1042 = vpop.f32.mrf.mxu0
    %v1043 = vadd.f32 0.0, %v1042
    %v1044 = vpop.f32.mrf.mxu0
    %1045 = vdwg.mxu0
    %1046 = vmatprep.subr.mxu0 0.0
    %1047 = vmatpush1.msra.mxu0 0.0
    %1048 = vmatprep.subr.mxu0 0.0
    %1049 = vmatpush1.msra.mxu0 0.0
    %1050 = vmatprep.subr.mxu0 0.0
    %1051 = vmatpush1.msra.mxu0 0.0
    %1052 = vmatprep.subr.mxu0 0.0
    %1053 = vmatpush1.msra.mxu0 0.0
    %1054 = vmatprep.subr.mxu0 0.0
    %1055 = vmatpush1.msra.mxu0 0.0
    %1056 = vmatprep.subr.mxu0 0.0
    %1057 = vmatpush1.msra.mxu0 0.0
    %1058 = vmatprep.subr.mxu0 0.0
    %1059 = vmatpush1.msra.mxu0 0.0
    %1060 = vmatprep.subr.mxu0 0.0
    %1061 = vmatpush1.msra.mxu0 0.0
    %1062 = vmatprep.subr.mxu0 0.0
    %1063 = vmatpush1.msra.mxu0 0.0
    %1064 = vmatprep.subr.mxu0 0.0
    %1065 = vmatpush1.msra.mxu0 0.0
    %1066 = vmatprep.subr.mxu0 0.0
    %1067 = vmatpush1.msra.mxu0 0.0
    %1068 = vmatprep.subr.mxu0 0.0
    %1069 = vmatpush1.msra.mxu0 0.0
    %1070 = vmatprep.subr.mxu0 0.0
    %v1071 = vand.u32 %v923, 4294901760
    %v1072 = vsub.f32 %v923, %v1071
    %v1073 = vand.u32 %v1072, 4294901760
    %v1074 = vsub.f32 %v1072, %v1073
    %v1075 = vand.u32 %v1074, 4294901760
    %1076 = vmatpush1.msra.mxu0 %v1075
    %1077 = vmatprep.subr.mxu0 0.0
    %v1078 = vand.u32 %v922, 4294901760
    %v1079 = vsub.f32 %v922, %v1078
    %v1080 = vand.u32 %v1079, 4294901760
    %v1081 = vsub.f32 %v1079, %v1080
    %v1082 = vand.u32 %v1081, 4294901760
    %1083 = vmatpush1.msra.mxu0 %v1082
    %1084 = vmatprep.subr.mxu0 0.0
    %v1085 = vand.u32 %v921, 4294901760
    %v1086 = vsub.f32 %v921, %v1085
    %v1087 = vand.u32 %v1086, 4294901760
    %v1088 = vsub.f32 %v1086, %v1087
    %v1089 = vand.u32 %v1088, 4294901760
    %1090 = vmatpush1.msra.mxu0 %v1089
    %1091 = vmatprep.subr.mxu0 0.0
    %v1092 = vand.u32 %v920, 4294901760
    %v1093 = vsub.f32 %v920, %v1092
    %v1094 = vand.u32 %v1093, 4294901760
    %v1095 = vsub.f32 %v1093, %v1094
    %v1096 = vand.u32 %v1095, 4294901760
    %1097 = vmatpush1.msra.mxu0 %v1096
    %1098 = vmatprep.subr.mxu0 0.0
    %1099 = vmatpush2.msra.mxu0 0.0
    %1100 = vmatprep.subr.mxu0 0.0
    %1101 = vmatpush2.msra.mxu0 0.0
    %1102 = vmatprep.subr.mxu0 0.0
    %1103 = vmatpush2.msra.mxu0 0.0
    %1104 = vmatprep.subr.mxu0 0.0
    %1105 = vmatpush2.msra.mxu0 0.0
    %1106 = vmatprep.subr.mxu0 0.0
    %1107 = vmatpush2.msra.mxu0 0.0
    %1108 = vmatprep.subr.mxu0 0.0
    %1109 = vmatpush2.msra.mxu0 0.0
    %1110 = vmatprep.subr.mxu0 0.0
    %1111 = vmatpush2.msra.mxu0 0.0
    %1112 = vmatprep.subr.mxu0 0.0
    %1113 = vmatpush2.msra.mxu0 0.0
    %1114 = vmatprep.subr.mxu0 0.0
    %1115 = vmatpush2.msra.mxu0 0.0
    %1116 = vmatprep.subr.mxu0 0.0
    %1117 = vmatpush2.msra.mxu0 0.0
    %1118 = vmatprep.subr.mxu0 0.0
    %1119 = vmatpush2.msra.mxu0 0.0
    %1120 = vmatprep.subr.mxu0 0.0
    %1121 = vmatpush2.msra.mxu0 0.0
    %1122 = vmatprep.subr.mxu0 0.0
    %1123 = vmatpush2.msra.mxu0 0.0
    %1124 = vmatprep.subr.mxu0 0.0
    %1125 = vmatpush2.msra.mxu0 0.0
    %1126 = vmatprep.subr.mxu0 0.0
    %1127 = vmatpush2.msra.mxu0 0.0
    %1128 = vmatprep.subr.mxu0 0.0
    %1129 = vmatpush2.msra.mxu0 0.0
    %1130 = vmatprep.mubr.f32.mxu0 0.0
    %v1131 = vand.u32 %v926, 4294901760
    %1132 = vmatmul.mubr.f32.gmra.mxu0 %v1131
    %v1133 = vpop.f32.mrf.mxu0
    %v1134 = vadd.f32 %v1013, %v1133
    %v1135 = vpop.f32.mrf.mxu0
    %1136 = vmatprep.mubr.f32.mxu0 0.0
    %v1137 = vand.u32 %v929, 4294901760
    %1138 = vmatmul.mubr.f32.gmra.mxu0 %v1137
    %v1139 = vpop.f32.mrf.mxu0
    %v1140 = vadd.f32 %v1023, %v1139
    %v1141 = vpop.f32.mrf.mxu0
    %1142 = vmatprep.mubr.f32.mxu0 0.0
    %v1143 = vand.u32 %v932, 4294901760
    %1144 = vmatmul.mubr.f32.gmra.mxu0 %v1143
    %v1145 = vpop.f32.mrf.mxu0
    %v1146 = vadd.f32 %v1033, %v1145
    %v1147 = vpop.f32.mrf.mxu0
    %1148 = vmatprep.mubr.f32.mxu0 0.0
    %v1149 = vand.u32 %v935, 4294901760
    %1150 = vmatmul.mubr.f32.gmra.mxu0 %v1149
    %v1151 = vpop.f32.mrf.mxu0
    %v1152 = vadd.f32 %v1043, %v1151
    %v1153 = vpop.f32.mrf.mxu0
    %1154 = vdwg.mxu0
    %1155 = vmatprep.subr.mxu0 0.0
    %1156 = vmatpush1.msra.mxu0 0.0
    %1157 = vmatprep.subr.mxu0 0.0
    %1158 = vmatpush1.msra.mxu0 0.0
    %1159 = vmatprep.subr.mxu0 0.0
    %1160 = vmatpush1.msra.mxu0 0.0
    %1161 = vmatprep.subr.mxu0 0.0
    %1162 = vmatpush1.msra.mxu0 0.0
    %1163 = vmatprep.subr.mxu0 0.0
    %1164 = vmatpush1.msra.mxu0 0.0
    %1165 = vmatprep.subr.mxu0 0.0
    %1166 = vmatpush1.msra.mxu0 0.0
    %1167 = vmatprep.subr.mxu0 0.0
    %1168 = vmatpush1.msra.mxu0 0.0
    %1169 = vmatprep.subr.mxu0 0.0
    %1170 = vmatpush1.msra.mxu0 0.0
    %1171 = vmatprep.subr.mxu0 0.0
    %1172 = vmatpush1.msra.mxu0 0.0
    %1173 = vmatprep.subr.mxu0 0.0
    %1174 = vmatpush1.msra.mxu0 0.0
    %1175 = vmatprep.subr.mxu0 0.0
    %1176 = vmatpush1.msra.mxu0 0.0
    %1177 = vmatprep.subr.mxu0 0.0
    %1178 = vmatpush1.msra.mxu0 0.0
    %1179 = vmatprep.subr.mxu0 0.0
    %v1180 = vand.u32 %v923, 4294901760
    %v1181 = vsub.f32 %v923, %v1180
    %1182 = vmatpush1.msra.mxu0 %v1181
    %1183 = vmatprep.subr.mxu0 0.0
    %v1184 = vand.u32 %v922, 4294901760
    %v1185 = vsub.f32 %v922, %v1184
    %1186 = vmatpush1.msra.mxu0 %v1185
    %1187 = vmatprep.subr.mxu0 0.0
    %v1188 = vand.u32 %v921, 4294901760
    %v1189 = vsub.f32 %v921, %v1188
    %1190 = vmatpush1.msra.mxu0 %v1189
    %1191 = vmatprep.subr.mxu0 0.0
    %v1192 = vand.u32 %v920, 4294901760
    %v1193 = vsub.f32 %v920, %v1192
    %1194 = vmatpush1.msra.mxu0 %v1193
    %1195 = vmatprep.subr.mxu0 0.0
    %1196 = vmatpush2.msra.mxu0 0.0
    %1197 = vmatprep.subr.mxu0 0.0
    %1198 = vmatpush2.msra.mxu0 0.0
    %1199 = vmatprep.subr.mxu0 0.0
    %1200 = vmatpush2.msra.mxu0 0.0
    %1201 = vmatprep.subr.mxu0 0.0
    %1202 = vmatpush2.msra.mxu0 0.0
    %1203 = vmatprep.subr.mxu0 0.0
    %1204 = vmatpush2.msra.mxu0 0.0
    %1205 = vmatprep.subr.mxu0 0.0
    %1206 = vmatpush2.msra.mxu0 0.0
    %1207 = vmatprep.subr.mxu0 0.0
    %1208 = vmatpush2.msra.mxu0 0.0
    %1209 = vmatprep.subr.mxu0 0.0
    %1210 = vmatpush2.msra.mxu0 0.0
    %1211 = vmatprep.subr.mxu0 0.0
    %1212 = vmatpush2.msra.mxu0 0.0
    %1213 = vmatprep.subr.mxu0 0.0
    %1214 = vmatpush2.msra.mxu0 0.0
    %1215 = vmatprep.subr.mxu0 0.0
    %1216 = vmatpush2.msra.mxu0 0.0
    %1217 = vmatprep.subr.mxu0 0.0
    %1218 = vmatpush2.msra.mxu0 0.0
    %1219 = vmatprep.subr.mxu0 0.0
    %1220 = vmatpush2.msra.mxu0 0.0
    %1221 = vmatprep.subr.mxu0 0.0
    %1222 = vmatpush2.msra.mxu0 0.0
    %1223 = vmatprep.subr.mxu0 0.0
    %1224 = vmatpush2.msra.mxu0 0.0
    %1225 = vmatprep.subr.mxu0 0.0
    %1226 = vmatpush2.msra.mxu0 0.0
    %1227 = vmatprep.mubr.f32.mxu0 0.0
    %v1228 = vand.u32 %v926, 4294901760
    %v1229 = vsub.f32 %v926, %v1228
    %1230 = vmatmul.mubr.f32.gmra.mxu0 %v1229
    %v1231 = vpop.f32.mrf.mxu0
    %v1232 = vadd.f32 %v1134, %v1231
    %v1233 = vpop.f32.mrf.mxu0
    %1234 = vmatprep.mubr.f32.mxu0 0.0
    %v1235 = vand.u32 %v929, 4294901760
    %v1236 = vsub.f32 %v929, %v1235
    %1237 = vmatmul.mubr.f32.gmra.mxu0 %v1236
    %v1238 = vpop.f32.mrf.mxu0
    %v1239 = vadd.f32 %v1140, %v1238
    %v1240 = vpop.f32.mrf.mxu0
    %1241 = vmatprep.mubr.f32.mxu0 0.0
    %v1242 = vand.u32 %v932, 4294901760
    %v1243 = vsub.f32 %v932, %v1242
    %1244 = vmatmul.mubr.f32.gmra.mxu0 %v1243
    %v1245 = vpop.f32.mrf.mxu0
    %v1246 = vadd.f32 %v1146, %v1245
    %v1247 = vpop.f32.mrf.mxu0
    %1248 = vmatprep.mubr.f32.mxu0 0.0
    %v1249 = vand.u32 %v935, 4294901760
    %v1250 = vsub.f32 %v935, %v1249
    %1251 = vmatmul.mubr.f32.gmra.mxu0 %v1250
    %v1252 = vpop.f32.mrf.mxu0
    %v1253 = vadd.f32 %v1152, %v1252
    %v1254 = vpop.f32.mrf.mxu0
    %1255 = vdwg.mxu0
    %1256 = vmatprep.subr.mxu0 0.0
    %1257 = vmatpush1.msra.mxu0 0.0
    %1258 = vmatprep.subr.mxu0 0.0
    %1259 = vmatpush1.msra.mxu0 0.0
    %1260 = vmatprep.subr.mxu0 0.0
    %1261 = vmatpush1.msra.mxu0 0.0
    %1262 = vmatprep.subr.mxu0 0.0
    %1263 = vmatpush1.msra.mxu0 0.0
    %1264 = vmatprep.subr.mxu0 0.0
    %1265 = vmatpush1.msra.mxu0 0.0
    %1266 = vmatprep.subr.mxu0 0.0
    %1267 = vmatpush1.msra.mxu0 0.0
    %1268 = vmatprep.subr.mxu0 0.0
    %1269 = vmatpush1.msra.mxu0 0.0
    %1270 = vmatprep.subr.mxu0 0.0
    %1271 = vmatpush1.msra.mxu0 0.0
    %1272 = vmatprep.subr.mxu0 0.0
    %1273 = vmatpush1.msra.mxu0 0.0
    %1274 = vmatprep.subr.mxu0 0.0
    %1275 = vmatpush1.msra.mxu0 0.0
    %1276 = vmatprep.subr.mxu0 0.0
    %1277 = vmatpush1.msra.mxu0 0.0
    %1278 = vmatprep.subr.mxu0 0.0
    %1279 = vmatpush1.msra.mxu0 0.0
    %1280 = vmatprep.subr.mxu0 0.0
    %v1281 = vand.u32 %v923, 4294901760
    %1282 = vmatpush1.msra.mxu0 %v1281
    %1283 = vmatprep.subr.mxu0 0.0
    %v1284 = vand.u32 %v922, 4294901760
    %1285 = vmatpush1.msra.mxu0 %v1284
    %1286 = vmatprep.subr.mxu0 0.0
    %v1287 = vand.u32 %v921, 4294901760
    %1288 = vmatpush1.msra.mxu0 %v1287
    %1289 = vmatprep.subr.mxu0 0.0
    %v1290 = vand.u32 %v920, 4294901760
    %1291 = vmatpush1.msra.mxu0 %v1290
    %1292 = vmatprep.subr.mxu0 0.0
    %1293 = vmatpush2.msra.mxu0 0.0
    %1294 = vmatprep.subr.mxu0 0.0
    %1295 = vmatpush2.msra.mxu0 0.0
    %1296 = vmatprep.subr.mxu0 0.0
    %1297 = vmatpush2.msra.mxu0 0.0
    %1298 = vmatprep.subr.mxu0 0.0
    %1299 = vmatpush2.msra.mxu0 0.0
    %1300 = vmatprep.subr.mxu0 0.0
    %1301 = vmatpush2.msra.mxu0 0.0
    %1302 = vmatprep.subr.mxu0 0.0
    %1303 = vmatpush2.msra.mxu0 0.0
    %1304 = vmatprep.subr.mxu0 0.0
    %1305 = vmatpush2.msra.mxu0 0.0
    %1306 = vmatprep.subr.mxu0 0.0
    %1307 = vmatpush2.msra.mxu0 0.0
    %1308 = vmatprep.subr.mxu0 0.0
    %1309 = vmatpush2.msra.mxu0 0.0
    %1310 = vmatprep.subr.mxu0 0.0
    %1311 = vmatpush2.msra.mxu0 0.0
    %1312 = vmatprep.subr.mxu0 0.0
    %1313 = vmatpush2.msra.mxu0 0.0
    %1314 = vmatprep.subr.mxu0 0.0
    %1315 = vmatpush2.msra.mxu0 0.0
    %1316 = vmatprep.subr.mxu0 0.0
    %1317 = vmatpush2.msra.mxu0 0.0
    %1318 = vmatprep.subr.mxu0 0.0
    %1319 = vmatpush2.msra.mxu0 0.0
    %1320 = vmatprep.subr.mxu0 0.0
    %1321 = vmatpush2.msra.mxu0 0.0
    %1322 = vmatprep.subr.mxu0 0.0
    %1323 = vmatpush2.msra.mxu0 0.0
    %1324 = vmatprep.mubr.f32.mxu0 0.0
    %v1325 = vand.u32 %v926, 4294901760
    %v1326 = vsub.f32 %v926, %v1325
    %v1327 = vand.u32 %v1326, 4294901760
    %1328 = vmatmul.mubr.f32.gmra.mxu0 %v1327
    %v1329 = vpop.f32.mrf.mxu0
    %v1330 = vadd.f32 %v1232, %v1329
    %v1331 = vpop.f32.mrf.mxu0
    %1332 = vmatprep.mubr.f32.mxu0 0.0
    %v1333 = vand.u32 %v929, 4294901760
    %v1334 = vsub.f32 %v929, %v1333
    %v1335 = vand.u32 %v1334, 4294901760
    %1336 = vmatmul.mubr.f32.gmra.mxu0 %v1335
    %v1337 = vpop.f32.mrf.mxu0
    %v1338 = vadd.f32 %v1239, %v1337
    %v1339 = vpop.f32.mrf.mxu0
    %1340 = vmatprep.mubr.f32.mxu0 0.0
    %v1341 = vand.u32 %v932, 4294901760
    %v1342 = vsub.f32 %v932, %v1341
    %v1343 = vand.u32 %v1342, 4294901760
    %1344 = vmatmul.mubr.f32.gmra.mxu0 %v1343
    %v1345 = vpop.f32.mrf.mxu0
    %v1346 = vadd.f32 %v1246, %v1345
    %v1347 = vpop.f32.mrf.mxu0
    %1348 = vmatprep.mubr.f32.mxu0 0.0
    %v1349 = vand.u32 %v935, 4294901760
    %v1350 = vsub.f32 %v935, %v1349
    %v1351 = vand.u32 %v1350, 4294901760
    %1352 = vmatmul.mubr.f32.gmra.mxu0 %v1351
    %v1353 = vpop.f32.mrf.mxu0
    %v1354 = vadd.f32 %v1253, %v1353
    %v1355 = vpop.f32.mrf.mxu0
    %1356 = vdwg.mxu0
    %1357 = vmatprep.subr.mxu0 0.0
    %1358 = vmatpush1.msra.mxu0 0.0
    %1359 = vmatprep.subr.mxu0 0.0
    %1360 = vmatpush1.msra.mxu0 0.0
    %1361 = vmatprep.subr.mxu0 0.0
    %1362 = vmatpush1.msra.mxu0 0.0
    %1363 = vmatprep.subr.mxu0 0.0
    %1364 = vmatpush1.msra.mxu0 0.0
    %1365 = vmatprep.subr.mxu0 0.0
    %1366 = vmatpush1.msra.mxu0 0.0
    %1367 = vmatprep.subr.mxu0 0.0
    %1368 = vmatpush1.msra.mxu0 0.0
    %1369 = vmatprep.subr.mxu0 0.0
    %1370 = vmatpush1.msra.mxu0 0.0
    %1371 = vmatprep.subr.mxu0 0.0
    %1372 = vmatpush1.msra.mxu0 0.0
    %1373 = vmatprep.subr.mxu0 0.0
    %1374 = vmatpush1.msra.mxu0 0.0
    %1375 = vmatprep.subr.mxu0 0.0
    %1376 = vmatpush1.msra.mxu0 0.0
    %1377 = vmatprep.subr.mxu0 0.0
    %1378 = vmatpush1.msra.mxu0 0.0
    %1379 = vmatprep.subr.mxu0 0.0
    %1380 = vmatpush1.msra.mxu0 0.0
    %1381 = vmatprep.subr.mxu0 0.0
    %v1382 = vand.u32 %v923, 4294901760
    %v1383 = vsub.f32 %v923, %v1382
    %v1384 = vand.u32 %v1383, 4294901760
    %1385 = vmatpush1.msra.mxu0 %v1384
    %1386 = vmatprep.subr.mxu0 0.0
    %v1387 = vand.u32 %v922, 4294901760
    %v1388 = vsub.f32 %v922, %v1387
    %v1389 = vand.u32 %v1388, 4294901760
    %1390 = vmatpush1.msra.mxu0 %v1389
    %1391 = vmatprep.subr.mxu0 0.0
    %v1392 = vand.u32 %v921, 4294901760
    %v1393 = vsub.f32 %v921, %v1392
    %v1394 = vand.u32 %v1393, 4294901760
    %1395 = vmatpush1.msra.mxu0 %v1394
    %1396 = vmatprep.subr.mxu0 0.0
    %v1397 = vand.u32 %v920, 4294901760
    %v1398 = vsub.f32 %v920, %v1397
    %v1399 = vand.u32 %v1398, 4294901760
    %1400 = vmatpush1.msra.mxu0 %v1399
    %1401 = vmatprep.subr.mxu0 0.0
    %1402 = vmatpush2.msra.mxu0 0.0
    %1403 = vmatprep.subr.mxu0 0.0
    %1404 = vmatpush2.msra.mxu0 0.0
    %1405 = vmatprep.subr.mxu0 0.0
    %1406 = vmatpush2.msra.mxu0 0.0
    %1407 = vmatprep.subr.mxu0 0.0
    %1408 = vmatpush2.msra.mxu0 0.0
    %1409 = vmatprep.subr.mxu0 0.0
    %1410 = vmatpush2.msra.mxu0 0.0
    %1411 = vmatprep.subr.mxu0 0.0
    %1412 = vmatpush2.msra.mxu0 0.0
    %1413 = vmatprep.subr.mxu0 0.0
    %1414 = vmatpush2.msra.mxu0 0.0
    %1415 = vmatprep.subr.mxu0 0.0
    %1416 = vmatpush2.msra.mxu0 0.0
    %1417 = vmatprep.subr.mxu0 0.0
    %1418 = vmatpush2.msra.mxu0 0.0
    %1419 = vmatprep.subr.mxu0 0.0
    %1420 = vmatpush2.msra.mxu0 0.0
    %1421 = vmatprep.subr.mxu0 0.0
    %1422 = vmatpush2.msra.mxu0 0.0
    %1423 = vmatprep.subr.mxu0 0.0
    %1424 = vmatpush2.msra.mxu0 0.0
    %1425 = vmatprep.subr.mxu0 0.0
    %1426 = vmatpush2.msra.mxu0 0.0
    %1427 = vmatprep.subr.mxu0 0.0
    %1428 = vmatpush2.msra.mxu0 0.0
    %1429 = vmatprep.subr.mxu0 0.0
    %1430 = vmatpush2.msra.mxu0 0.0
    %1431 = vmatprep.subr.mxu0 0.0
    %1432 = vmatpush2.msra.mxu0 0.0
    %1433 = vmatprep.mubr.f32.mxu0 0.0
    %v1434 = vand.u32 %v926, 4294901760
    %1435 = vmatmul.mubr.f32.gmra.mxu0 %v1434
    %v1436 = vpop.f32.mrf.mxu0
    %v1437 = vadd.f32 %v1330, %v1436
    %v1438 = vpop.f32.mrf.mxu0
    %1439 = vmatprep.mubr.f32.mxu0 0.0
    %v1440 = vand.u32 %v929, 4294901760
    %1441 = vmatmul.mubr.f32.gmra.mxu0 %v1440
    %v1442 = vpop.f32.mrf.mxu0
    %v1443 = vadd.f32 %v1338, %v1442
    %v1444 = vpop.f32.mrf.mxu0
    %1445 = vmatprep.mubr.f32.mxu0 0.0
    %v1446 = vand.u32 %v932, 4294901760
    %1447 = vmatmul.mubr.f32.gmra.mxu0 %v1446
    %v1448 = vpop.f32.mrf.mxu0
    %v1449 = vadd.f32 %v1346, %v1448
    %v1450 = vpop.f32.mrf.mxu0
    %1451 = vmatprep.mubr.f32.mxu0 0.0
    %v1452 = vand.u32 %v935, 4294901760
    %1453 = vmatmul.mubr.f32.gmra.mxu0 %v1452
    %v1454 = vpop.f32.mrf.mxu0
    %v1455 = vadd.f32 %v1354, %v1454
    %v1456 = vpop.f32.mrf.mxu0
    %1457 = vdwg.mxu0
    %1458 = vmatprep.subr.mxu0 0.0
    %1459 = vmatpush1.msra.mxu0 0.0
    %1460 = vmatprep.subr.mxu0 0.0
    %1461 = vmatpush1.msra.mxu0 0.0
    %1462 = vmatprep.subr.mxu0 0.0
    %1463 = vmatpush1.msra.mxu0 0.0
    %1464 = vmatprep.subr.mxu0 0.0
    %1465 = vmatpush1.msra.mxu0 0.0
    %1466 = vmatprep.subr.mxu0 0.0
    %1467 = vmatpush1.msra.mxu0 0.0
    %1468 = vmatprep.subr.mxu0 0.0
    %1469 = vmatpush1.msra.mxu0 0.0
    %1470 = vmatprep.subr.mxu0 0.0
    %1471 = vmatpush1.msra.mxu0 0.0
    %1472 = vmatprep.subr.mxu0 0.0
    %1473 = vmatpush1.msra.mxu0 0.0
    %1474 = vmatprep.subr.mxu0 0.0
    %1475 = vmatpush1.msra.mxu0 0.0
    %1476 = vmatprep.subr.mxu0 0.0
    %1477 = vmatpush1.msra.mxu0 0.0
    %1478 = vmatprep.subr.mxu0 0.0
    %1479 = vmatpush1.msra.mxu0 0.0
    %1480 = vmatprep.subr.mxu0 0.0
    %1481 = vmatpush1.msra.mxu0 0.0
    %1482 = vmatprep.subr.mxu0 0.0
    %v1483 = vand.u32 %v923, 4294901760
    %1484 = vmatpush1.msra.mxu0 %v1483
    %1485 = vmatprep.subr.mxu0 0.0
    %v1486 = vand.u32 %v922, 4294901760
    %1487 = vmatpush1.msra.mxu0 %v1486
    %1488 = vmatprep.subr.mxu0 0.0
    %v1489 = vand.u32 %v921, 4294901760
    %1490 = vmatpush1.msra.mxu0 %v1489
    %1491 = vmatprep.subr.mxu0 0.0
    %v1492 = vand.u32 %v920, 4294901760
    %1493 = vmatpush1.msra.mxu0 %v1492
    %1494 = vmatprep.subr.mxu0 0.0
    %1495 = vmatpush2.msra.mxu0 0.0
    %1496 = vmatprep.subr.mxu0 0.0
    %1497 = vmatpush2.msra.mxu0 0.0
    %1498 = vmatprep.subr.mxu0 0.0
    %1499 = vmatpush2.msra.mxu0 0.0
    %1500 = vmatprep.subr.mxu0 0.0
    %1501 = vmatpush2.msra.mxu0 0.0
    %1502 = vmatprep.subr.mxu0 0.0
    %1503 = vmatpush2.msra.mxu0 0.0
    %1504 = vmatprep.subr.mxu0 0.0
    %1505 = vmatpush2.msra.mxu0 0.0
    %1506 = vmatprep.subr.mxu0 0.0
    %1507 = vmatpush2.msra.mxu0 0.0
    %1508 = vmatprep.subr.mxu0 0.0
    %1509 = vmatpush2.msra.mxu0 0.0
    %1510 = vmatprep.subr.mxu0 0.0
    %1511 = vmatpush2.msra.mxu0 0.0
    %1512 = vmatprep.subr.mxu0 0.0
    %1513 = vmatpush2.msra.mxu0 0.0
    %1514 = vmatprep.subr.mxu0 0.0
    %1515 = vmatpush2.msra.mxu0 0.0
    %1516 = vmatprep.subr.mxu0 0.0
    %1517 = vmatpush2.msra.mxu0 0.0
    %1518 = vmatprep.subr.mxu0 0.0
    %1519 = vmatpush2.msra.mxu0 0.0
    %1520 = vmatprep.subr.mxu0 0.0
    %1521 = vmatpush2.msra.mxu0 0.0
    %1522 = vmatprep.subr.mxu0 0.0
    %1523 = vmatpush2.msra.mxu0 0.0
    %1524 = vmatprep.subr.mxu0 0.0
    %1525 = vmatpush2.msra.mxu0 0.0
    %1526 = vmatprep.mubr.f32.mxu0 0.0
    %v1527 = vand.u32 %v926, 4294901760
    %1528 = vmatmul.mubr.f32.gmra.mxu0 %v1527
    %v1529 = vpop.f32.mrf.mxu0
    %v1530 = vadd.f32 %v1437, %v1529
    %v1531 = vpop.f32.mrf.mxu0
    %1532 = vmatprep.mubr.f32.mxu0 0.0
    %v1533 = vand.u32 %v929, 4294901760
    %1534 = vmatmul.mubr.f32.gmra.mxu0 %v1533
    %v1535 = vpop.f32.mrf.mxu0
    %v1536 = vadd.f32 %v1443, %v1535
    %v1537 = vpop.f32.mrf.mxu0
    %1538 = vmatprep.mubr.f32.mxu0 0.0
    %v1539 = vand.u32 %v932, 4294901760
    %1540 = vmatmul.mubr.f32.gmra.mxu0 %v1539
    %v1541 = vpop.f32.mrf.mxu0
    %v1542 = vadd.f32 %v1449, %v1541
    %v1543 = vpop.f32.mrf.mxu0
    %1544 = vmatprep.mubr.f32.mxu0 0.0
    %v1545 = vand.u32 %v935, 4294901760
    %1546 = vmatmul.mubr.f32.gmra.mxu0 %v1545
    %v1547 = vpop.f32.mrf.mxu0
    %v1548 = vadd.f32 %v1455, %v1547
    %v1549 = vpop.f32.mrf.mxu0
    %1550 = vdwg.mxu0
    %v1551 = vlaneseq
    %v1552 = vshrl.u32 %v1551, 7
    %v1553 = vsub.s32 0, %v1552
    %v1554 = vrot.slane %v40, %v1553
    %v1555 = vadd.f32 %v1554, %v1530
    %v1556 = vadd.f32 %v1554, %v1536
    %v1557 = vadd.f32 %v1554, %v1542
    %v1558 = vadd.f32 %v1554, %v1548
    %v1559 = vand.u32 2147483647, %v1555
    %vm1560 = vcmp.le.f32.partialorder %v1559, 0.7853982
    %vm1561 = vcmp.lt.s32.totalorder %v1555, 0
    %v1562 = vand.u32 %v1555, 2139095040
    %v1563 = vshrl.u32 %v1562, 23
    %v1564 = vsub.s32 %v1563, 127
    %v1565 = vand.u32 2147483647, %v1555
    %v1566 = vand.u32 %v1565, 8388607
    %v1567 = vor.u32 %v1566, 8388608
    %v1568 = vsub.s32 0, %v1567
    %v1569 = vadd.s32 %v1564, 1
    %vm1570 = vcmp.gt.s32.totalorder %v1569, 0
    %v1571 = vsel %vm1570, %v1569, 0
    %v1572 = vshrl.u32 %v1571, 5
    %v1573 = vand.u32 %v1571, 31
    %v1574 = vsub.s32 32, %v1573
    %v1575 = vshrl.u32 683565275, %v1574
    %v1576 = vshll.u32 683565275, %v1573
    %v1577 = vshrl.u32 2475754826, %v1574
    %v1578 = vor.u32 %v1576, %v1577
    %v1579 = vshll.u32 2475754826, %v1573
    %v1580 = vshrl.u32 2131351028, %v1574
    %v1581 = vor.u32 %v1579, %v1580
    %v1582 = vshll.u32 2131351028, %v1573
    %v1583 = vshrl.u32 2102212464, %v1574
    %v1584 = vor.u32 %v1582, %v1583
    %v1585 = vshll.u32 2102212464, %v1573
    %v1586 = vshrl.u32 920167782, %v1574
    %v1587 = vor.u32 %v1585, %v1586
    %v1588 = vshll.u32 920167782, %v1573
    %v1589 = vshrl.u32 1326507024, %v1574
    %v1590 = vor.u32 %v1588, %v1589
    %vm1591 = vcmp.lt.s32.totalorder %v1572, 1
    %vm1592 = vcmp.lt.s32.totalorder %v1572, 2
    %vm1593 = vcmp.lt.s32.totalorder %v1572, 3
    %vm1594 = vcmp.lt.s32.totalorder %v1572, 4
    %v1595 = vsel %vm1591, %v1575, %v1578
    %v1596 = vsel %vm1594, %v1584, 2102212464
    %v1597 = vsel %vm1593, %v1581, %v1596
    %v1598 = vsel %vm1592, %v1595, %v1597
    %v1599 = vsel %vm1591, %v1578, %v1581
    %v1600 = vsel %vm1594, %v1587, 920167782
    %v1601 = vsel %vm1593, %v1584, %v1600
    %v1602 = vsel %vm1592, %v1599, %v1601
    %v1603 = vsel %vm1591, %v1581, %v1584
    %v1604 = vsel %vm1594, %v1590, 1326507024
    %v1605 = vsel %vm1593, %v1587, %v1604
    %v1606 = vsel %vm1592, %v1603, %v1605
    %v1607 = vshll.u32 %v1567, 8
    %v1608 = vmul.u32.u64.compose %v1607, %v1606
    %v1609 = vextract.low.u32 %v1608
    %v1610 = vextract.high.u32 %v1608
    %v1611 = vmul.u32.u64.compose %v1607, %v1602
    %v1612 = vextract.low.u32 %v1611
    %v1613 = vextract.high.u32 %v1611
    %v1614 = vmul.u32 %v1607, %v1598
    %v1615 = vadd.s32 %v1610, %v1612
    %vm1616 = vc.u32 %v1610, %v1612
    %v1617 = vadd.s32 %v1613, 1
    %v1618 = vsel %vm1616, %v1617, %v1613
    %v1619 = vadd.s32 %v1614, %v1618
    %v1620 = vadd.s32 %v1619, 536870912
    %v1621 = vshrl.u32 %v1620, 30
    %v1622 = vshll.u32 %v1621, 30
    %v1623 = vsub.s32 %v1619, %v1622
    %vm1624 = vcmp.lt.s32.totalorder %v1623, 0
    %v1625 = vsub.s32 0, %v1623
    %v1626 = vsel %vm1624, %v1625, %v1623
    %v1627 = vclz %v1626
    %v1628 = vsub.s32 %v1627, 2
    %vm1629 = vcmp.gt.s32.totalorder 0, %v1628
    %v1630 = vsel %vm1629, 0, %v1628
    %v1631 = vsub.s32 32, %v1630
    %v1632 = vshll.u32 %v1623, %v1630
    %v1633 = vshrl.u32 %v1615, %v1631
    %v1634 = vor.u32 %v1632, %v1633
    %v1635 = vsub.s32 4294967266, %v1630
    %v1636 = vadd.s32 %v1635, 127
    %v1637 = vshll.u32 %v1636, 23
    %v1638 = vor.u32 4788187, %v1637
    %v1639 = vand.u32 2147483647, %v1638
    %v1641 = vcvt.s32.f32 %v1634
    %v1642 = vmul.f32 %v1641, %v1639
    %v1643 = vxor.u32 %v1642, 2147483648
    %v1644 = vsel %vm1561, %v1643, %v1642
    %v1645 = vsub.s32 4, %v1621
    %v1646 = vsel %vm1561, %v1645, %v1621
    %v1647 = vsel %vm1560, %v1555, %v1644
    %v1648 = vsel %vm1560, 0, %v1646
    %v1649 = vcosq.f32.pop %v1647
    %v1650 = vsinq.f32.pop %v1647
    %vm1651 = vweird.f32 %v1555
    %v1652 = vand.u32 %v1648, 3
    %vm1653 = vcmp.lt.s32.totalorder %v1652, 2
    %vm1654 = vcmp.eq.s32.totalorder %v1652, 0
    %v1655 = vxor.u32 %v1650, 2147483648
    %v1656 = vsel %vm1654, %v1649, %v1655
    %vm1657 = vcmp.eq.s32.totalorder %v1652, 2
    %v1658 = vxor.u32 %v1649, 2147483648
    %v1659 = vsel %vm1657, %v1658, %v1650
    %v1660 = vsel %vm1653, %v1656, %v1659
    %v1661 = vsel %vm1651, nan, %v1660
    %v1662 = vand.u32 2147483647, %v1556
    %vm1663 = vcmp.le.f32.partialorder %v1662, 0.7853982
    %vm1664 = vcmp.lt.s32.totalorder %v1556, 0
    %v1665 = vand.u32 %v1556, 2139095040
    %v1666 = vshrl.u32 %v1665, 23
    %v1667 = vsub.s32 %v1666, 127
    %v1668 = vand.u32 2147483647, %v1556
    %v1669 = vand.u32 %v1668, 8388607
    %v1670 = vor.u32 %v1669, 8388608
    %v1671 = vsub.s32 0, %v1670
    %v1672 = vadd.s32 %v1667, 1
    %vm1673 = vcmp.gt.s32.totalorder %v1672, 0
    %v1674 = vsel %vm1673, %v1672, 0
    %v1675 = vshrl.u32 %v1674, 5
    %v1676 = vand.u32 %v1674, 31
    %v1677 = vsub.s32 32, %v1676
    %v1678 = vshrl.u32 683565275, %v1677
    %v1679 = vshll.u32 683565275, %v1676
    %v1680 = vshrl.u32 2475754826, %v1677
    %v1681 = vor.u32 %v1679, %v1680
    %v1682 = vshll.u32 2475754826, %v1676
    %v1683 = vshrl.u32 2131351028, %v1677
    %v1684 = vor.u32 %v1682, %v1683
    %v1685 = vshll.u32 2131351028, %v1676
    %v1686 = vshrl.u32 2102212464, %v1677
    %v1687 = vor.u32 %v1685, %v1686
    %v1688 = vshll.u32 2102212464, %v1676
    %v1689 = vshrl.u32 920167782, %v1677
    %v1690 = vor.u32 %v1688, %v1689
    %v1691 = vshll.u32 920167782, %v1676
    %v1692 = vshrl.u32 1326507024, %v1677
    %v1693 = vor.u32 %v1691, %v1692
    %vm1694 = vcmp.lt.s32.totalorder %v1675, 1
    %vm1695 = vcmp.lt.s32.totalorder %v1675, 2
    %vm1696 = vcmp.lt.s32.totalorder %v1675, 3
    %vm1697 = vcmp.lt.s32.totalorder %v1675, 4
    %v1698 = vsel %vm1694, %v1678, %v1681
    %v1699 = vsel %vm1697, %v1687, 2102212464
    %v1700 = vsel %vm1696, %v1684, %v1699
    %v1701 = vsel %vm1695, %v1698, %v1700
    %v1702 = vsel %vm1694, %v1681, %v1684
    %v1703 = vsel %vm1697, %v1690, 920167782
    %v1704 = vsel %vm1696, %v1687, %v1703
    %v1705 = vsel %vm1695, %v1702, %v1704
    %v1706 = vsel %vm1694, %v1684, %v1687
    %v1707 = vsel %vm1697, %v1693, 1326507024
    %v1708 = vsel %vm1696, %v1690, %v1707
    %v1709 = vsel %vm1695, %v1706, %v1708
    %v1710 = vshll.u32 %v1670, 8
    %v1711 = vmul.u32.u64.compose %v1710, %v1709
    %v1712 = vextract.low.u32 %v1711
    %v1713 = vextract.high.u32 %v1711
    %v1714 = vmul.u32.u64.compose %v1710, %v1705
    %v1715 = vextract.low.u32 %v1714
    %v1716 = vextract.high.u32 %v1714
    %v1717 = vmul.u32 %v1710, %v1701
    %v1718 = vadd.s32 %v1713, %v1715
    %vm1719 = vc.u32 %v1713, %v1715
    %v1720 = vadd.s32 %v1716, 1
    %v1721 = vsel %vm1719, %v1720, %v1716
    %v1722 = vadd.s32 %v1717, %v1721
    %v1723 = vadd.s32 %v1722, 536870912
    %v1724 = vshrl.u32 %v1723, 30
    %v1725 = vshll.u32 %v1724, 30
    %v1726 = vsub.s32 %v1722, %v1725
    %vm1727 = vcmp.lt.s32.totalorder %v1726, 0
    %v1728 = vsub.s32 0, %v1726
    %v1729 = vsel %vm1727, %v1728, %v1726
    %v1730 = vclz %v1729
    %v1731 = vsub.s32 %v1730, 2
    %vm1732 = vcmp.gt.s32.totalorder 0, %v1731
    %v1733 = vsel %vm1732, 0, %v1731
    %v1734 = vsub.s32 32, %v1733
    %v1735 = vshll.u32 %v1726, %v1733
    %v1736 = vshrl.u32 %v1718, %v1734
    %v1737 = vor.u32 %v1735, %v1736
    %v1738 = vsub.s32 4294967266, %v1733
    %v1739 = vadd.s32 %v1738, 127
    %v1740 = vshll.u32 %v1739, 23
    %v1741 = vor.u32 4788187, %v1740
    %v1742 = vand.u32 2147483647, %v1741
    %v1744 = vcvt.s32.f32 %v1737
    %v1745 = vmul.f32 %v1744, %v1742
    %v1746 = vxor.u32 %v1745, 2147483648
    %v1747 = vsel %vm1664, %v1746, %v1745
    %v1748 = vsub.s32 4, %v1724
    %v1749 = vsel %vm1664, %v1748, %v1724
    %v1750 = vsel %vm1663, %v1556, %v1747
    %v1751 = vsel %vm1663, 0, %v1749
    %v1752 = vcosq.f32.pop %v1750
    %v1753 = vsinq.f32.pop %v1750
    %vm1754 = vweird.f32 %v1556
    %v1755 = vand.u32 %v1751, 3
    %vm1756 = vcmp.lt.s32.totalorder %v1755, 2
    %vm1757 = vcmp.eq.s32.totalorder %v1755, 0
    %v1758 = vxor.u32 %v1753, 2147483648
    %v1759 = vsel %vm1757, %v1752, %v1758
    %vm1760 = vcmp.eq.s32.totalorder %v1755, 2
    %v1761 = vxor.u32 %v1752, 2147483648
    %v1762 = vsel %vm1760, %v1761, %v1753
    %v1763 = vsel %vm1756, %v1759, %v1762
    %v1764 = vsel %vm1754, nan, %v1763
    %v1765 = vand.u32 2147483647, %v1557
    %vm1766 = vcmp.le.f32.partialorder %v1765, 0.7853982
    %vm1767 = vcmp.lt.s32.totalorder %v1557, 0
    %v1768 = vand.u32 %v1557, 2139095040
    %v1769 = vshrl.u32 %v1768, 23
    %v1770 = vsub.s32 %v1769, 127
    %v1771 = vand.u32 2147483647, %v1557
    %v1772 = vand.u32 %v1771, 8388607
    %v1773 = vor.u32 %v1772, 8388608
    %v1774 = vsub.s32 0, %v1773
    %v1775 = vadd.s32 %v1770, 1
    %vm1776 = vcmp.gt.s32.totalorder %v1775, 0
    %v1777 = vsel %vm1776, %v1775, 0
    %v1778 = vshrl.u32 %v1777, 5
    %v1779 = vand.u32 %v1777, 31
    %v1780 = vsub.s32 32, %v1779
    %v1781 = vshrl.u32 683565275, %v1780
    %v1782 = vshll.u32 683565275, %v1779
    %v1783 = vshrl.u32 2475754826, %v1780
    %v1784 = vor.u32 %v1782, %v1783
    %v1785 = vshll.u32 2475754826, %v1779
    %v1786 = vshrl.u32 2131351028, %v1780
    %v1787 = vor.u32 %v1785, %v1786
    %v1788 = vshll.u32 2131351028, %v1779
    %v1789 = vshrl.u32 2102212464, %v1780
    %v1790 = vor.u32 %v1788, %v1789
    %v1791 = vshll.u32 2102212464, %v1779
    %v1792 = vshrl.u32 920167782, %v1780
    %v1793 = vor.u32 %v1791, %v1792
    %v1794 = vshll.u32 920167782, %v1779
    %v1795 = vshrl.u32 1326507024, %v1780
    %v1796 = vor.u32 %v1794, %v1795
    %vm1797 = vcmp.lt.s32.totalorder %v1778, 1
    %vm1798 = vcmp.lt.s32.totalorder %v1778, 2
    %vm1799 = vcmp.lt.s32.totalorder %v1778, 3
    %vm1800 = vcmp.lt.s32.totalorder %v1778, 4
    %v1801 = vsel %vm1797, %v1781, %v1784
    %v1802 = vsel %vm1800, %v1790, 2102212464
    %v1803 = vsel %vm1799, %v1787, %v1802
    %v1804 = vsel %vm1798, %v1801, %v1803
    %v1805 = vsel %vm1797, %v1784, %v1787
    %v1806 = vsel %vm1800, %v1793, 920167782
    %v1807 = vsel %vm1799, %v1790, %v1806
    %v1808 = vsel %vm1798, %v1805, %v1807
    %v1809 = vsel %vm1797, %v1787, %v1790
    %v1810 = vsel %vm1800, %v1796, 1326507024
    %v1811 = vsel %vm1799, %v1793, %v1810
    %v1812 = vsel %vm1798, %v1809, %v1811
    %v1813 = vshll.u32 %v1773, 8
    %v1814 = vmul.u32.u64.compose %v1813, %v1812
    %v1815 = vextract.low.u32 %v1814
    %v1816 = vextract.high.u32 %v1814
    %v1817 = vmul.u32.u64.compose %v1813, %v1808
    %v1818 = vextract.low.u32 %v1817
    %v1819 = vextract.high.u32 %v1817
    %v1820 = vmul.u32 %v1813, %v1804
    %v1821 = vadd.s32 %v1816, %v1818
    %vm1822 = vc.u32 %v1816, %v1818
    %v1823 = vadd.s32 %v1819, 1
    %v1824 = vsel %vm1822, %v1823, %v1819
    %v1825 = vadd.s32 %v1820, %v1824
    %v1826 = vadd.s32 %v1825, 536870912
    %v1827 = vshrl.u32 %v1826, 30
    %v1828 = vshll.u32 %v1827, 30
    %v1829 = vsub.s32 %v1825, %v1828
    %vm1830 = vcmp.lt.s32.totalorder %v1829, 0
    %v1831 = vsub.s32 0, %v1829
    %v1832 = vsel %vm1830, %v1831, %v1829
    %v1833 = vclz %v1832
    %v1834 = vsub.s32 %v1833, 2
    %vm1835 = vcmp.gt.s32.totalorder 0, %v1834
    %v1836 = vsel %vm1835, 0, %v1834
    %v1837 = vsub.s32 32, %v1836
    %v1838 = vshll.u32 %v1829, %v1836
    %v1839 = vshrl.u32 %v1821, %v1837
    %v1840 = vor.u32 %v1838, %v1839
    %v1841 = vsub.s32 4294967266, %v1836
    %v1842 = vadd.s32 %v1841, 127
    %v1843 = vshll.u32 %v1842, 23
    %v1844 = vor.u32 4788187, %v1843
    %v1845 = vand.u32 2147483647, %v1844
    %v1847 = vcvt.s32.f32 %v1840
    %v1848 = vmul.f32 %v1847, %v1845
    %v1849 = vxor.u32 %v1848, 2147483648
    %v1850 = vsel %vm1767, %v1849, %v1848
    %v1851 = vsub.s32 4, %v1827
    %v1852 = vsel %vm1767, %v1851, %v1827
    %v1853 = vsel %vm1766, %v1557, %v1850
    %v1854 = vsel %vm1766, 0, %v1852
    %v1855 = vcosq.f32.pop %v1853
    %v1856 = vsinq.f32.pop %v1853
    %vm1857 = vweird.f32 %v1557
    %v1858 = vand.u32 %v1854, 3
    %vm1859 = vcmp.lt.s32.totalorder %v1858, 2
    %vm1860 = vcmp.eq.s32.totalorder %v1858, 0
    %v1861 = vxor.u32 %v1856, 2147483648
    %v1862 = vsel %vm1860, %v1855, %v1861
    %vm1863 = vcmp.eq.s32.totalorder %v1858, 2
    %v1864 = vxor.u32 %v1855, 2147483648
    %v1865 = vsel %vm1863, %v1864, %v1856
    %v1866 = vsel %vm1859, %v1862, %v1865
    %v1867 = vsel %vm1857, nan, %v1866
    %v1868 = vand.u32 2147483647, %v1558
    %vm1869 = vcmp.le.f32.partialorder %v1868, 0.7853982
    %vm1870 = vcmp.lt.s32.totalorder %v1558, 0
    %v1871 = vand.u32 %v1558, 2139095040
    %v1872 = vshrl.u32 %v1871, 23
    %v1873 = vsub.s32 %v1872, 127
    %v1874 = vand.u32 2147483647, %v1558
    %v1875 = vand.u32 %v1874, 8388607
    %v1876 = vor.u32 %v1875, 8388608
    %v1877 = vsub.s32 0, %v1876
    %v1878 = vadd.s32 %v1873, 1
    %vm1879 = vcmp.gt.s32.totalorder %v1878, 0
    %v1880 = vsel %vm1879, %v1878, 0
    %v1881 = vshrl.u32 %v1880, 5
    %v1882 = vand.u32 %v1880, 31
    %v1883 = vsub.s32 32, %v1882
    %v1884 = vshrl.u32 683565275, %v1883
    %v1885 = vshll.u32 683565275, %v1882
    %v1886 = vshrl.u32 2475754826, %v1883
    %v1887 = vor.u32 %v1885, %v1886
    %v1888 = vshll.u32 2475754826, %v1882
    %v1889 = vshrl.u32 2131351028, %v1883
    %v1890 = vor.u32 %v1888, %v1889
    %v1891 = vshll.u32 2131351028, %v1882
    %v1892 = vshrl.u32 2102212464, %v1883
    %v1893 = vor.u32 %v1891, %v1892
    %v1894 = vshll.u32 2102212464, %v1882
    %v1895 = vshrl.u32 920167782, %v1883
    %v1896 = vor.u32 %v1894, %v1895
    %v1897 = vshll.u32 920167782, %v1882
    %v1898 = vshrl.u32 1326507024, %v1883
    %v1899 = vor.u32 %v1897, %v1898
    %vm1900 = vcmp.lt.s32.totalorder %v1881, 1
    %vm1901 = vcmp.lt.s32.totalorder %v1881, 2
    %vm1902 = vcmp.lt.s32.totalorder %v1881, 3
    %vm1903 = vcmp.lt.s32.totalorder %v1881, 4
    %v1904 = vsel %vm1900, %v1884, %v1887
    %v1905 = vsel %vm1903, %v1893, 2102212464
    %v1906 = vsel %vm1902, %v1890, %v1905
    %v1907 = vsel %vm1901, %v1904, %v1906
    %v1908 = vsel %vm1900, %v1887, %v1890
    %v1909 = vsel %vm1903, %v1896, 920167782
    %v1910 = vsel %vm1902, %v1893, %v1909
    %v1911 = vsel %vm1901, %v1908, %v1910
    %v1912 = vsel %vm1900, %v1890, %v1893
    %v1913 = vsel %vm1903, %v1899, 1326507024
    %v1914 = vsel %vm1902, %v1896, %v1913
    %v1915 = vsel %vm1901, %v1912, %v1914
    %v1916 = vshll.u32 %v1876, 8
    %v1917 = vmul.u32.u64.compose %v1916, %v1915
    %v1918 = vextract.low.u32 %v1917
    %v1919 = vextract.high.u32 %v1917
    %v1920 = vmul.u32.u64.compose %v1916, %v1911
    %v1921 = vextract.low.u32 %v1920
    %v1922 = vextract.high.u32 %v1920
    %v1923 = vmul.u32 %v1916, %v1907
    %v1924 = vadd.s32 %v1919, %v1921
    %vm1925 = vc.u32 %v1919, %v1921
    %v1926 = vadd.s32 %v1922, 1
    %v1927 = vsel %vm1925, %v1926, %v1922
    %v1928 = vadd.s32 %v1923, %v1927
    %v1929 = vadd.s32 %v1928, 536870912
    %v1930 = vshrl.u32 %v1929, 30
    %v1931 = vshll.u32 %v1930, 30
    %v1932 = vsub.s32 %v1928, %v1931
    %vm1933 = vcmp.lt.s32.totalorder %v1932, 0
    %v1934 = vsub.s32 0, %v1932
    %v1935 = vsel %vm1933, %v1934, %v1932
    %v1936 = vclz %v1935
    %v1937 = vsub.s32 %v1936, 2
    %vm1938 = vcmp.gt.s32.totalorder 0, %v1937
    %v1939 = vsel %vm1938, 0, %v1937
    %v1940 = vsub.s32 32, %v1939
    %v1941 = vshll.u32 %v1932, %v1939
    %v1942 = vshrl.u32 %v1924, %v1940
    %v1943 = vor.u32 %v1941, %v1942
    %v1944 = vsub.s32 4294967266, %v1939
    %v1945 = vadd.s32 %v1944, 127
    %v1946 = vshll.u32 %v1945, 23
    %v1947 = vor.u32 4788187, %v1946
    %v1948 = vand.u32 2147483647, %v1947
    %v1950 = vcvt.s32.f32 %v1943
    %v1951 = vmul.f32 %v1950, %v1948
    %v1952 = vxor.u32 %v1951, 2147483648
    %v1953 = vsel %vm1870, %v1952, %v1951
    %v1954 = vsub.s32 4, %v1930
    %v1955 = vsel %vm1870, %v1954, %v1930
    %v1956 = vsel %vm1869, %v1558, %v1953
    %v1957 = vsel %vm1869, 0, %v1955
    %v1958 = vcosq.f32.pop %v1956
    %v1959 = vsinq.f32.pop %v1956
    %vm1960 = vweird.f32 %v1558
    %v1961 = vand.u32 %v1957, 3
    %vm1962 = vcmp.lt.s32.totalorder %v1961, 2
    %vm1963 = vcmp.eq.s32.totalorder %v1961, 0
    %v1964 = vxor.u32 %v1959, 2147483648
    %v1965 = vsel %vm1963, %v1958, %v1964
    %vm1966 = vcmp.eq.s32.totalorder %v1961, 2
    %v1967 = vxor.u32 %v1958, 2147483648
    %v1968 = vsel %vm1966, %v1967, %v1959
    %v1969 = vsel %vm1962, %v1965, %v1968
    %v1970 = vsel %vm1960, nan, %v1969
    %v1971 = vmul.f32 %v896, %v1661
    %v1972 = vmul.f32 %v897, %v1764
    %v1973 = vmul.f32 %v898, %v1867
    %v1974 = vmul.f32 %v899, %v1970
    %v1975 = vmul.f32 %v1971, 0.03
    %v1976 = vmul.f32 %v1972, 0.03
    %v1977 = vmul.f32 %v1973, 0.03
    %v1978 = vmul.f32 %v1974, 0.03
    %v1979 = vand.u32 2147483647, %v1555
    %vm1980 = vcmp.le.f32.partialorder %v1979, 0.7853982
    %vm1981 = vcmp.lt.s32.totalorder %v1555, 0
    %v1982 = vand.u32 %v1555, 2139095040
    %v1983 = vshrl.u32 %v1982, 23
    %v1984 = vsub.s32 %v1983, 127
    %v1985 = vand.u32 2147483647, %v1555
    %v1986 = vand.u32 %v1985, 8388607
    %v1987 = vor.u32 %v1986, 8388608
    %v1988 = vsub.s32 0, %v1987
    %v1989 = vadd.s32 %v1984, 1
    %vm1990 = vcmp.gt.s32.totalorder %v1989, 0
    %v1991 = vsel %vm1990, %v1989, 0
    %v1992 = vshrl.u32 %v1991, 5
    %v1993 = vand.u32 %v1991, 31
    %v1994 = vsub.s32 32, %v1993
    %v1995 = vshrl.u32 683565275, %v1994
    %v1996 = vshll.u32 683565275, %v1993
    %v1997 = vshrl.u32 2475754826, %v1994
    %v1998 = vor.u32 %v1996, %v1997
    %v1999 = vshll.u32 2475754826, %v1993
    %v2000 = vshrl.u32 2131351028, %v1994
    %v2001 = vor.u32 %v1999, %v2000
    %v2002 = vshll.u32 2131351028, %v1993
    %v2003 = vshrl.u32 2102212464, %v1994
    %v2004 = vor.u32 %v2002, %v2003
    %v2005 = vshll.u32 2102212464, %v1993
    %v2006 = vshrl.u32 920167782, %v1994
    %v2007 = vor.u32 %v2005, %v2006
    %v2008 = vshll.u32 920167782, %v1993
    %v2009 = vshrl.u32 1326507024, %v1994
    %v2010 = vor.u32 %v2008, %v2009
    %vm2011 = vcmp.lt.s32.totalorder %v1992, 1
    %vm2012 = vcmp.lt.s32.totalorder %v1992, 2
    %vm2013 = vcmp.lt.s32.totalorder %v1992, 3
    %vm2014 = vcmp.lt.s32.totalorder %v1992, 4
    %v2015 = vsel %vm2011, %v1995, %v1998
    %v2016 = vsel %vm2014, %v2004, 2102212464
    %v2017 = vsel %vm2013, %v2001, %v2016
    %v2018 = vsel %vm2012, %v2015, %v2017
    %v2019 = vsel %vm2011, %v1998, %v2001
    %v2020 = vsel %vm2014, %v2007, 920167782
    %v2021 = vsel %vm2013, %v2004, %v2020
    %v2022 = vsel %vm2012, %v2019, %v2021
    %v2023 = vsel %vm2011, %v2001, %v2004
    %v2024 = vsel %vm2014, %v2010, 1326507024
    %v2025 = vsel %vm2013, %v2007, %v2024
    %v2026 = vsel %vm2012, %v2023, %v2025
    %v2027 = vshll.u32 %v1987, 8
    %v2028 = vmul.u32.u64.compose %v2027, %v2026
    %v2029 = vextract.low.u32 %v2028
    %v2030 = vextract.high.u32 %v2028
    %v2031 = vmul.u32.u64.compose %v2027, %v2022
    %v2032 = vextract.low.u32 %v2031
    %v2033 = vextract.high.u32 %v2031
    %v2034 = vmul.u32 %v2027, %v2018
    %v2035 = vadd.s32 %v2030, %v2032
    %vm2036 = vc.u32 %v2030, %v2032
    %v2037 = vadd.s32 %v2033, 1
    %v2038 = vsel %vm2036, %v2037, %v2033
    %v2039 = vadd.s32 %v2034, %v2038
    %v2040 = vadd.s32 %v2039, 536870912
    %v2041 = vshrl.u32 %v2040, 30
    %v2042 = vshll.u32 %v2041, 30
    %v2043 = vsub.s32 %v2039, %v2042
    %vm2044 = vcmp.lt.s32.totalorder %v2043, 0
    %v2045 = vsub.s32 0, %v2043
    %v2046 = vsel %vm2044, %v2045, %v2043
    %v2047 = vclz %v2046
    %v2048 = vsub.s32 %v2047, 2
    %vm2049 = vcmp.gt.s32.totalorder 0, %v2048
    %v2050 = vsel %vm2049, 0, %v2048
    %v2051 = vsub.s32 32, %v2050
    %v2052 = vshll.u32 %v2043, %v2050
    %v2053 = vshrl.u32 %v2035, %v2051
    %v2054 = vor.u32 %v2052, %v2053
    %v2055 = vsub.s32 4294967266, %v2050
    %v2056 = vadd.s32 %v2055, 127
    %v2057 = vshll.u32 %v2056, 23
    %v2058 = vor.u32 4788187, %v2057
    %v2059 = vand.u32 2147483647, %v2058
    %v2061 = vcvt.s32.f32 %v2054
    %v2062 = vmul.f32 %v2061, %v2059
    %v2063 = vxor.u32 %v2062, 2147483648
    %v2064 = vsel %vm1981, %v2063, %v2062
    %v2065 = vsub.s32 4, %v2041
    %v2066 = vsel %vm1981, %v2065, %v2041
    %v2067 = vsel %vm1980, %v1555, %v2064
    %v2068 = vsel %vm1980, 0, %v2066
    %v2069 = vcosq.f32.pop %v2067
    %v2070 = vsinq.f32.pop %v2067
    %vm2071 = vweird.f32 %v1555
    %v2072 = vadd.s32 %v2068, 3
    %v2073 = vand.u32 %v2072, 3
    %vm2074 = vcmp.lt.s32.totalorder %v2073, 2
    %vm2075 = vcmp.eq.s32.totalorder %v2073, 0
    %v2076 = vxor.u32 %v2070, 2147483648
    %v2077 = vsel %vm2075, %v2069, %v2076
    %vm2078 = vcmp.eq.s32.totalorder %v2073, 2
    %v2079 = vxor.u32 %v2069, 2147483648
    %v2080 = vsel %vm2078, %v2079, %v2070
    %v2081 = vsel %vm2074, %v2077, %v2080
    %v2082 = vsel %vm2071, nan, %v2081
    %v2083 = vand.u32 2147483647, %v1556
    %vm2084 = vcmp.le.f32.partialorder %v2083, 0.7853982
    %vm2085 = vcmp.lt.s32.totalorder %v1556, 0
    %v2086 = vand.u32 %v1556, 2139095040
    %v2087 = vshrl.u32 %v2086, 23
    %v2088 = vsub.s32 %v2087, 127
    %v2089 = vand.u32 2147483647, %v1556
    %v2090 = vand.u32 %v2089, 8388607
    %v2091 = vor.u32 %v2090, 8388608
    %v2092 = vsub.s32 0, %v2091
    %v2093 = vadd.s32 %v2088, 1
    %vm2094 = vcmp.gt.s32.totalorder %v2093, 0
    %v2095 = vsel %vm2094, %v2093, 0
    %v2096 = vshrl.u32 %v2095, 5
    %v2097 = vand.u32 %v2095, 31
    %v2098 = vsub.s32 32, %v2097
    %v2099 = vshrl.u32 683565275, %v2098
    %v2100 = vshll.u32 683565275, %v2097
    %v2101 = vshrl.u32 2475754826, %v2098
    %v2102 = vor.u32 %v2100, %v2101
    %v2103 = vshll.u32 2475754826, %v2097
    %v2104 = vshrl.u32 2131351028, %v2098
    %v2105 = vor.u32 %v2103, %v2104
    %v2106 = vshll.u32 2131351028, %v2097
    %v2107 = vshrl.u32 2102212464, %v2098
    %v2108 = vor.u32 %v2106, %v2107
    %v2109 = vshll.u32 2102212464, %v2097
    %v2110 = vshrl.u32 920167782, %v2098
    %v2111 = vor.u32 %v2109, %v2110
    %v2112 = vshll.u32 920167782, %v2097
    %v2113 = vshrl.u32 1326507024, %v2098
    %v2114 = vor.u32 %v2112, %v2113
    %vm2115 = vcmp.lt.s32.totalorder %v2096, 1
    %vm2116 = vcmp.lt.s32.totalorder %v2096, 2
    %vm2117 = vcmp.lt.s32.totalorder %v2096, 3
    %vm2118 = vcmp.lt.s32.totalorder %v2096, 4
    %v2119 = vsel %vm2115, %v2099, %v2102
    %v2120 = vsel %vm2118, %v2108, 2102212464
    %v2121 = vsel %vm2117, %v2105, %v2120
    %v2122 = vsel %vm2116, %v2119, %v2121
    %v2123 = vsel %vm2115, %v2102, %v2105
    %v2124 = vsel %vm2118, %v2111, 920167782
    %v2125 = vsel %vm2117, %v2108, %v2124
    %v2126 = vsel %vm2116, %v2123, %v2125
    %v2127 = vsel %vm2115, %v2105, %v2108
    %v2128 = vsel %vm2118, %v2114, 1326507024
    %v2129 = vsel %vm2117, %v2111, %v2128
    %v2130 = vsel %vm2116, %v2127, %v2129
    %v2131 = vshll.u32 %v2091, 8
    %v2132 = vmul.u32.u64.compose %v2131, %v2130
    %v2133 = vextract.low.u32 %v2132
    %v2134 = vextract.high.u32 %v2132
    %v2135 = vmul.u32.u64.compose %v2131, %v2126
    %v2136 = vextract.low.u32 %v2135
    %v2137 = vextract.high.u32 %v2135
    %v2138 = vmul.u32 %v2131, %v2122
    %v2139 = vadd.s32 %v2134, %v2136
    %vm2140 = vc.u32 %v2134, %v2136
    %v2141 = vadd.s32 %v2137, 1
    %v2142 = vsel %vm2140, %v2141, %v2137
    %v2143 = vadd.s32 %v2138, %v2142
    %v2144 = vadd.s32 %v2143, 536870912
    %v2145 = vshrl.u32 %v2144, 30
    %v2146 = vshll.u32 %v2145, 30
    %v2147 = vsub.s32 %v2143, %v2146
    %vm2148 = vcmp.lt.s32.totalorder %v2147, 0
    %v2149 = vsub.s32 0, %v2147
    %v2150 = vsel %vm2148, %v2149, %v2147
    %v2151 = vclz %v2150
    %v2152 = vsub.s32 %v2151, 2
    %vm2153 = vcmp.gt.s32.totalorder 0, %v2152
    %v2154 = vsel %vm2153, 0, %v2152
    %v2155 = vsub.s32 32, %v2154
    %v2156 = vshll.u32 %v2147, %v2154
    %v2157 = vshrl.u32 %v2139, %v2155
    %v2158 = vor.u32 %v2156, %v2157
    %v2159 = vsub.s32 4294967266, %v2154
    %v2160 = vadd.s32 %v2159, 127
    %v2161 = vshll.u32 %v2160, 23
    %v2162 = vor.u32 4788187, %v2161
    %v2163 = vand.u32 2147483647, %v2162
    %v2165 = vcvt.s32.f32 %v2158
    %v2166 = vmul.f32 %v2165, %v2163
    %v2167 = vxor.u32 %v2166, 2147483648
    %v2168 = vsel %vm2085, %v2167, %v2166
    %v2169 = vsub.s32 4, %v2145
    %v2170 = vsel %vm2085, %v2169, %v2145
    %v2171 = vsel %vm2084, %v1556, %v2168
    %v2172 = vsel %vm2084, 0, %v2170
    %v2173 = vcosq.f32.pop %v2171
    %v2174 = vsinq.f32.pop %v2171
    %vm2175 = vweird.f32 %v1556
    %v2176 = vadd.s32 %v2172, 3
    %v2177 = vand.u32 %v2176, 3
    %vm2178 = vcmp.lt.s32.totalorder %v2177, 2
    %vm2179 = vcmp.eq.s32.totalorder %v2177, 0
    %v2180 = vxor.u32 %v2174, 2147483648
    %v2181 = vsel %vm2179, %v2173, %v2180
    %vm2182 = vcmp.eq.s32.totalorder %v2177, 2
    %v2183 = vxor.u32 %v2173, 2147483648
    %v2184 = vsel %vm2182, %v2183, %v2174
    %v2185 = vsel %vm2178, %v2181, %v2184
    %v2186 = vsel %vm2175, nan, %v2185
    %v2187 = vand.u32 2147483647, %v1557
    %vm2188 = vcmp.le.f32.partialorder %v2187, 0.7853982
    %vm2189 = vcmp.lt.s32.totalorder %v1557, 0
    %v2190 = vand.u32 %v1557, 2139095040
    %v2191 = vshrl.u32 %v2190, 23
    %v2192 = vsub.s32 %v2191, 127
    %v2193 = vand.u32 2147483647, %v1557
    %v2194 = vand.u32 %v2193, 8388607
    %v2195 = vor.u32 %v2194, 8388608
    %v2196 = vsub.s32 0, %v2195
    %v2197 = vadd.s32 %v2192, 1
    %vm2198 = vcmp.gt.s32.totalorder %v2197, 0
    %v2199 = vsel %vm2198, %v2197, 0
    %v2200 = vshrl.u32 %v2199, 5
    %v2201 = vand.u32 %v2199, 31
    %v2202 = vsub.s32 32, %v2201
    %v2203 = vshrl.u32 683565275, %v2202
    %v2204 = vshll.u32 683565275, %v2201
    %v2205 = vshrl.u32 2475754826, %v2202
    %v2206 = vor.u32 %v2204, %v2205
    %v2207 = vshll.u32 2475754826, %v2201
    %v2208 = vshrl.u32 2131351028, %v2202
    %v2209 = vor.u32 %v2207, %v2208
    %v2210 = vshll.u32 2131351028, %v2201
    %v2211 = vshrl.u32 2102212464, %v2202
    %v2212 = vor.u32 %v2210, %v2211
    %v2213 = vshll.u32 2102212464, %v2201
    %v2214 = vshrl.u32 920167782, %v2202
    %v2215 = vor.u32 %v2213, %v2214
    %v2216 = vshll.u32 920167782, %v2201
    %v2217 = vshrl.u32 1326507024, %v2202
    %v2218 = vor.u32 %v2216, %v2217
    %vm2219 = vcmp.lt.s32.totalorder %v2200, 1
    %vm2220 = vcmp.lt.s32.totalorder %v2200, 2
    %vm2221 = vcmp.lt.s32.totalorder %v2200, 3
    %vm2222 = vcmp.lt.s32.totalorder %v2200, 4
    %v2223 = vsel %vm2219, %v2203, %v2206
    %v2224 = vsel %vm2222, %v2212, 2102212464
    %v2225 = vsel %vm2221, %v2209, %v2224
    %v2226 = vsel %vm2220, %v2223, %v2225
    %v2227 = vsel %vm2219, %v2206, %v2209
    %v2228 = vsel %vm2222, %v2215, 920167782
    %v2229 = vsel %vm2221, %v2212, %v2228
    %v2230 = vsel %vm2220, %v2227, %v2229
    %v2231 = vsel %vm2219, %v2209, %v2212
    %v2232 = vsel %vm2222, %v2218, 1326507024
    %v2233 = vsel %vm2221, %v2215, %v2232
    %v2234 = vsel %vm2220, %v2231, %v2233
    %v2235 = vshll.u32 %v2195, 8
    %v2236 = vmul.u32.u64.compose %v2235, %v2234
    %v2237 = vextract.low.u32 %v2236
    %v2238 = vextract.high.u32 %v2236
    %v2239 = vmul.u32.u64.compose %v2235, %v2230
    %v2240 = vextract.low.u32 %v2239
    %v2241 = vextract.high.u32 %v2239
    %v2242 = vmul.u32 %v2235, %v2226
    %v2243 = vadd.s32 %v2238, %v2240
    %vm2244 = vc.u32 %v2238, %v2240
    %v2245 = vadd.s32 %v2241, 1
    %v2246 = vsel %vm2244, %v2245, %v2241
    %v2247 = vadd.s32 %v2242, %v2246
    %v2248 = vadd.s32 %v2247, 536870912
    %v2249 = vshrl.u32 %v2248, 30
    %v2250 = vshll.u32 %v2249, 30
    %v2251 = vsub.s32 %v2247, %v2250
    %vm2252 = vcmp.lt.s32.totalorder %v2251, 0
    %v2253 = vsub.s32 0, %v2251
    %v2254 = vsel %vm2252, %v2253, %v2251
    %v2255 = vclz %v2254
    %v2256 = vsub.s32 %v2255, 2
    %vm2257 = vcmp.gt.s32.totalorder 0, %v2256
    %v2258 = vsel %vm2257, 0, %v2256
    %v2259 = vsub.s32 32, %v2258
    %v2260 = vshll.u32 %v2251, %v2258
    %v2261 = vshrl.u32 %v2243, %v2259
    %v2262 = vor.u32 %v2260, %v2261
    %v2263 = vsub.s32 4294967266, %v2258
    %v2264 = vadd.s32 %v2263, 127
    %v2265 = vshll.u32 %v2264, 23
    %v2266 = vor.u32 4788187, %v2265
    %v2267 = vand.u32 2147483647, %v2266
    %v2269 = vcvt.s32.f32 %v2262
    %v2270 = vmul.f32 %v2269, %v2267
    %v2271 = vxor.u32 %v2270, 2147483648
    %v2272 = vsel %vm2189, %v2271, %v2270
    %v2273 = vsub.s32 4, %v2249
    %v2274 = vsel %vm2189, %v2273, %v2249
    %v2275 = vsel %vm2188, %v1557, %v2272
    %v2276 = vsel %vm2188, 0, %v2274
    %v2277 = vcosq.f32.pop %v2275
    %v2278 = vsinq.f32.pop %v2275
    %vm2279 = vweird.f32 %v1557
    %v2280 = vadd.s32 %v2276, 3
    %v2281 = vand.u32 %v2280, 3
    %vm2282 = vcmp.lt.s32.totalorder %v2281, 2
    %vm2283 = vcmp.eq.s32.totalorder %v2281, 0
    %v2284 = vxor.u32 %v2278, 2147483648
    %v2285 = vsel %vm2283, %v2277, %v2284
    %vm2286 = vcmp.eq.s32.totalorder %v2281, 2
    %v2287 = vxor.u32 %v2277, 2147483648
    %v2288 = vsel %vm2286, %v2287, %v2278
    %v2289 = vsel %vm2282, %v2285, %v2288
    %v2290 = vsel %vm2279, nan, %v2289
    %v2291 = vand.u32 2147483647, %v1558
    %vm2292 = vcmp.le.f32.partialorder %v2291, 0.7853982
    %vm2293 = vcmp.lt.s32.totalorder %v1558, 0
    %v2294 = vand.u32 %v1558, 2139095040
    %v2295 = vshrl.u32 %v2294, 23
    %v2296 = vsub.s32 %v2295, 127
    %v2297 = vand.u32 2147483647, %v1558
    %v2298 = vand.u32 %v2297, 8388607
    %v2299 = vor.u32 %v2298, 8388608
    %v2300 = vsub.s32 0, %v2299
    %v2301 = vadd.s32 %v2296, 1
    %vm2302 = vcmp.gt.s32.totalorder %v2301, 0
    %v2303 = vsel %vm2302, %v2301, 0
    %v2304 = vshrl.u32 %v2303, 5
    %v2305 = vand.u32 %v2303, 31
    %v2306 = vsub.s32 32, %v2305
    %v2307 = vshrl.u32 683565275, %v2306
    %v2308 = vshll.u32 683565275, %v2305
    %v2309 = vshrl.u32 2475754826, %v2306
    %v2310 = vor.u32 %v2308, %v2309
    %v2311 = vshll.u32 2475754826, %v2305
    %v2312 = vshrl.u32 2131351028, %v2306
    %v2313 = vor.u32 %v2311, %v2312
    %v2314 = vshll.u32 2131351028, %v2305
    %v2315 = vshrl.u32 2102212464, %v2306
    %v2316 = vor.u32 %v2314, %v2315
    %v2317 = vshll.u32 2102212464, %v2305
    %v2318 = vshrl.u32 920167782, %v2306
    %v2319 = vor.u32 %v2317, %v2318
    %v2320 = vshll.u32 920167782, %v2305
    %v2321 = vshrl.u32 1326507024, %v2306
    %v2322 = vor.u32 %v2320, %v2321
    %vm2323 = vcmp.lt.s32.totalorder %v2304, 1
    %vm2324 = vcmp.lt.s32.totalorder %v2304, 2
    %vm2325 = vcmp.lt.s32.totalorder %v2304, 3
    %vm2326 = vcmp.lt.s32.totalorder %v2304, 4
    %v2327 = vsel %vm2323, %v2307, %v2310
    %v2328 = vsel %vm2326, %v2316, 2102212464
    %v2329 = vsel %vm2325, %v2313, %v2328
    %v2330 = vsel %vm2324, %v2327, %v2329
    %v2331 = vsel %vm2323, %v2310, %v2313
    %v2332 = vsel %vm2326, %v2319, 920167782
    %v2333 = vsel %vm2325, %v2316, %v2332
    %v2334 = vsel %vm2324, %v2331, %v2333
    %v2335 = vsel %vm2323, %v2313, %v2316
    %v2336 = vsel %vm2326, %v2322, 1326507024
    %v2337 = vsel %vm2325, %v2319, %v2336
    %v2338 = vsel %vm2324, %v2335, %v2337
    %v2339 = vshll.u32 %v2299, 8
    %v2340 = vmul.u32.u64.compose %v2339, %v2338
    %v2341 = vextract.low.u32 %v2340
    %v2342 = vextract.high.u32 %v2340
    %v2343 = vmul.u32.u64.compose %v2339, %v2334
    %v2344 = vextract.low.u32 %v2343
    %v2345 = vextract.high.u32 %v2343
    %v2346 = vmul.u32 %v2339, %v2330
    %v2347 = vadd.s32 %v2342, %v2344
    %vm2348 = vc.u32 %v2342, %v2344
    %v2349 = vadd.s32 %v2345, 1
    %v2350 = vsel %vm2348, %v2349, %v2345
    %v2351 = vadd.s32 %v2346, %v2350
    %v2352 = vadd.s32 %v2351, 536870912
    %v2353 = vshrl.u32 %v2352, 30
    %v2354 = vshll.u32 %v2353, 30
    %v2355 = vsub.s32 %v2351, %v2354
    %vm2356 = vcmp.lt.s32.totalorder %v2355, 0
    %v2357 = vsub.s32 0, %v2355
    %v2358 = vsel %vm2356, %v2357, %v2355
    %v2359 = vclz %v2358
    %v2360 = vsub.s32 %v2359, 2
    %vm2361 = vcmp.gt.s32.totalorder 0, %v2360
    %v2362 = vsel %vm2361, 0, %v2360
    %v2363 = vsub.s32 32, %v2362
    %v2364 = vshll.u32 %v2355, %v2362
    %v2365 = vshrl.u32 %v2347, %v2363
    %v2366 = vor.u32 %v2364, %v2365
    %v2367 = vsub.s32 4294967266, %v2362
    %v2368 = vadd.s32 %v2367, 127
    %v2369 = vshll.u32 %v2368, 23
    %v2370 = vor.u32 4788187, %v2369
    %v2371 = vand.u32 2147483647, %v2370
    %v2373 = vcvt.s32.f32 %v2366
    %v2374 = vmul.f32 %v2373, %v2371
    %v2375 = vxor.u32 %v2374, 2147483648
    %v2376 = vsel %vm2293, %v2375, %v2374
    %v2377 = vsub.s32 4, %v2353
    %v2378 = vsel %vm2293, %v2377, %v2353
    %v2379 = vsel %vm2292, %v1558, %v2376
    %v2380 = vsel %vm2292, 0, %v2378
    %v2381 = vcosq.f32.pop %v2379
    %v2382 = vsinq.f32.pop %v2379
    %vm2383 = vweird.f32 %v1558
    %v2384 = vadd.s32 %v2380, 3
    %v2385 = vand.u32 %v2384, 3
    %vm2386 = vcmp.lt.s32.totalorder %v2385, 2
    %vm2387 = vcmp.eq.s32.totalorder %v2385, 0
    %v2388 = vxor.u32 %v2382, 2147483648
    %v2389 = vsel %vm2387, %v2381, %v2388
    %vm2390 = vcmp.eq.s32.totalorder %v2385, 2
    %v2391 = vxor.u32 %v2381, 2147483648
    %v2392 = vsel %vm2390, %v2391, %v2382
    %v2393 = vsel %vm2386, %v2389, %v2392
    %v2394 = vsel %vm2383, nan, %v2393
    %v2395 = vmul.f32 %v896, %v2082
    %v2396 = vmul.f32 %v897, %v2186
    %v2397 = vmul.f32 %v898, %v2290
    %v2398 = vmul.f32 %v899, %v2394
    %v2399 = vmul.f32 %v2395, 0.03
    %v2400 = vmul.f32 %v2396, 0.03
    %v2401 = vmul.f32 %v2397, 0.03
    %v2402 = vmul.f32 %v2398, 0.03
    %2403 = vmatprep.subr.mxu0 0.0
    %2404 = vmatpush1.msra.mxu0 0.0
    %2405 = vmatprep.subr.mxu0 0.0
    %2406 = vmatpush1.msra.mxu0 0.0
    %2407 = vmatprep.subr.mxu0 0.0
    %2408 = vmatpush1.msra.mxu0 0.0
    %2409 = vmatprep.subr.mxu0 0.0
    %2410 = vmatpush1.msra.mxu0 0.0
    %2411 = vmatprep.subr.mxu0 0.0
    %2412 = vmatpush1.msra.mxu0 0.0
    %2413 = vmatprep.subr.mxu0 0.0
    %2414 = vmatpush1.msra.mxu0 0.0
    %2415 = vmatprep.subr.mxu0 0.0
    %2416 = vmatpush1.msra.mxu0 0.0
    %2417 = vmatprep.subr.mxu0 0.0
    %2418 = vmatpush1.msra.mxu0 0.0
    %2419 = vmatprep.subr.mxu0 0.0
    %2420 = vmatpush1.msra.mxu0 0.0
    %2421 = vmatprep.subr.mxu0 0.0
    %2422 = vmatpush1.msra.mxu0 0.0
    %2423 = vmatprep.subr.mxu0 0.0
    %2424 = vmatpush1.msra.mxu0 0.0
    %2425 = vmatprep.subr.mxu0 0.0
    %2426 = vmatpush1.msra.mxu0 0.0
    %2427 = vmatprep.subr.mxu0 0.0
    %v2428 = vand.u32 %v1978, 4294901760
    %2429 = vmatpush1.msra.mxu0 %v2428
    %2430 = vmatprep.subr.mxu0 0.0
    %v2431 = vand.u32 %v1977, 4294901760
    %2432 = vmatpush1.msra.mxu0 %v2431
    %2433 = vmatprep.subr.mxu0 0.0
    %v2434 = vand.u32 %v1976, 4294901760
    %2435 = vmatpush1.msra.mxu0 %v2434
    %2436 = vmatprep.subr.mxu0 0.0
    %v2437 = vand.u32 %v1975, 4294901760
    %2438 = vmatpush1.msra.mxu0 %v2437
    %2439 = vmatprep.subr.mxu0 0.0
    %2440 = vmatpush2.msra.mxu0 0.0
    %2441 = vmatprep.subr.mxu0 0.0
    %2442 = vmatpush2.msra.mxu0 0.0
    %2443 = vmatprep.subr.mxu0 0.0
    %2444 = vmatpush2.msra.mxu0 0.0
    %2445 = vmatprep.subr.mxu0 0.0
    %2446 = vmatpush2.msra.mxu0 0.0
    %2447 = vmatprep.subr.mxu0 0.0
    %2448 = vmatpush2.msra.mxu0 0.0
    %2449 = vmatprep.subr.mxu0 0.0
    %2450 = vmatpush2.msra.mxu0 0.0
    %2451 = vmatprep.subr.mxu0 0.0
    %2452 = vmatpush2.msra.mxu0 0.0
    %2453 = vmatprep.subr.mxu0 0.0
    %2454 = vmatpush2.msra.mxu0 0.0
    %2455 = vmatprep.subr.mxu0 0.0
    %2456 = vmatpush2.msra.mxu0 0.0
    %2457 = vmatprep.subr.mxu0 0.0
    %2458 = vmatpush2.msra.mxu0 0.0
    %2459 = vmatprep.subr.mxu0 0.0
    %2460 = vmatpush2.msra.mxu0 0.0
    %2461 = vmatprep.subr.mxu0 0.0
    %2462 = vmatpush2.msra.mxu0 0.0
    %2463 = vmatprep.subr.mxu0 0.0
    %2464 = vmatpush2.msra.mxu0 0.0
    %2465 = vmatprep.subr.mxu0 0.0
    %2466 = vmatpush2.msra.mxu0 0.0
    %2467 = vmatprep.subr.mxu0 0.0
    %2468 = vmatpush2.msra.mxu0 0.0
    %2469 = vmatprep.subr.mxu0 0.0
    %2470 = vmatpush2.msra.mxu0 0.0
    %2471 = vmatprep.mubr.f32.mxu0 0.0
    %v2472 = vand.u32 %v926, 4294901760
    %v2473 = vsub.f32 %v926, %v2472
    %v2474 = vand.u32 %v2473, 4294901760
    %v2475 = vsub.f32 %v2473, %v2474
    %v2476 = vand.u32 %v2475, 4294901760
    %2477 = vmatmul.mubr.f32.gmra.mxu0 %v2476
    %v2478 = vpop.f32.mrf.mxu0
    %v2479 = vadd.f32 0.0, %v2478
    %v2480 = vpop.f32.mrf.mxu0
    %2481 = vmatprep.mubr.f32.mxu0 0.0
    %v2482 = vand.u32 %v929, 4294901760
    %v2483 = vsub.f32 %v929, %v2482
    %v2484 = vand.u32 %v2483, 4294901760
    %v2485 = vsub.f32 %v2483, %v2484
    %v2486 = vand.u32 %v2485, 4294901760
    %2487 = vmatmul.mubr.f32.gmra.mxu0 %v2486
    %v2488 = vpop.f32.mrf.mxu0
    %v2489 = vadd.f32 0.0, %v2488
    %v2490 = vpop.f32.mrf.mxu0
    %2491 = vmatprep.mubr.f32.mxu0 0.0
    %v2492 = vand.u32 %v932, 4294901760
    %v2493 = vsub.f32 %v932, %v2492
    %v2494 = vand.u32 %v2493, 4294901760
    %v2495 = vsub.f32 %v2493, %v2494
    %v2496 = vand.u32 %v2495, 4294901760
    %2497 = vmatmul.mubr.f32.gmra.mxu0 %v2496
    %v2498 = vpop.f32.mrf.mxu0
    %v2499 = vadd.f32 0.0, %v2498
    %v2500 = vpop.f32.mrf.mxu0
    %2501 = vmatprep.mubr.f32.mxu0 0.0
    %v2502 = vand.u32 %v935, 4294901760
    %v2503 = vsub.f32 %v935, %v2502
    %v2504 = vand.u32 %v2503, 4294901760
    %v2505 = vsub.f32 %v2503, %v2504
    %v2506 = vand.u32 %v2505, 4294901760
    %2507 = vmatmul.mubr.f32.gmra.mxu0 %v2506
    %v2508 = vpop.f32.mrf.mxu0
    %v2509 = vadd.f32 0.0, %v2508
    %v2510 = vpop.f32.mrf.mxu0
    %2511 = vdwg.mxu0
    %2512 = vmatprep.subr.mxu0 0.0
    %2513 = vmatpush1.msra.mxu0 0.0
    %2514 = vmatprep.subr.mxu0 0.0
    %2515 = vmatpush1.msra.mxu0 0.0
    %2516 = vmatprep.subr.mxu0 0.0
    %2517 = vmatpush1.msra.mxu0 0.0
    %2518 = vmatprep.subr.mxu0 0.0
    %2519 = vmatpush1.msra.mxu0 0.0
    %2520 = vmatprep.subr.mxu0 0.0
    %2521 = vmatpush1.msra.mxu0 0.0
    %2522 = vmatprep.subr.mxu0 0.0
    %2523 = vmatpush1.msra.mxu0 0.0
    %2524 = vmatprep.subr.mxu0 0.0
    %2525 = vmatpush1.msra.mxu0 0.0
    %2526 = vmatprep.subr.mxu0 0.0
    %2527 = vmatpush1.msra.mxu0 0.0
    %2528 = vmatprep.subr.mxu0 0.0
    %2529 = vmatpush1.msra.mxu0 0.0
    %2530 = vmatprep.subr.mxu0 0.0
    %2531 = vmatpush1.msra.mxu0 0.0
    %2532 = vmatprep.subr.mxu0 0.0
    %2533 = vmatpush1.msra.mxu0 0.0
    %2534 = vmatprep.subr.mxu0 0.0
    %2535 = vmatpush1.msra.mxu0 0.0
    %2536 = vmatprep.subr.mxu0 0.0
    %v2537 = vand.u32 %v1978, 4294901760
    %v2538 = vsub.f32 %v1978, %v2537
    %v2539 = vand.u32 %v2538, 4294901760
    %v2540 = vsub.f32 %v2538, %v2539
    %v2541 = vand.u32 %v2540, 4294901760
    %2542 = vmatpush1.msra.mxu0 %v2541
    %2543 = vmatprep.subr.mxu0 0.0
    %v2544 = vand.u32 %v1977, 4294901760
    %v2545 = vsub.f32 %v1977, %v2544
    %v2546 = vand.u32 %v2545, 4294901760
    %v2547 = vsub.f32 %v2545, %v2546
    %v2548 = vand.u32 %v2547, 4294901760
    %2549 = vmatpush1.msra.mxu0 %v2548
    %2550 = vmatprep.subr.mxu0 0.0
    %v2551 = vand.u32 %v1976, 4294901760
    %v2552 = vsub.f32 %v1976, %v2551
    %v2553 = vand.u32 %v2552, 4294901760
    %v2554 = vsub.f32 %v2552, %v2553
    %v2555 = vand.u32 %v2554, 4294901760
    %2556 = vmatpush1.msra.mxu0 %v2555
    %2557 = vmatprep.subr.mxu0 0.0
    %v2558 = vand.u32 %v1975, 4294901760
    %v2559 = vsub.f32 %v1975, %v2558
    %v2560 = vand.u32 %v2559, 4294901760
    %v2561 = vsub.f32 %v2559, %v2560
    %v2562 = vand.u32 %v2561, 4294901760
    %2563 = vmatpush1.msra.mxu0 %v2562
    %2564 = vmatprep.subr.mxu0 0.0
    %2565 = vmatpush2.msra.mxu0 0.0
    %2566 = vmatprep.subr.mxu0 0.0
    %2567 = vmatpush2.msra.mxu0 0.0
    %2568 = vmatprep.subr.mxu0 0.0
    %2569 = vmatpush2.msra.mxu0 0.0
    %2570 = vmatprep.subr.mxu0 0.0
    %2571 = vmatpush2.msra.mxu0 0.0
    %2572 = vmatprep.subr.mxu0 0.0
    %2573 = vmatpush2.msra.mxu0 0.0
    %2574 = vmatprep.subr.mxu0 0.0
    %2575 = vmatpush2.msra.mxu0 0.0
    %2576 = vmatprep.subr.mxu0 0.0
    %2577 = vmatpush2.msra.mxu0 0.0
    %2578 = vmatprep.subr.mxu0 0.0
    %2579 = vmatpush2.msra.mxu0 0.0
    %2580 = vmatprep.subr.mxu0 0.0
    %2581 = vmatpush2.msra.mxu0 0.0
    %2582 = vmatprep.subr.mxu0 0.0
    %2583 = vmatpush2.msra.mxu0 0.0
    %2584 = vmatprep.subr.mxu0 0.0
    %2585 = vmatpush2.msra.mxu0 0.0
    %2586 = vmatprep.subr.mxu0 0.0
    %2587 = vmatpush2.msra.mxu0 0.0
    %2588 = vmatprep.subr.mxu0 0.0
    %2589 = vmatpush2.msra.mxu0 0.0
    %2590 = vmatprep.subr.mxu0 0.0
    %2591 = vmatpush2.msra.mxu0 0.0
    %2592 = vmatprep.subr.mxu0 0.0
    %2593 = vmatpush2.msra.mxu0 0.0
    %2594 = vmatprep.subr.mxu0 0.0
    %2595 = vmatpush2.msra.mxu0 0.0
    %2596 = vmatprep.mubr.f32.mxu0 0.0
    %v2597 = vand.u32 %v926, 4294901760
    %2598 = vmatmul.mubr.f32.gmra.mxu0 %v2597
    %v2599 = vpop.f32.mrf.mxu0
    %v2600 = vadd.f32 %v2479, %v2599
    %v2601 = vpop.f32.mrf.mxu0
    %2602 = vmatprep.mubr.f32.mxu0 0.0
    %v2603 = vand.u32 %v929, 4294901760
    %2604 = vmatmul.mubr.f32.gmra.mxu0 %v2603
    %v2605 = vpop.f32.mrf.mxu0
    %v2606 = vadd.f32 %v2489, %v2605
    %v2607 = vpop.f32.mrf.mxu0
    %2608 = vmatprep.mubr.f32.mxu0 0.0
    %v2609 = vand.u32 %v932, 4294901760
    %2610 = vmatmul.mubr.f32.gmra.mxu0 %v2609
    %v2611 = vpop.f32.mrf.mxu0
    %v2612 = vadd.f32 %v2499, %v2611
    %v2613 = vpop.f32.mrf.mxu0
    %2614 = vmatprep.mubr.f32.mxu0 0.0
    %v2615 = vand.u32 %v935, 4294901760
    %2616 = vmatmul.mubr.f32.gmra.mxu0 %v2615
    %v2617 = vpop.f32.mrf.mxu0
    %v2618 = vadd.f32 %v2509, %v2617
    %v2619 = vpop.f32.mrf.mxu0
    %2620 = vdwg.mxu0
    %2621 = vmatprep.subr.mxu0 0.0
    %2622 = vmatpush1.msra.mxu0 0.0
    %2623 = vmatprep.subr.mxu0 0.0
    %2624 = vmatpush1.msra.mxu0 0.0
    %2625 = vmatprep.subr.mxu0 0.0
    %2626 = vmatpush1.msra.mxu0 0.0
    %2627 = vmatprep.subr.mxu0 0.0
    %2628 = vmatpush1.msra.mxu0 0.0
    %2629 = vmatprep.subr.mxu0 0.0
    %2630 = vmatpush1.msra.mxu0 0.0
    %2631 = vmatprep.subr.mxu0 0.0
    %2632 = vmatpush1.msra.mxu0 0.0
    %2633 = vmatprep.subr.mxu0 0.0
    %2634 = vmatpush1.msra.mxu0 0.0
    %2635 = vmatprep.subr.mxu0 0.0
    %2636 = vmatpush1.msra.mxu0 0.0
    %2637 = vmatprep.subr.mxu0 0.0
    %2638 = vmatpush1.msra.mxu0 0.0
    %2639 = vmatprep.subr.mxu0 0.0
    %2640 = vmatpush1.msra.mxu0 0.0
    %2641 = vmatprep.subr.mxu0 0.0
    %2642 = vmatpush1.msra.mxu0 0.0
    %2643 = vmatprep.subr.mxu0 0.0
    %2644 = vmatpush1.msra.mxu0 0.0
    %2645 = vmatprep.subr.mxu0 0.0
    %v2646 = vand.u32 %v1978, 4294901760
    %v2647 = vsub.f32 %v1978, %v2646
    %2648 = vmatpush1.msra.mxu0 %v2647
    %2649 = vmatprep.subr.mxu0 0.0
    %v2650 = vand.u32 %v1977, 4294901760
    %v2651 = vsub.f32 %v1977, %v2650
    %2652 = vmatpush1.msra.mxu0 %v2651
    %2653 = vmatprep.subr.mxu0 0.0
    %v2654 = vand.u32 %v1976, 4294901760
    %v2655 = vsub.f32 %v1976, %v2654
    %2656 = vmatpush1.msra.mxu0 %v2655
    %2657 = vmatprep.subr.mxu0 0.0
    %v2658 = vand.u32 %v1975, 4294901760
    %v2659 = vsub.f32 %v1975, %v2658
    %2660 = vmatpush1.msra.mxu0 %v2659
    %2661 = vmatprep.subr.mxu0 0.0
    %2662 = vmatpush2.msra.mxu0 0.0
    %2663 = vmatprep.subr.mxu0 0.0
    %2664 = vmatpush2.msra.mxu0 0.0
    %2665 = vmatprep.subr.mxu0 0.0
    %2666 = vmatpush2.msra.mxu0 0.0
    %2667 = vmatprep.subr.mxu0 0.0
    %2668 = vmatpush2.msra.mxu0 0.0
    %2669 = vmatprep.subr.mxu0 0.0
    %2670 = vmatpush2.msra.mxu0 0.0
    %2671 = vmatprep.subr.mxu0 0.0
    %2672 = vmatpush2.msra.mxu0 0.0
    %2673 = vmatprep.subr.mxu0 0.0
    %2674 = vmatpush2.msra.mxu0 0.0
    %2675 = vmatprep.subr.mxu0 0.0
    %2676 = vmatpush2.msra.mxu0 0.0
    %2677 = vmatprep.subr.mxu0 0.0
    %2678 = vmatpush2.msra.mxu0 0.0
    %2679 = vmatprep.subr.mxu0 0.0
    %2680 = vmatpush2.msra.mxu0 0.0
    %2681 = vmatprep.subr.mxu0 0.0
    %2682 = vmatpush2.msra.mxu0 0.0
    %2683 = vmatprep.subr.mxu0 0.0
    %2684 = vmatpush2.msra.mxu0 0.0
    %2685 = vmatprep.subr.mxu0 0.0
    %2686 = vmatpush2.msra.mxu0 0.0
    %2687 = vmatprep.subr.mxu0 0.0
    %2688 = vmatpush2.msra.mxu0 0.0
    %2689 = vmatprep.subr.mxu0 0.0
    %2690 = vmatpush2.msra.mxu0 0.0
    %2691 = vmatprep.subr.mxu0 0.0
    %2692 = vmatpush2.msra.mxu0 0.0
    %2693 = vmatprep.mubr.f32.mxu0 0.0
    %v2694 = vand.u32 %v926, 4294901760
    %v2695 = vsub.f32 %v926, %v2694
    %2696 = vmatmul.mubr.f32.gmra.mxu0 %v2695
    %v2697 = vpop.f32.mrf.mxu0
    %v2698 = vadd.f32 %v2600, %v2697
    %v2699 = vpop.f32.mrf.mxu0
    %2700 = vmatprep.mubr.f32.mxu0 0.0
    %v2701 = vand.u32 %v929, 4294901760
    %v2702 = vsub.f32 %v929, %v2701
    %2703 = vmatmul.mubr.f32.gmra.mxu0 %v2702
    %v2704 = vpop.f32.mrf.mxu0
    %v2705 = vadd.f32 %v2606, %v2704
    %v2706 = vpop.f32.mrf.mxu0
    %2707 = vmatprep.mubr.f32.mxu0 0.0
    %v2708 = vand.u32 %v932, 4294901760
    %v2709 = vsub.f32 %v932, %v2708
    %2710 = vmatmul.mubr.f32.gmra.mxu0 %v2709
    %v2711 = vpop.f32.mrf.mxu0
    %v2712 = vadd.f32 %v2612, %v2711
    %v2713 = vpop.f32.mrf.mxu0
    %2714 = vmatprep.mubr.f32.mxu0 0.0
    %v2715 = vand.u32 %v935, 4294901760
    %v2716 = vsub.f32 %v935, %v2715
    %2717 = vmatmul.mubr.f32.gmra.mxu0 %v2716
    %v2718 = vpop.f32.mrf.mxu0
    %v2719 = vadd.f32 %v2618, %v2718
    %v2720 = vpop.f32.mrf.mxu0
    %2721 = vdwg.mxu0
    %2722 = vmatprep.subr.mxu0 0.0
    %2723 = vmatpush1.msra.mxu0 0.0
    %2724 = vmatprep.subr.mxu0 0.0
    %2725 = vmatpush1.msra.mxu0 0.0
    %2726 = vmatprep.subr.mxu0 0.0
    %2727 = vmatpush1.msra.mxu0 0.0
    %2728 = vmatprep.subr.mxu0 0.0
    %2729 = vmatpush1.msra.mxu0 0.0
    %2730 = vmatprep.subr.mxu0 0.0
    %2731 = vmatpush1.msra.mxu0 0.0
    %2732 = vmatprep.subr.mxu0 0.0
    %2733 = vmatpush1.msra.mxu0 0.0
    %2734 = vmatprep.subr.mxu0 0.0
    %2735 = vmatpush1.msra.mxu0 0.0
    %2736 = vmatprep.subr.mxu0 0.0
    %2737 = vmatpush1.msra.mxu0 0.0
    %2738 = vmatprep.subr.mxu0 0.0
    %2739 = vmatpush1.msra.mxu0 0.0
    %2740 = vmatprep.subr.mxu0 0.0
    %2741 = vmatpush1.msra.mxu0 0.0
    %2742 = vmatprep.subr.mxu0 0.0
    %2743 = vmatpush1.msra.mxu0 0.0
    %2744 = vmatprep.subr.mxu0 0.0
    %2745 = vmatpush1.msra.mxu0 0.0
    %2746 = vmatprep.subr.mxu0 0.0
    %v2747 = vand.u32 %v1978, 4294901760
    %2748 = vmatpush1.msra.mxu0 %v2747
    %2749 = vmatprep.subr.mxu0 0.0
    %v2750 = vand.u32 %v1977, 4294901760
    %2751 = vmatpush1.msra.mxu0 %v2750
    %2752 = vmatprep.subr.mxu0 0.0
    %v2753 = vand.u32 %v1976, 4294901760
    %2754 = vmatpush1.msra.mxu0 %v2753
    %2755 = vmatprep.subr.mxu0 0.0
    %v2756 = vand.u32 %v1975, 4294901760
    %2757 = vmatpush1.msra.mxu0 %v2756
    %2758 = vmatprep.subr.mxu0 0.0
    %2759 = vmatpush2.msra.mxu0 0.0
    %2760 = vmatprep.subr.mxu0 0.0
    %2761 = vmatpush2.msra.mxu0 0.0
    %2762 = vmatprep.subr.mxu0 0.0
    %2763 = vmatpush2.msra.mxu0 0.0
    %2764 = vmatprep.subr.mxu0 0.0
    %2765 = vmatpush2.msra.mxu0 0.0
    %2766 = vmatprep.subr.mxu0 0.0
    %2767 = vmatpush2.msra.mxu0 0.0
    %2768 = vmatprep.subr.mxu0 0.0
    %2769 = vmatpush2.msra.mxu0 0.0
    %2770 = vmatprep.subr.mxu0 0.0
    %2771 = vmatpush2.msra.mxu0 0.0
    %2772 = vmatprep.subr.mxu0 0.0
    %2773 = vmatpush2.msra.mxu0 0.0
    %2774 = vmatprep.subr.mxu0 0.0
    %2775 = vmatpush2.msra.mxu0 0.0
    %2776 = vmatprep.subr.mxu0 0.0
    %2777 = vmatpush2.msra.mxu0 0.0
    %2778 = vmatprep.subr.mxu0 0.0
    %2779 = vmatpush2.msra.mxu0 0.0
    %2780 = vmatprep.subr.mxu0 0.0
    %2781 = vmatpush2.msra.mxu0 0.0
    %2782 = vmatprep.subr.mxu0 0.0
    %2783 = vmatpush2.msra.mxu0 0.0
    %2784 = vmatprep.subr.mxu0 0.0
    %2785 = vmatpush2.msra.mxu0 0.0
    %2786 = vmatprep.subr.mxu0 0.0
    %2787 = vmatpush2.msra.mxu0 0.0
    %2788 = vmatprep.subr.mxu0 0.0
    %2789 = vmatpush2.msra.mxu0 0.0
    %2790 = vmatprep.mubr.f32.mxu0 0.0
    %v2791 = vand.u32 %v926, 4294901760
    %v2792 = vsub.f32 %v926, %v2791
    %v2793 = vand.u32 %v2792, 4294901760
    %2794 = vmatmul.mubr.f32.gmra.mxu0 %v2793
    %v2795 = vpop.f32.mrf.mxu0
    %v2796 = vadd.f32 %v2698, %v2795
    %v2797 = vpop.f32.mrf.mxu0
    %2798 = vmatprep.mubr.f32.mxu0 0.0
    %v2799 = vand.u32 %v929, 4294901760
    %v2800 = vsub.f32 %v929, %v2799
    %v2801 = vand.u32 %v2800, 4294901760
    %2802 = vmatmul.mubr.f32.gmra.mxu0 %v2801
    %v2803 = vpop.f32.mrf.mxu0
    %v2804 = vadd.f32 %v2705, %v2803
    %v2805 = vpop.f32.mrf.mxu0
    %2806 = vmatprep.mubr.f32.mxu0 0.0
    %v2807 = vand.u32 %v932, 4294901760
    %v2808 = vsub.f32 %v932, %v2807
    %v2809 = vand.u32 %v2808, 4294901760
    %2810 = vmatmul.mubr.f32.gmra.mxu0 %v2809
    %v2811 = vpop.f32.mrf.mxu0
    %v2812 = vadd.f32 %v2712, %v2811
    %v2813 = vpop.f32.mrf.mxu0
    %2814 = vmatprep.mubr.f32.mxu0 0.0
    %v2815 = vand.u32 %v935, 4294901760
    %v2816 = vsub.f32 %v935, %v2815
    %v2817 = vand.u32 %v2816, 4294901760
    %2818 = vmatmul.mubr.f32.gmra.mxu0 %v2817
    %v2819 = vpop.f32.mrf.mxu0
    %v2820 = vadd.f32 %v2719, %v2819
    %v2821 = vpop.f32.mrf.mxu0
    %2822 = vdwg.mxu0
    %2823 = vmatprep.subr.mxu0 0.0
    %2824 = vmatpush1.msra.mxu0 0.0
    %2825 = vmatprep.subr.mxu0 0.0
    %2826 = vmatpush1.msra.mxu0 0.0
    %2827 = vmatprep.subr.mxu0 0.0
    %2828 = vmatpush1.msra.mxu0 0.0
    %2829 = vmatprep.subr.mxu0 0.0
    %2830 = vmatpush1.msra.mxu0 0.0
    %2831 = vmatprep.subr.mxu0 0.0
    %2832 = vmatpush1.msra.mxu0 0.0
    %2833 = vmatprep.subr.mxu0 0.0
    %2834 = vmatpush1.msra.mxu0 0.0
    %2835 = vmatprep.subr.mxu0 0.0
    %2836 = vmatpush1.msra.mxu0 0.0
    %2837 = vmatprep.subr.mxu0 0.0
    %2838 = vmatpush1.msra.mxu0 0.0
    %2839 = vmatprep.subr.mxu0 0.0
    %2840 = vmatpush1.msra.mxu0 0.0
    %2841 = vmatprep.subr.mxu0 0.0
    %2842 = vmatpush1.msra.mxu0 0.0
    %2843 = vmatprep.subr.mxu0 0.0
    %2844 = vmatpush1.msra.mxu0 0.0
    %2845 = vmatprep.subr.mxu0 0.0
    %2846 = vmatpush1.msra.mxu0 0.0
    %2847 = vmatprep.subr.mxu0 0.0
    %v2848 = vand.u32 %v1978, 4294901760
    %v2849 = vsub.f32 %v1978, %v2848
    %v2850 = vand.u32 %v2849, 4294901760
    %2851 = vmatpush1.msra.mxu0 %v2850
    %2852 = vmatprep.subr.mxu0 0.0
    %v2853 = vand.u32 %v1977, 4294901760
    %v2854 = vsub.f32 %v1977, %v2853
    %v2855 = vand.u32 %v2854, 4294901760
    %2856 = vmatpush1.msra.mxu0 %v2855
    %2857 = vmatprep.subr.mxu0 0.0
    %v2858 = vand.u32 %v1976, 4294901760
    %v2859 = vsub.f32 %v1976, %v2858
    %v2860 = vand.u32 %v2859, 4294901760
    %2861 = vmatpush1.msra.mxu0 %v2860
    %2862 = vmatprep.subr.mxu0 0.0
    %v2863 = vand.u32 %v1975, 4294901760
    %v2864 = vsub.f32 %v1975, %v2863
    %v2865 = vand.u32 %v2864, 4294901760
    %2866 = vmatpush1.msra.mxu0 %v2865
    %2867 = vmatprep.subr.mxu0 0.0
    %2868 = vmatpush2.msra.mxu0 0.0
    %2869 = vmatprep.subr.mxu0 0.0
    %2870 = vmatpush2.msra.mxu0 0.0
    %2871 = vmatprep.subr.mxu0 0.0
    %2872 = vmatpush2.msra.mxu0 0.0
    %2873 = vmatprep.subr.mxu0 0.0
    %2874 = vmatpush2.msra.mxu0 0.0
    %2875 = vmatprep.subr.mxu0 0.0
    %2876 = vmatpush2.msra.mxu0 0.0
    %2877 = vmatprep.subr.mxu0 0.0
    %2878 = vmatpush2.msra.mxu0 0.0
    %2879 = vmatprep.subr.mxu0 0.0
    %2880 = vmatpush2.msra.mxu0 0.0
    %2881 = vmatprep.subr.mxu0 0.0
    %2882 = vmatpush2.msra.mxu0 0.0
    %2883 = vmatprep.subr.mxu0 0.0
    %2884 = vmatpush2.msra.mxu0 0.0
    %2885 = vmatprep.subr.mxu0 0.0
    %2886 = vmatpush2.msra.mxu0 0.0
    %2887 = vmatprep.subr.mxu0 0.0
    %2888 = vmatpush2.msra.mxu0 0.0
    %2889 = vmatprep.subr.mxu0 0.0
    %2890 = vmatpush2.msra.mxu0 0.0
    %2891 = vmatprep.subr.mxu0 0.0
    %2892 = vmatpush2.msra.mxu0 0.0
    %2893 = vmatprep.subr.mxu0 0.0
    %2894 = vmatpush2.msra.mxu0 0.0
    %2895 = vmatprep.subr.mxu0 0.0
    %2896 = vmatpush2.msra.mxu0 0.0
    %2897 = vmatprep.subr.mxu0 0.0
    %2898 = vmatpush2.msra.mxu0 0.0
    %2899 = vmatprep.mubr.f32.mxu0 0.0
    %v2900 = vand.u32 %v926, 4294901760
    %2901 = vmatmul.mubr.f32.gmra.mxu0 %v2900
    %v2902 = vpop.f32.mrf.mxu0
    %v2903 = vadd.f32 %v2796, %v2902
    %v2904 = vpop.f32.mrf.mxu0
    %2905 = vmatprep.mubr.f32.mxu0 0.0
    %v2906 = vand.u32 %v929, 4294901760
    %2907 = vmatmul.mubr.f32.gmra.mxu0 %v2906
    %v2908 = vpop.f32.mrf.mxu0
    %v2909 = vadd.f32 %v2804, %v2908
    %v2910 = vpop.f32.mrf.mxu0
    %2911 = vmatprep.mubr.f32.mxu0 0.0
    %v2912 = vand.u32 %v932, 4294901760
    %2913 = vmatmul.mubr.f32.gmra.mxu0 %v2912
    %v2914 = vpop.f32.mrf.mxu0
    %v2915 = vadd.f32 %v2812, %v2914
    %v2916 = vpop.f32.mrf.mxu0
    %2917 = vmatprep.mubr.f32.mxu0 0.0
    %v2918 = vand.u32 %v935, 4294901760
    %2919 = vmatmul.mubr.f32.gmra.mxu0 %v2918
    %v2920 = vpop.f32.mrf.mxu0
    %v2921 = vadd.f32 %v2820, %v2920
    %v2922 = vpop.f32.mrf.mxu0
    %2923 = vdwg.mxu0
    %2924 = vmatprep.subr.mxu0 0.0
    %2925 = vmatpush1.msra.mxu0 0.0
    %2926 = vmatprep.subr.mxu0 0.0
    %2927 = vmatpush1.msra.mxu0 0.0
    %2928 = vmatprep.subr.mxu0 0.0
    %2929 = vmatpush1.msra.mxu0 0.0
    %2930 = vmatprep.subr.mxu0 0.0
    %2931 = vmatpush1.msra.mxu0 0.0
    %2932 = vmatprep.subr.mxu0 0.0
    %2933 = vmatpush1.msra.mxu0 0.0
    %2934 = vmatprep.subr.mxu0 0.0
    %2935 = vmatpush1.msra.mxu0 0.0
    %2936 = vmatprep.subr.mxu0 0.0
    %2937 = vmatpush1.msra.mxu0 0.0
    %2938 = vmatprep.subr.mxu0 0.0
    %2939 = vmatpush1.msra.mxu0 0.0
    %2940 = vmatprep.subr.mxu0 0.0
    %2941 = vmatpush1.msra.mxu0 0.0
    %2942 = vmatprep.subr.mxu0 0.0
    %2943 = vmatpush1.msra.mxu0 0.0
    %2944 = vmatprep.subr.mxu0 0.0
    %2945 = vmatpush1.msra.mxu0 0.0
    %2946 = vmatprep.subr.mxu0 0.0
    %2947 = vmatpush1.msra.mxu0 0.0
    %2948 = vmatprep.subr.mxu0 0.0
    %v2949 = vand.u32 %v1978, 4294901760
    %2950 = vmatpush1.msra.mxu0 %v2949
    %2951 = vmatprep.subr.mxu0 0.0
    %v2952 = vand.u32 %v1977, 4294901760
    %2953 = vmatpush1.msra.mxu0 %v2952
    %2954 = vmatprep.subr.mxu0 0.0
    %v2955 = vand.u32 %v1976, 4294901760
    %2956 = vmatpush1.msra.mxu0 %v2955
    %2957 = vmatprep.subr.mxu0 0.0
    %v2958 = vand.u32 %v1975, 4294901760
    %2959 = vmatpush1.msra.mxu0 %v2958
    %2960 = vmatprep.subr.mxu0 0.0
    %2961 = vmatpush2.msra.mxu0 0.0
    %2962 = vmatprep.subr.mxu0 0.0
    %2963 = vmatpush2.msra.mxu0 0.0
    %2964 = vmatprep.subr.mxu0 0.0
    %2965 = vmatpush2.msra.mxu0 0.0
    %2966 = vmatprep.subr.mxu0 0.0
    %2967 = vmatpush2.msra.mxu0 0.0
    %2968 = vmatprep.subr.mxu0 0.0
    %2969 = vmatpush2.msra.mxu0 0.0
    %2970 = vmatprep.subr.mxu0 0.0
    %2971 = vmatpush2.msra.mxu0 0.0
    %2972 = vmatprep.subr.mxu0 0.0
    %2973 = vmatpush2.msra.mxu0 0.0
    %2974 = vmatprep.subr.mxu0 0.0
    %2975 = vmatpush2.msra.mxu0 0.0
    %2976 = vmatprep.subr.mxu0 0.0
    %2977 = vmatpush2.msra.mxu0 0.0
    %2978 = vmatprep.subr.mxu0 0.0
    %2979 = vmatpush2.msra.mxu0 0.0
    %2980 = vmatprep.subr.mxu0 0.0
    %2981 = vmatpush2.msra.mxu0 0.0
    %2982 = vmatprep.subr.mxu0 0.0
    %2983 = vmatpush2.msra.mxu0 0.0
    %2984 = vmatprep.subr.mxu0 0.0
    %2985 = vmatpush2.msra.mxu0 0.0
    %2986 = vmatprep.subr.mxu0 0.0
    %2987 = vmatpush2.msra.mxu0 0.0
    %2988 = vmatprep.subr.mxu0 0.0
    %2989 = vmatpush2.msra.mxu0 0.0
    %2990 = vmatprep.subr.mxu0 0.0
    %2991 = vmatpush2.msra.mxu0 0.0
    %2992 = vmatprep.mubr.f32.mxu0 0.0
    %v2993 = vand.u32 %v926, 4294901760
    %2994 = vmatmul.mubr.f32.gmra.mxu0 %v2993
    %v2995 = vpop.f32.mrf.mxu0
    %v2996 = vadd.f32 %v2903, %v2995
    %v2997 = vpop.f32.mrf.mxu0
    %2998 = vmatprep.mubr.f32.mxu0 0.0
    %v2999 = vand.u32 %v929, 4294901760
    %3000 = vmatmul.mubr.f32.gmra.mxu0 %v2999
    %v3001 = vpop.f32.mrf.mxu0
    %v3002 = vadd.f32 %v2909, %v3001
    %v3003 = vpop.f32.mrf.mxu0
    %3004 = vmatprep.mubr.f32.mxu0 0.0
    %v3005 = vand.u32 %v932, 4294901760
    %3006 = vmatmul.mubr.f32.gmra.mxu0 %v3005
    %v3007 = vpop.f32.mrf.mxu0
    %v3008 = vadd.f32 %v2915, %v3007
    %v3009 = vpop.f32.mrf.mxu0
    %3010 = vmatprep.mubr.f32.mxu0 0.0
    %v3011 = vand.u32 %v935, 4294901760
    %3012 = vmatmul.mubr.f32.gmra.mxu0 %v3011
    %v3013 = vpop.f32.mrf.mxu0
    %v3014 = vadd.f32 %v2921, %v3013
    %v3015 = vpop.f32.mrf.mxu0
    %3016 = vdwg.mxu0
    %v3017 = vlaneseq
    %v3018 = vshrl.u32 %v3017, 7
    %v3019 = vsub.s32 0, %v3018
    %v3020 = vrot.slane %v38, %v3019
    %v3021 = vadd.f32 %v3020, %v2996
    %v3022 = vadd.f32 %v3020, %v3002
    %v3023 = vadd.f32 %v3020, %v3008
    %v3024 = vadd.f32 %v3020, %v3014
    %3025 = vst [vmem:[#allocation9] sm:$0xff] %v3021
    %3026 = vst [vmem:[#allocation9 + $0x8] sm:$0xff] %v3022
    %3027 = vst [vmem:[#allocation9 + $0x10] sm:$0xff] %v3023
    %3028 = vst [vmem:[#allocation9 + $0x18] sm:$0xff] %v3024
    %3029 = vmatprep.subr.mxu0 0.0
    %3030 = vmatpush1.msra.mxu0 0.0
    %3031 = vmatprep.subr.mxu0 0.0
    %3032 = vmatpush1.msra.mxu0 0.0
    %3033 = vmatprep.subr.mxu0 0.0
    %3034 = vmatpush1.msra.mxu0 0.0
    %3035 = vmatprep.subr.mxu0 0.0
    %3036 = vmatpush1.msra.mxu0 0.0
    %3037 = vmatprep.subr.mxu0 0.0
    %3038 = vmatpush1.msra.mxu0 0.0
    %3039 = vmatprep.subr.mxu0 0.0
    %3040 = vmatpush1.msra.mxu0 0.0
    %3041 = vmatprep.subr.mxu0 0.0
    %3042 = vmatpush1.msra.mxu0 0.0
    %3043 = vmatprep.subr.mxu0 0.0
    %3044 = vmatpush1.msra.mxu0 0.0
    %3045 = vmatprep.subr.mxu0 0.0
    %3046 = vmatpush1.msra.mxu0 0.0
    %3047 = vmatprep.subr.mxu0 0.0
    %3048 = vmatpush1.msra.mxu0 0.0
    %3049 = vmatprep.subr.mxu0 0.0
    %3050 = vmatpush1.msra.mxu0 0.0
    %3051 = vmatprep.subr.mxu0 0.0
    %3052 = vmatpush1.msra.mxu0 0.0
    %3053 = vmatprep.subr.mxu0 0.0
    %v3054 = vand.u32 %v2402, 4294901760
    %3055 = vmatpush1.msra.mxu0 %v3054
    %3056 = vmatprep.subr.mxu0 0.0
    %v3057 = vand.u32 %v2401, 4294901760
    %3058 = vmatpush1.msra.mxu0 %v3057
    %3059 = vmatprep.subr.mxu0 0.0
    %v3060 = vand.u32 %v2400, 4294901760
    %3061 = vmatpush1.msra.mxu0 %v3060
    %3062 = vmatprep.subr.mxu0 0.0
    %v3063 = vand.u32 %v2399, 4294901760
    %3064 = vmatpush1.msra.mxu0 %v3063
    %3065 = vmatprep.subr.mxu0 0.0
    %3066 = vmatpush2.msra.mxu0 0.0
    %3067 = vmatprep.subr.mxu0 0.0
    %3068 = vmatpush2.msra.mxu0 0.0
    %3069 = vmatprep.subr.mxu0 0.0
    %3070 = vmatpush2.msra.mxu0 0.0
    %3071 = vmatprep.subr.mxu0 0.0
    %3072 = vmatpush2.msra.mxu0 0.0
    %3073 = vmatprep.subr.mxu0 0.0
    %3074 = vmatpush2.msra.mxu0 0.0
    %3075 = vmatprep.subr.mxu0 0.0
    %3076 = vmatpush2.msra.mxu0 0.0
    %3077 = vmatprep.subr.mxu0 0.0
    %3078 = vmatpush2.msra.mxu0 0.0
    %3079 = vmatprep.subr.mxu0 0.0
    %3080 = vmatpush2.msra.mxu0 0.0
    %3081 = vmatprep.subr.mxu0 0.0
    %3082 = vmatpush2.msra.mxu0 0.0
    %3083 = vmatprep.subr.mxu0 0.0
    %3084 = vmatpush2.msra.mxu0 0.0
    %3085 = vmatprep.subr.mxu0 0.0
    %3086 = vmatpush2.msra.mxu0 0.0
    %3087 = vmatprep.subr.mxu0 0.0
    %3088 = vmatpush2.msra.mxu0 0.0
    %3089 = vmatprep.subr.mxu0 0.0
    %3090 = vmatpush2.msra.mxu0 0.0
    %3091 = vmatprep.subr.mxu0 0.0
    %3092 = vmatpush2.msra.mxu0 0.0
    %3093 = vmatprep.subr.mxu0 0.0
    %3094 = vmatpush2.msra.mxu0 0.0
    %3095 = vmatprep.subr.mxu0 0.0
    %3096 = vmatpush2.msra.mxu0 0.0
    %3097 = vmatprep.mubr.f32.mxu0 0.0
    %v3098 = vand.u32 %v926, 4294901760
    %v3099 = vsub.f32 %v926, %v3098
    %v3100 = vand.u32 %v3099, 4294901760
    %v3101 = vsub.f32 %v3099, %v3100
    %v3102 = vand.u32 %v3101, 4294901760
    %3103 = vmatmul.mubr.f32.gmra.mxu0 %v3102
    %v3104 = vpop.f32.mrf.mxu0
    %v3105 = vadd.f32 0.0, %v3104
    %v3106 = vpop.f32.mrf.mxu0
    %3107 = vmatprep.mubr.f32.mxu0 0.0
    %v3108 = vand.u32 %v929, 4294901760
    %v3109 = vsub.f32 %v929, %v3108
    %v3110 = vand.u32 %v3109, 4294901760
    %v3111 = vsub.f32 %v3109, %v3110
    %v3112 = vand.u32 %v3111, 4294901760
    %3113 = vmatmul.mubr.f32.gmra.mxu0 %v3112
    %v3114 = vpop.f32.mrf.mxu0
    %v3115 = vadd.f32 0.0, %v3114
    %v3116 = vpop.f32.mrf.mxu0
    %3117 = vmatprep.mubr.f32.mxu0 0.0
    %v3118 = vand.u32 %v932, 4294901760
    %v3119 = vsub.f32 %v932, %v3118
    %v3120 = vand.u32 %v3119, 4294901760
    %v3121 = vsub.f32 %v3119, %v3120
    %v3122 = vand.u32 %v3121, 4294901760
    %3123 = vmatmul.mubr.f32.gmra.mxu0 %v3122
    %v3124 = vpop.f32.mrf.mxu0
    %v3125 = vadd.f32 0.0, %v3124
    %v3126 = vpop.f32.mrf.mxu0
    %3127 = vmatprep.mubr.f32.mxu0 0.0
    %v3128 = vand.u32 %v935, 4294901760
    %v3129 = vsub.f32 %v935, %v3128
    %v3130 = vand.u32 %v3129, 4294901760
    %v3131 = vsub.f32 %v3129, %v3130
    %v3132 = vand.u32 %v3131, 4294901760
    %3133 = vmatmul.mubr.f32.gmra.mxu0 %v3132
    %v3134 = vpop.f32.mrf.mxu0
    %v3135 = vadd.f32 0.0, %v3134
    %v3136 = vpop.f32.mrf.mxu0
    %3137 = vdwg.mxu0
    %3138 = vmatprep.subr.mxu0 0.0
    %3139 = vmatpush1.msra.mxu0 0.0
    %3140 = vmatprep.subr.mxu0 0.0
    %3141 = vmatpush1.msra.mxu0 0.0
    %3142 = vmatprep.subr.mxu0 0.0
    %3143 = vmatpush1.msra.mxu0 0.0
    %3144 = vmatprep.subr.mxu0 0.0
    %3145 = vmatpush1.msra.mxu0 0.0
    %3146 = vmatprep.subr.mxu0 0.0
    %3147 = vmatpush1.msra.mxu0 0.0
    %3148 = vmatprep.subr.mxu0 0.0
    %3149 = vmatpush1.msra.mxu0 0.0
    %3150 = vmatprep.subr.mxu0 0.0
    %3151 = vmatpush1.msra.mxu0 0.0
    %3152 = vmatprep.subr.mxu0 0.0
    %3153 = vmatpush1.msra.mxu0 0.0
    %3154 = vmatprep.subr.mxu0 0.0
    %3155 = vmatpush1.msra.mxu0 0.0
    %3156 = vmatprep.subr.mxu0 0.0
    %3157 = vmatpush1.msra.mxu0 0.0
    %3158 = vmatprep.subr.mxu0 0.0
    %3159 = vmatpush1.msra.mxu0 0.0
    %3160 = vmatprep.subr.mxu0 0.0
    %3161 = vmatpush1.msra.mxu0 0.0
    %3162 = vmatprep.subr.mxu0 0.0
    %v3163 = vand.u32 %v2402, 4294901760
    %v3164 = vsub.f32 %v2402, %v3163
    %v3165 = vand.u32 %v3164, 4294901760
    %v3166 = vsub.f32 %v3164, %v3165
    %v3167 = vand.u32 %v3166, 4294901760
    %3168 = vmatpush1.msra.mxu0 %v3167
    %3169 = vmatprep.subr.mxu0 0.0
    %v3170 = vand.u32 %v2401, 4294901760
    %v3171 = vsub.f32 %v2401, %v3170
    %v3172 = vand.u32 %v3171, 4294901760
    %v3173 = vsub.f32 %v3171, %v3172
    %v3174 = vand.u32 %v3173, 4294901760
    %3175 = vmatpush1.msra.mxu0 %v3174
    %3176 = vmatprep.subr.mxu0 0.0
    %v3177 = vand.u32 %v2400, 4294901760
    %v3178 = vsub.f32 %v2400, %v3177
    %v3179 = vand.u32 %v3178, 4294901760
    %v3180 = vsub.f32 %v3178, %v3179
    %v3181 = vand.u32 %v3180, 4294901760
    %3182 = vmatpush1.msra.mxu0 %v3181
    %3183 = vmatprep.subr.mxu0 0.0
    %v3184 = vand.u32 %v2399, 4294901760
    %v3185 = vsub.f32 %v2399, %v3184
    %v3186 = vand.u32 %v3185, 4294901760
    %v3187 = vsub.f32 %v3185, %v3186
    %v3188 = vand.u32 %v3187, 4294901760
    %3189 = vmatpush1.msra.mxu0 %v3188
    %3190 = vmatprep.subr.mxu0 0.0
    %3191 = vmatpush2.msra.mxu0 0.0
    %3192 = vmatprep.subr.mxu0 0.0
    %3193 = vmatpush2.msra.mxu0 0.0
    %3194 = vmatprep.subr.mxu0 0.0
    %3195 = vmatpush2.msra.mxu0 0.0
    %3196 = vmatprep.subr.mxu0 0.0
    %3197 = vmatpush2.msra.mxu0 0.0
    %3198 = vmatprep.subr.mxu0 0.0
    %3199 = vmatpush2.msra.mxu0 0.0
    %3200 = vmatprep.subr.mxu0 0.0
    %3201 = vmatpush2.msra.mxu0 0.0
    %3202 = vmatprep.subr.mxu0 0.0
    %3203 = vmatpush2.msra.mxu0 0.0
    %3204 = vmatprep.subr.mxu0 0.0
    %3205 = vmatpush2.msra.mxu0 0.0
    %3206 = vmatprep.subr.mxu0 0.0
    %3207 = vmatpush2.msra.mxu0 0.0
    %3208 = vmatprep.subr.mxu0 0.0
    %3209 = vmatpush2.msra.mxu0 0.0
    %3210 = vmatprep.subr.mxu0 0.0
    %3211 = vmatpush2.msra.mxu0 0.0
    %3212 = vmatprep.subr.mxu0 0.0
    %3213 = vmatpush2.msra.mxu0 0.0
    %3214 = vmatprep.subr.mxu0 0.0
    %3215 = vmatpush2.msra.mxu0 0.0
    %3216 = vmatprep.subr.mxu0 0.0
    %3217 = vmatpush2.msra.mxu0 0.0
    %3218 = vmatprep.subr.mxu0 0.0
    %3219 = vmatpush2.msra.mxu0 0.0
    %3220 = vmatprep.subr.mxu0 0.0
    %3221 = vmatpush2.msra.mxu0 0.0
    %3222 = vmatprep.mubr.f32.mxu0 0.0
    %v3223 = vand.u32 %v926, 4294901760
    %3224 = vmatmul.mubr.f32.gmra.mxu0 %v3223
    %v3225 = vpop.f32.mrf.mxu0
    %v3226 = vadd.f32 %v3105, %v3225
    %v3227 = vpop.f32.mrf.mxu0
    %3228 = vmatprep.mubr.f32.mxu0 0.0
    %v3229 = vand.u32 %v929, 4294901760
    %3230 = vmatmul.mubr.f32.gmra.mxu0 %v3229
    %v3231 = vpop.f32.mrf.mxu0
    %v3232 = vadd.f32 %v3115, %v3231
    %v3233 = vpop.f32.mrf.mxu0
    %3234 = vmatprep.mubr.f32.mxu0 0.0
    %v3235 = vand.u32 %v932, 4294901760
    %3236 = vmatmul.mubr.f32.gmra.mxu0 %v3235
    %v3237 = vpop.f32.mrf.mxu0
    %v3238 = vadd.f32 %v3125, %v3237
    %v3239 = vpop.f32.mrf.mxu0
    %3240 = vmatprep.mubr.f32.mxu0 0.0
    %v3241 = vand.u32 %v935, 4294901760
    %3242 = vmatmul.mubr.f32.gmra.mxu0 %v3241
    %v3243 = vpop.f32.mrf.mxu0
    %v3244 = vadd.f32 %v3135, %v3243
    %v3245 = vpop.f32.mrf.mxu0
    %3246 = vdwg.mxu0
    %3247 = vmatprep.subr.mxu0 0.0
    %3248 = vmatpush1.msra.mxu0 0.0
    %3249 = vmatprep.subr.mxu0 0.0
    %3250 = vmatpush1.msra.mxu0 0.0
    %3251 = vmatprep.subr.mxu0 0.0
    %3252 = vmatpush1.msra.mxu0 0.0
    %3253 = vmatprep.subr.mxu0 0.0
    %3254 = vmatpush1.msra.mxu0 0.0
    %3255 = vmatprep.subr.mxu0 0.0
    %3256 = vmatpush1.msra.mxu0 0.0
    %3257 = vmatprep.subr.mxu0 0.0
    %3258 = vmatpush1.msra.mxu0 0.0
    %3259 = vmatprep.subr.mxu0 0.0
    %3260 = vmatpush1.msra.mxu0 0.0
    %3261 = vmatprep.subr.mxu0 0.0
    %3262 = vmatpush1.msra.mxu0 0.0
    %3263 = vmatprep.subr.mxu0 0.0
    %3264 = vmatpush1.msra.mxu0 0.0
    %3265 = vmatprep.subr.mxu0 0.0
    %3266 = vmatpush1.msra.mxu0 0.0
    %3267 = vmatprep.subr.mxu0 0.0
    %3268 = vmatpush1.msra.mxu0 0.0
    %3269 = vmatprep.subr.mxu0 0.0
    %3270 = vmatpush1.msra.mxu0 0.0
    %3271 = vmatprep.subr.mxu0 0.0
    %v3272 = vand.u32 %v2402, 4294901760
    %v3273 = vsub.f32 %v2402, %v3272
    %3274 = vmatpush1.msra.mxu0 %v3273
    %3275 = vmatprep.subr.mxu0 0.0
    %v3276 = vand.u32 %v2401, 4294901760
    %v3277 = vsub.f32 %v2401, %v3276
    %3278 = vmatpush1.msra.mxu0 %v3277
    %3279 = vmatprep.subr.mxu0 0.0
    %v3280 = vand.u32 %v2400, 4294901760
    %v3281 = vsub.f32 %v2400, %v3280
    %3282 = vmatpush1.msra.mxu0 %v3281
    %3283 = vmatprep.subr.mxu0 0.0
    %v3284 = vand.u32 %v2399, 4294901760
    %v3285 = vsub.f32 %v2399, %v3284
    %3286 = vmatpush1.msra.mxu0 %v3285
    %3287 = vmatprep.subr.mxu0 0.0
    %3288 = vmatpush2.msra.mxu0 0.0
    %3289 = vmatprep.subr.mxu0 0.0
    %3290 = vmatpush2.msra.mxu0 0.0
    %3291 = vmatprep.subr.mxu0 0.0
    %3292 = vmatpush2.msra.mxu0 0.0
    %3293 = vmatprep.subr.mxu0 0.0
    %3294 = vmatpush2.msra.mxu0 0.0
    %3295 = vmatprep.subr.mxu0 0.0
    %3296 = vmatpush2.msra.mxu0 0.0
    %3297 = vmatprep.subr.mxu0 0.0
    %3298 = vmatpush2.msra.mxu0 0.0
    %3299 = vmatprep.subr.mxu0 0.0
    %3300 = vmatpush2.msra.mxu0 0.0
    %3301 = vmatprep.subr.mxu0 0.0
    %3302 = vmatpush2.msra.mxu0 0.0
    %3303 = vmatprep.subr.mxu0 0.0
    %3304 = vmatpush2.msra.mxu0 0.0
    %3305 = vmatprep.subr.mxu0 0.0
    %3306 = vmatpush2.msra.mxu0 0.0
    %3307 = vmatprep.subr.mxu0 0.0
    %3308 = vmatpush2.msra.mxu0 0.0
    %3309 = vmatprep.subr.mxu0 0.0
    %3310 = vmatpush2.msra.mxu0 0.0
    %3311 = vmatprep.subr.mxu0 0.0
    %3312 = vmatpush2.msra.mxu0 0.0
    %3313 = vmatprep.subr.mxu0 0.0
    %3314 = vmatpush2.msra.mxu0 0.0
    %3315 = vmatprep.subr.mxu0 0.0
    %3316 = vmatpush2.msra.mxu0 0.0
    %3317 = vmatprep.subr.mxu0 0.0
    %3318 = vmatpush2.msra.mxu0 0.0
    %3319 = vmatprep.mubr.f32.mxu0 0.0
    %v3320 = vand.u32 %v926, 4294901760
    %v3321 = vsub.f32 %v926, %v3320
    %3322 = vmatmul.mubr.f32.gmra.mxu0 %v3321
    %v3323 = vpop.f32.mrf.mxu0
    %v3324 = vadd.f32 %v3226, %v3323
    %v3325 = vpop.f32.mrf.mxu0
    %3326 = vmatprep.mubr.f32.mxu0 0.0
    %v3327 = vand.u32 %v929, 4294901760
    %v3328 = vsub.f32 %v929, %v3327
    %3329 = vmatmul.mubr.f32.gmra.mxu0 %v3328
    %v3330 = vpop.f32.mrf.mxu0
    %v3331 = vadd.f32 %v3232, %v3330
    %v3332 = vpop.f32.mrf.mxu0
    %3333 = vmatprep.mubr.f32.mxu0 0.0
    %v3334 = vand.u32 %v932, 4294901760
    %v3335 = vsub.f32 %v932, %v3334
    %3336 = vmatmul.mubr.f32.gmra.mxu0 %v3335
    %v3337 = vpop.f32.mrf.mxu0
    %v3338 = vadd.f32 %v3238, %v3337
    %v3339 = vpop.f32.mrf.mxu0
    %3340 = vmatprep.mubr.f32.mxu0 0.0
    %v3341 = vand.u32 %v935, 4294901760
    %v3342 = vsub.f32 %v935, %v3341
    %3343 = vmatmul.mubr.f32.gmra.mxu0 %v3342
    %v3344 = vpop.f32.mrf.mxu0
    %v3345 = vadd.f32 %v3244, %v3344
    %v3346 = vpop.f32.mrf.mxu0
    %3347 = vdwg.mxu0
    %3348 = vmatprep.subr.mxu0 0.0
    %3349 = vmatpush1.msra.mxu0 0.0
    %3350 = vmatprep.subr.mxu0 0.0
    %3351 = vmatpush1.msra.mxu0 0.0
    %3352 = vmatprep.subr.mxu0 0.0
    %3353 = vmatpush1.msra.mxu0 0.0
    %3354 = vmatprep.subr.mxu0 0.0
    %3355 = vmatpush1.msra.mxu0 0.0
    %3356 = vmatprep.subr.mxu0 0.0
    %3357 = vmatpush1.msra.mxu0 0.0
    %3358 = vmatprep.subr.mxu0 0.0
    %3359 = vmatpush1.msra.mxu0 0.0
    %3360 = vmatprep.subr.mxu0 0.0
    %3361 = vmatpush1.msra.mxu0 0.0
    %3362 = vmatprep.subr.mxu0 0.0
    %3363 = vmatpush1.msra.mxu0 0.0
    %3364 = vmatprep.subr.mxu0 0.0
    %3365 = vmatpush1.msra.mxu0 0.0
    %3366 = vmatprep.subr.mxu0 0.0
    %3367 = vmatpush1.msra.mxu0 0.0
    %3368 = vmatprep.subr.mxu0 0.0
    %3369 = vmatpush1.msra.mxu0 0.0
    %3370 = vmatprep.subr.mxu0 0.0
    %3371 = vmatpush1.msra.mxu0 0.0
    %3372 = vmatprep.subr.mxu0 0.0
    %v3373 = vand.u32 %v2402, 4294901760
    %3374 = vmatpush1.msra.mxu0 %v3373
    %3375 = vmatprep.subr.mxu0 0.0
    %v3376 = vand.u32 %v2401, 4294901760
    %3377 = vmatpush1.msra.mxu0 %v3376
    %3378 = vmatprep.subr.mxu0 0.0
    %v3379 = vand.u32 %v2400, 4294901760
    %3380 = vmatpush1.msra.mxu0 %v3379
    %3381 = vmatprep.subr.mxu0 0.0
    %v3382 = vand.u32 %v2399, 4294901760
    %3383 = vmatpush1.msra.mxu0 %v3382
    %3384 = vmatprep.subr.mxu0 0.0
    %3385 = vmatpush2.msra.mxu0 0.0
    %3386 = vmatprep.subr.mxu0 0.0
    %3387 = vmatpush2.msra.mxu0 0.0
    %3388 = vmatprep.subr.mxu0 0.0
    %3389 = vmatpush2.msra.mxu0 0.0
    %3390 = vmatprep.subr.mxu0 0.0
    %3391 = vmatpush2.msra.mxu0 0.0
    %3392 = vmatprep.subr.mxu0 0.0
    %3393 = vmatpush2.msra.mxu0 0.0
    %3394 = vmatprep.subr.mxu0 0.0
    %3395 = vmatpush2.msra.mxu0 0.0
    %3396 = vmatprep.subr.mxu0 0.0
    %3397 = vmatpush2.msra.mxu0 0.0
    %3398 = vmatprep.subr.mxu0 0.0
    %3399 = vmatpush2.msra.mxu0 0.0
    %3400 = vmatprep.subr.mxu0 0.0
    %3401 = vmatpush2.msra.mxu0 0.0
    %3402 = vmatprep.subr.mxu0 0.0
    %3403 = vmatpush2.msra.mxu0 0.0
    %3404 = vmatprep.subr.mxu0 0.0
    %3405 = vmatpush2.msra.mxu0 0.0
    %3406 = vmatprep.subr.mxu0 0.0
    %3407 = vmatpush2.msra.mxu0 0.0
    %3408 = vmatprep.subr.mxu0 0.0
    %3409 = vmatpush2.msra.mxu0 0.0
    %3410 = vmatprep.subr.mxu0 0.0
    %3411 = vmatpush2.msra.mxu0 0.0
    %3412 = vmatprep.subr.mxu0 0.0
    %3413 = vmatpush2.msra.mxu0 0.0
    %3414 = vmatprep.subr.mxu0 0.0
    %3415 = vmatpush2.msra.mxu0 0.0
    %3416 = vmatprep.mubr.f32.mxu0 0.0
    %v3417 = vand.u32 %v926, 4294901760
    %v3418 = vsub.f32 %v926, %v3417
    %v3419 = vand.u32 %v3418, 4294901760
    %3420 = vmatmul.mubr.f32.gmra.mxu0 %v3419
    %v3421 = vpop.f32.mrf.mxu0
    %v3422 = vadd.f32 %v3324, %v3421
    %v3423 = vpop.f32.mrf.mxu0
    %3424 = vmatprep.mubr.f32.mxu0 0.0
    %v3425 = vand.u32 %v929, 4294901760
    %v3426 = vsub.f32 %v929, %v3425
    %v3427 = vand.u32 %v3426, 4294901760
    %3428 = vmatmul.mubr.f32.gmra.mxu0 %v3427
    %v3429 = vpop.f32.mrf.mxu0
    %v3430 = vadd.f32 %v3331, %v3429
    %v3431 = vpop.f32.mrf.mxu0
    %3432 = vmatprep.mubr.f32.mxu0 0.0
    %v3433 = vand.u32 %v932, 4294901760
    %v3434 = vsub.f32 %v932, %v3433
    %v3435 = vand.u32 %v3434, 4294901760
    %3436 = vmatmul.mubr.f32.gmra.mxu0 %v3435
    %v3437 = vpop.f32.mrf.mxu0
    %v3438 = vadd.f32 %v3338, %v3437
    %v3439 = vpop.f32.mrf.mxu0
    %3440 = vmatprep.mubr.f32.mxu0 0.0
    %v3441 = vand.u32 %v935, 4294901760
    %v3442 = vsub.f32 %v935, %v3441
    %v3443 = vand.u32 %v3442, 4294901760
    %3444 = vmatmul.mubr.f32.gmra.mxu0 %v3443
    %v3445 = vpop.f32.mrf.mxu0
    %v3446 = vadd.f32 %v3345, %v3445
    %v3447 = vpop.f32.mrf.mxu0
    %3448 = vdwg.mxu0
    %3449 = vmatprep.subr.mxu0 0.0
    %3450 = vmatpush1.msra.mxu0 0.0
    %3451 = vmatprep.subr.mxu0 0.0
    %3452 = vmatpush1.msra.mxu0 0.0
    %3453 = vmatprep.subr.mxu0 0.0
    %3454 = vmatpush1.msra.mxu0 0.0
    %3455 = vmatprep.subr.mxu0 0.0
    %3456 = vmatpush1.msra.mxu0 0.0
    %3457 = vmatprep.subr.mxu0 0.0
    %3458 = vmatpush1.msra.mxu0 0.0
    %3459 = vmatprep.subr.mxu0 0.0
    %3460 = vmatpush1.msra.mxu0 0.0
    %3461 = vmatprep.subr.mxu0 0.0
    %3462 = vmatpush1.msra.mxu0 0.0
    %3463 = vmatprep.subr.mxu0 0.0
    %3464 = vmatpush1.msra.mxu0 0.0
    %3465 = vmatprep.subr.mxu0 0.0
    %3466 = vmatpush1.msra.mxu0 0.0
    %3467 = vmatprep.subr.mxu0 0.0
    %3468 = vmatpush1.msra.mxu0 0.0
    %3469 = vmatprep.subr.mxu0 0.0
    %3470 = vmatpush1.msra.mxu0 0.0
    %3471 = vmatprep.subr.mxu0 0.0
    %3472 = vmatpush1.msra.mxu0 0.0
    %3473 = vmatprep.subr.mxu0 0.0
    %v3474 = vand.u32 %v2402, 4294901760
    %v3475 = vsub.f32 %v2402, %v3474
    %v3476 = vand.u32 %v3475, 4294901760
    %3477 = vmatpush1.msra.mxu0 %v3476
    %3478 = vmatprep.subr.mxu0 0.0
    %v3479 = vand.u32 %v2401, 4294901760
    %v3480 = vsub.f32 %v2401, %v3479
    %v3481 = vand.u32 %v3480, 4294901760
    %3482 = vmatpush1.msra.mxu0 %v3481
    %3483 = vmatprep.subr.mxu0 0.0
    %v3484 = vand.u32 %v2400, 4294901760
    %v3485 = vsub.f32 %v2400, %v3484
    %v3486 = vand.u32 %v3485, 4294901760
    %3487 = vmatpush1.msra.mxu0 %v3486
    %3488 = vmatprep.subr.mxu0 0.0
    %v3489 = vand.u32 %v2399, 4294901760
    %v3490 = vsub.f32 %v2399, %v3489
    %v3491 = vand.u32 %v3490, 4294901760
    %3492 = vmatpush1.msra.mxu0 %v3491
    %3493 = vmatprep.subr.mxu0 0.0
    %3494 = vmatpush2.msra.mxu0 0.0
    %3495 = vmatprep.subr.mxu0 0.0
    %3496 = vmatpush2.msra.mxu0 0.0
    %3497 = vmatprep.subr.mxu0 0.0
    %3498 = vmatpush2.msra.mxu0 0.0
    %3499 = vmatprep.subr.mxu0 0.0
    %3500 = vmatpush2.msra.mxu0 0.0
    %3501 = vmatprep.subr.mxu0 0.0
    %3502 = vmatpush2.msra.mxu0 0.0
    %3503 = vmatprep.subr.mxu0 0.0
    %3504 = vmatpush2.msra.mxu0 0.0
    %3505 = vmatprep.subr.mxu0 0.0
    %3506 = vmatpush2.msra.mxu0 0.0
    %3507 = vmatprep.subr.mxu0 0.0
    %3508 = vmatpush2.msra.mxu0 0.0
    %3509 = vmatprep.subr.mxu0 0.0
    %3510 = vmatpush2.msra.mxu0 0.0
    %3511 = vmatprep.subr.mxu0 0.0
    %3512 = vmatpush2.msra.mxu0 0.0
    %3513 = vmatprep.subr.mxu0 0.0
    %3514 = vmatpush2.msra.mxu0 0.0
    %3515 = vmatprep.subr.mxu0 0.0
    %3516 = vmatpush2.msra.mxu0 0.0
    %3517 = vmatprep.subr.mxu0 0.0
    %3518 = vmatpush2.msra.mxu0 0.0
    %3519 = vmatprep.subr.mxu0 0.0
    %3520 = vmatpush2.msra.mxu0 0.0
    %3521 = vmatprep.subr.mxu0 0.0
    %3522 = vmatpush2.msra.mxu0 0.0
    %3523 = vmatprep.subr.mxu0 0.0
    %3524 = vmatpush2.msra.mxu0 0.0
    %3525 = vmatprep.mubr.f32.mxu0 0.0
    %v3526 = vand.u32 %v926, 4294901760
    %3527 = vmatmul.mubr.f32.gmra.mxu0 %v3526
    %v3528 = vpop.f32.mrf.mxu0
    %v3529 = vadd.f32 %v3422, %v3528
    %v3530 = vpop.f32.mrf.mxu0
    %3531 = vmatprep.mubr.f32.mxu0 0.0
    %v3532 = vand.u32 %v929, 4294901760
    %3533 = vmatmul.mubr.f32.gmra.mxu0 %v3532
    %v3534 = vpop.f32.mrf.mxu0
    %v3535 = vadd.f32 %v3430, %v3534
    %v3536 = vpop.f32.mrf.mxu0
    %3537 = vmatprep.mubr.f32.mxu0 0.0
    %v3538 = vand.u32 %v932, 4294901760
    %3539 = vmatmul.mubr.f32.gmra.mxu0 %v3538
    %v3540 = vpop.f32.mrf.mxu0
    %v3541 = vadd.f32 %v3438, %v3540
    %v3542 = vpop.f32.mrf.mxu0
    %3543 = vmatprep.mubr.f32.mxu0 0.0
    %v3544 = vand.u32 %v935, 4294901760
    %3545 = vmatmul.mubr.f32.gmra.mxu0 %v3544
    %v3546 = vpop.f32.mrf.mxu0
    %v3547 = vadd.f32 %v3446, %v3546
    %v3548 = vpop.f32.mrf.mxu0
    %3549 = vdwg.mxu0
    %3550 = vmatprep.subr.mxu0 0.0
    %3551 = vmatpush1.msra.mxu0 0.0
    %3552 = vmatprep.subr.mxu0 0.0
    %3553 = vmatpush1.msra.mxu0 0.0
    %3554 = vmatprep.subr.mxu0 0.0
    %3555 = vmatpush1.msra.mxu0 0.0
    %3556 = vmatprep.subr.mxu0 0.0
    %3557 = vmatpush1.msra.mxu0 0.0
    %3558 = vmatprep.subr.mxu0 0.0
    %3559 = vmatpush1.msra.mxu0 0.0
    %3560 = vmatprep.subr.mxu0 0.0
    %3561 = vmatpush1.msra.mxu0 0.0
    %3562 = vmatprep.subr.mxu0 0.0
    %3563 = vmatpush1.msra.mxu0 0.0
    %3564 = vmatprep.subr.mxu0 0.0
    %3565 = vmatpush1.msra.mxu0 0.0
    %3566 = vmatprep.subr.mxu0 0.0
    %3567 = vmatpush1.msra.mxu0 0.0
    %3568 = vmatprep.subr.mxu0 0.0
    %3569 = vmatpush1.msra.mxu0 0.0
    %3570 = vmatprep.subr.mxu0 0.0
    %3571 = vmatpush1.msra.mxu0 0.0
    %3572 = vmatprep.subr.mxu0 0.0
    %3573 = vmatpush1.msra.mxu0 0.0
    %3574 = vmatprep.subr.mxu0 0.0
    %v3575 = vand.u32 %v2402, 4294901760
    %3576 = vmatpush1.msra.mxu0 %v3575
    %3577 = vmatprep.subr.mxu0 0.0
    %v3578 = vand.u32 %v2401, 4294901760
    %3579 = vmatpush1.msra.mxu0 %v3578
    %3580 = vmatprep.subr.mxu0 0.0
    %v3581 = vand.u32 %v2400, 4294901760
    %3582 = vmatpush1.msra.mxu0 %v3581
    %3583 = vmatprep.subr.mxu0 0.0
    %v3584 = vand.u32 %v2399, 4294901760
    %3585 = vmatpush1.msra.mxu0 %v3584
    %3586 = vmatprep.subr.mxu0 0.0
    %3587 = vmatpush2.msra.mxu0 0.0
    %3588 = vmatprep.subr.mxu0 0.0
    %3589 = vmatpush2.msra.mxu0 0.0
    %3590 = vmatprep.subr.mxu0 0.0
    %3591 = vmatpush2.msra.mxu0 0.0
    %3592 = vmatprep.subr.mxu0 0.0
    %3593 = vmatpush2.msra.mxu0 0.0
    %3594 = vmatprep.subr.mxu0 0.0
    %3595 = vmatpush2.msra.mxu0 0.0
    %3596 = vmatprep.subr.mxu0 0.0
    %3597 = vmatpush2.msra.mxu0 0.0
    %3598 = vmatprep.subr.mxu0 0.0
    %3599 = vmatpush2.msra.mxu0 0.0
    %3600 = vmatprep.subr.mxu0 0.0
    %3601 = vmatpush2.msra.mxu0 0.0
    %3602 = vmatprep.subr.mxu0 0.0
    %3603 = vmatpush2.msra.mxu0 0.0
    %3604 = vmatprep.subr.mxu0 0.0
    %3605 = vmatpush2.msra.mxu0 0.0
    %3606 = vmatprep.subr.mxu0 0.0
    %3607 = vmatpush2.msra.mxu0 0.0
    %3608 = vmatprep.subr.mxu0 0.0
    %3609 = vmatpush2.msra.mxu0 0.0
    %3610 = vmatprep.subr.mxu0 0.0
    %3611 = vmatpush2.msra.mxu0 0.0
    %3612 = vmatprep.subr.mxu0 0.0
    %3613 = vmatpush2.msra.mxu0 0.0
    %3614 = vmatprep.subr.mxu0 0.0
    %3615 = vmatpush2.msra.mxu0 0.0
    %3616 = vmatprep.subr.mxu0 0.0
    %3617 = vmatpush2.msra.mxu0 0.0
    %3618 = vmatprep.mubr.f32.mxu0 0.0
    %v3619 = vand.u32 %v926, 4294901760
    %3620 = vmatmul.mubr.f32.gmra.mxu0 %v3619
    %v3621 = vpop.f32.mrf.mxu0
    %v3622 = vadd.f32 %v3529, %v3621
    %v3623 = vpop.f32.mrf.mxu0
    %3624 = vmatprep.mubr.f32.mxu0 0.0
    %v3625 = vand.u32 %v929, 4294901760
    %3626 = vmatmul.mubr.f32.gmra.mxu0 %v3625
    %v3627 = vpop.f32.mrf.mxu0
    %v3628 = vadd.f32 %v3535, %v3627
    %v3629 = vpop.f32.mrf.mxu0
    %3630 = vmatprep.mubr.f32.mxu0 0.0
    %v3631 = vand.u32 %v932, 4294901760
    %3632 = vmatmul.mubr.f32.gmra.mxu0 %v3631
    %v3633 = vpop.f32.mrf.mxu0
    %v3634 = vadd.f32 %v3541, %v3633
    %v3635 = vpop.f32.mrf.mxu0
    %3636 = vmatprep.mubr.f32.mxu0 0.0
    %v3637 = vand.u32 %v935, 4294901760
    %3638 = vmatmul.mubr.f32.gmra.mxu0 %v3637
    %v3639 = vpop.f32.mrf.mxu0
    %v3640 = vadd.f32 %v3547, %v3639
    %v3641 = vpop.f32.mrf.mxu0
    %3642 = vdwg.mxu0
    %v3643 = vlaneseq
    %v3644 = vshrl.u32 %v3643, 7
    %v3645 = vsub.s32 0, %v3644
    %v3646 = vrot.slane %v39, %v3645
    %v3647 = vadd.f32 %v3646, %v3622
    %v3648 = vadd.f32 %v3646, %v3628
    %v3649 = vadd.f32 %v3646, %v3634
    %v3650 = vadd.f32 %v3646, %v3640
    %s3651 = scalar_lea.vmem [#allocation9], 32
    %3652 = vst [vmem:[%s3651] sm:$0xff] %v3647
    %3653 = vst [vmem:[%s3651 + $0x8] sm:$0xff] %v3648
    %3654 = vst [vmem:[%s3651 + $0x10] sm:$0xff] %v3649
    %3655 = vst [vmem:[%s3651 + $0x18] sm:$0xff] %v3650
    %s3656 = scalar_lea.vmem [#allocation9], 64
    %3657 = vst [vmem:[%s3656] sm:$0xff] %v1555
    %3658 = vst [vmem:[%s3656 + $0x8] sm:$0xff] %v1556
    %3659 = vst [vmem:[%s3656 + $0x10] sm:$0xff] %v1557
    %3660 = vst [vmem:[%s3656 + $0x18] sm:$0xff] %v1558
    %s3661 = scalar_lea.vmem [#allocation9], 96
    %3662 = vst [vmem:[%s3661] sm:$0xff] %v896
    %3663 = vst [vmem:[%s3661 + $0x8] sm:$0xff] %v897
    %3664 = vst [vmem:[%s3661 + $0x10] sm:$0xff] %v898
    %3665 = vst [vmem:[%s3661 + $0x18] sm:$0xff] %v899
    %s3666 = scalar_lea.vmem [#allocation9], 128
    %3667 = vst [vmem:[%s3666] sm:$0xff] %v101
    %3668 = vst [vmem:[%s3666 + $0x8] sm:$0xff] %v102
    %3669 = vst [vmem:[%s3666 + $0x10] sm:$0xff] %v103
    %3670 = vst [vmem:[%s3666 + $0x18] sm:$0xff] %v104
    %s3671 = scalar_lea.vmem [#allocation9], 160
    %3672 = vst [vmem:[%s3671] sm:$0xff] %v125
    %3673 = vst [vmem:[%s3671 + $0x8] sm:$0xff] %v126
    %3674 = vst [vmem:[%s3671 + $0x10] sm:$0xff] %v127
    %3675 = vst [vmem:[%s3671 + $0x18] sm:$0xff] %v128
    // Predicated region
    $region18: #{tpu_custom_call.1} parent=1 // pred_check
      _
    $region19: #{tpu_custom_call.1} parent=1 // pred_check_branch
      %3677 = sbr.rel (0) target = $region21
    $region20: #{tpu_custom_call.1} parent=1 // pred_region
      %s3679 = ssub.s32 3072, 3072
      %3680 = vsyncadd [#allocation6], %s3679
      %s3681 = sshll.u32 [#allocation9], 4
      %s3682 = int_to_ptr.vmem [resolvable:$true] %s3681
      %3687 = dma.vmem_to_hbm [thread:$0]  %s3682, 3072, %s2, [#allocation6], 128, 128, 8
    $region21: #{tpu_custom_call.1} parent=1 // pred_fallthru
      _
    // Predicated region
    $region22: #{tpu_custom_call.1} parent=1 // pred_check
      _
    $region23: #{tpu_custom_call.1} parent=1 // pred_check_branch
      %3689 = sbr.rel (0) target = $region25
    $region24: #{tpu_custom_call.1} parent=1 // pred_region
      %3690 = dma.done [#allocation6], 3072
    $region25: #{tpu_custom_call.1} parent=1 // pred_fallthru
      _
    %3691 = vsyncpa [#allocation5], 1
    %3692 = vsyncpa [#allocation8], 1
    %3693 = vsyncpa [#allocation6], 1

</llo_original>
